<compile_context>
chip_gen: v5e
topology: v5e:2x2
jax: 0.10.0
libtpu: 0.0.40
codegen_flags: <defaults>
</compile_context>

<pallas_src>
import numpy as np
from functools import partial

import jax
import jax.numpy as jnp
from jax.experimental import pallas as pl
from jax.experimental.pallas import tpu as pltpu

_BT = 32  # images per grid step (tunable 32-128; VMEM use stays < a few MiB)


def _round_up(n, m):
    return ((n + m - 1) // m) * m


# ----------------------------------------------------------------------------
# Fused kernel
# ----------------------------------------------------------------------------
def _fused_cnn_kernel(x_ref, w1_ref, b1_ref, w2_ref, b2_ref, wf1_ref, bf1_ref,
                      wf2_ref, bf2_ref, out_ref, s1, s2):
    f32 = jnp.float32
    bf16 = jnp.bfloat16
    bt = out_ref.shape[0]
    r1 = bt * 32          # conv1 row grid: b*32 + y   (y in [0,24) valid)
    r2 = bt * 16          # pool1 row grid: b*16 + yp  (yp in [0,12) valid)
    r3 = bt * 8           # pool2 row grid: b*8  + t   (t in [0,4)  valid)
    m1 = r1 - 8           # conv1 rows actually computed (covers all valid y)
    m2 = r2 - 8           # conv2 rows actually computed (covers all valid y2)

    # ---- conv1 (1->10, k=5): kernel rows ki are realized as offset loads of
    #      the flattened image stack; the 2:1 x-max-pool is folded into the
    #      256-lane weight (even pooled outputs in lanes [0,128), odd in
    #      [128,256)), so there is exactly ONE matmul per ki. ----
    acc1 = jnp.zeros((m1, 256), f32)
    for ki in range(5):
        a = x_ref[pl.ds(ki, m1), :].astype(bf16)
        acc1 = acc1 + jnp.dot(a, w1_ref[ki], preferred_element_type=f32)
    c1 = jnp.maximum(acc1[:, :128], acc1[:, 128:]) + b1_ref[...]
    s1[pl.ds(0, m1), :] = c1
    s1[pl.ds(m1, 8), :] = jnp.zeros((8, 128), f32)  # keep tail rows defined

    # ---- pool1 along y + ReLU: stride-2 sublane decimation (O(BT)). ----
    act1 = jnp.maximum(
        jnp.maximum(s1[pl.ds(0, r2, stride=2), :],
                    s1[pl.ds(1, r2, stride=2), :]), 0.0)
    s2[...] = act1                                 # lanes ci*12 + x (120 valid)

    # ---- conv2 (10->20, k=5), x-pool folded into 256 lanes as above;
    #      kernel-row y-shifts are offset loads from the act1 scratch. ----
    acc2 = jnp.zeros((m2, 256), f32)
    for ki in range(5):
        a = s2[pl.ds(ki, m2), :].astype(bf16)
        acc2 = acc2 + jnp.dot(a, w2_ref[ki], preferred_element_type=f32)
    c2 = jnp.maximum(acc2[:, :128], acc2[:, 128:]) + b2_ref[...]
    s2[pl.ds(0, m2), :] = c2                       # lanes co*4 + x (80 valid)

    # ---- pool2 along y + ReLU (stride-2), then fc1: the (c,y,x)->320 flatten
    #      permutation lives in the pre-permuted wf1[y] blocks and the 4
    #      pooled rows per image are gathered with stride-8 loads. ----
    act2 = jnp.maximum(
        jnp.maximum(s2[pl.ds(0, r3, stride=2), :],
                    s2[pl.ds(1, r3, stride=2), :]), 0.0)
    s2[pl.ds(0, r3), :] = act2

    h1 = jnp.zeros((bt, 64), f32)
    for t in range(4):
        g = s2[pl.ds(t, bt, stride=8), :].astype(bf16)
        h1 = h1 + jnp.dot(g, wf1_ref[t], preferred_element_type=f32)
    h1 = jnp.maximum(h1 + bf1_ref[...], 0.0)

    # ---- fc2 + softmax (padded classes carry a -1e30 bias -> prob 0). ----
    logits = jnp.dot(h1.astype(bf16), wf2_ref[...],
                     preferred_element_type=f32) + bf2_ref[...]
    mx = jnp.max(logits, axis=-1, keepdims=True)
    e = jnp.exp(logits - mx)
    den = jnp.sum(e, axis=-1, keepdims=True)
    out_ref[...] = (e * pl.reciprocal(den, approx=True)).astype(out_ref.dtype)


# ----------------------------------------------------------------------------
# Offline weight preparation (done once, outside the jitted forward)
# ----------------------------------------------------------------------------
def prepare_params(params):
    w1 = np.asarray(params["conv1_w"], np.float32)   # (10, 1, 5, 5)
    b1 = np.asarray(params["conv1_b"], np.float32)   # (10,)
    w2 = np.asarray(params["conv2_w"], np.float32)   # (20, 10, 5, 5)
    b2 = np.asarray(params["conv2_b"], np.float32)   # (20,)
    f1w = np.asarray(params["fc1_w"], np.float32)    # (50, 320)
    f1b = np.asarray(params["fc1_b"], np.float32)    # (50,)
    f2w = np.asarray(params["fc2_w"], np.float32)    # (10, 50)
    f2b = np.asarray(params["fc2_b"], np.float32)    # (10,)

    # conv1 banded matrices, even/odd x-pool fused into one 256-lane weight.
    # input lane = input x; output lane = co*12 + pooled_x (+128 for odd x).
    w1cat = np.zeros((5, 28, 256), np.float32)
    cos1 = np.arange(10) * 12
    for ki in range(5):
        for kj in range(5):
            for xe in range(12):
                w1cat[ki, 2 * xe + kj, cos1 + xe] = w1[:, 0, ki, kj]
                w1cat[ki, 2 * xe + 1 + kj, 128 + cos1 + xe] = w1[:, 0, ki, kj]

    # conv2 banded matrices; input lane = ci*12 + x, output lane = co*4 + xe
    # (even half) / 128 + co*4 + xe (odd half).
    w2cat = np.zeros((5, 128, 256), np.float32)
    ci = np.arange(10) * 12
    co = np.arange(20) * 4
    for ki in range(5):
        for kj in range(5):
            for xe in range(4):
                blk = w2[:, :, ki, kj].T                    # (ci, co)
                w2cat[ki, (ci + 2 * xe + kj)[:, None], (co + xe)[None, :]] = blk
                w2cat[ki, (ci + 2 * xe + 1 + kj)[:, None],
                      (128 + co + xe)[None, :]] = blk

    # fc1 weights permuted so kernel layout (y-block, co*4 + x) matches the
    # torch view(-1, 320) feature order co*16 + y*4 + x.
    wf1 = np.zeros((4, 128, 64), np.float32)
    wf1[:, :80, :50] = (f1w.reshape(50, 20, 4, 4)
                        .transpose(2, 1, 3, 0).reshape(4, 80, 50))

    wf2 = np.zeros((64, 128), np.float32)
    wf2[:50, :10] = f2w.T

    b1p = np.zeros((1, 128), np.float32)
    b1p[0, :120] = np.repeat(b1, 12)
    b2p = np.zeros((1, 128), np.float32)
    b2p[0, :80] = np.repeat(b2, 4)
    bf1 = np.zeros((1, 64), np.float32)
    bf1[0, :50] = f1b
    bf2 = np.full((1, 128), -1e30, np.float32)   # mask padded classes
    bf2[0, :10] = f2b

    bf = jnp.bfloat16
    return {
        "w1": jnp.asarray(w1cat, bf), "b1": jnp.asarray(b1p),
        "w2": jnp.asarray(w2cat, bf), "b2": jnp.asarray(b2p),
        "wf1": jnp.asarray(wf1, bf), "bf1": jnp.asarray(bf1),
        "wf2": jnp.asarray(wf2, bf), "bf2": jnp.asarray(bf2),
    }


# ----------------------------------------------------------------------------
# Forward pass (eval mode, matching the PyTorch module)
# ----------------------------------------------------------------------------
@partial(jax.jit, static_argnames=("bt",))
def _forward_impl(x2d, prep, *, bt):
    n_pad = x2d.shape[0]
    # Pad image height 28 -> 32 so each image is a whole number of sublane
    # tiles; the flatten below is then layout-preserving.
    xp = jnp.pad(x2d, ((0, 0), (0, 4), (0, 0)))
    x_flat = xp.reshape(n_pad * 32, 28)

    out = pl.pallas_call(
        _fused_cnn_kernel,
        out_shape=jax.ShapeDtypeStruct((n_pad, 128), jnp.float32),
        grid_spec=pltpu.PrefetchScalarGridSpec(
            num_scalar_prefetch=0,
            grid=(n_pad // bt,),
            in_specs=[
                pl.BlockSpec((bt * 32, 28), lambda i: (i, 0)),     # images
                pl.BlockSpec((5, 28, 256), lambda i: (0, 0, 0)),   # conv1 w
                pl.BlockSpec((1, 128), lambda i: (0, 0)),          # conv1 b
                pl.BlockSpec((5, 128, 256), lambda i: (0, 0, 0)),  # conv2 w
                pl.BlockSpec((1, 128), lambda i: (0, 0)),          # conv2 b
                pl.BlockSpec((4, 128, 64), lambda i: (0, 0, 0)),   # fc1 w
                pl.BlockSpec((1, 64), lambda i: (0, 0)),           # fc1 b
                pl.BlockSpec((64, 128), lambda i: (0, 0)),         # fc2 w
                pl.BlockSpec((1, 128), lambda i: (0, 0)),          # fc2 b
            ],
            out_specs=pl.BlockSpec((bt, 128), lambda i: (i, 0)),
            scratch_shapes=[
                pltpu.VMEM((bt * 32, 128), jnp.float32),   # conv1 out
                pltpu.VMEM((bt * 16, 128), jnp.float32),   # act1 / conv2 out
            ],
        ),
        compiler_params=pltpu.CompilerParams(
            dimension_semantics=("parallel",),
        ),
    )(x_flat, prep["w1"], prep["b1"], prep["w2"], prep["b2"],
      prep["wf1"], prep["bf1"], prep["wf2"], prep["bf2"])
    return out


def cnn_forward(x, prep):
    n = x.shape[0]
    assert x.shape[1:] == (1, 28, 28)
    bt = min(_BT, _round_up(n, 8))
    n_pad = _round_up(n, bt)
    x2d = x.reshape(n, 28, 28)
    if n_pad != n:
        x2d = jnp.pad(x2d, ((0, n_pad - n), (0, 0), (0, 0)))
    out = _forward_impl(x2d, prep, bt=bt)
    return out[:n, :10]


# ----------------------------------------------------------------------------
# Parameters (deterministic, PyTorch-style fan-in scaling)
# ----------------------------------------------------------------------------
def init_params(key):
    ks = jax.random.split(key, 8)

    def u(k, shape, fan_in):
        bound = 1.0 / jnp.sqrt(fan_in)
        return jax.random.uniform(k, shape, jnp.float32, -bound, bound)

    return {
        "conv1_w": u(ks[0], (10, 1, 5, 5), 1 * 5 * 5),
        "conv1_b": u(ks[1], (10,), 1 * 5 * 5),
        "conv2_w": u(ks[2], (20, 10, 5, 5), 10 * 5 * 5),
        "conv2_b": u(ks[3], (20,), 10 * 5 * 5),
        "fc1_w": u(ks[4], (50, 320), 320),
        "fc1_b": u(ks[5], (50,), 320),
        "fc2_w": u(ks[6], (10, 50), 50),
        "fc2_b": u(ks[7], (10,), 50),
    }


# ----------------------------------------------------------------------------
# Pure-JAX reference of the PyTorch forward (for correctness checking only)
# ----------------------------------------------------------------------------
def _reference_forward(x, params):
    hp = jax.lax.Precision.HIGHEST

    def conv(inp, w, b):
        k = w.shape[-1]
        ho = inp.shape[2] - k + 1
        wo = inp.shape[3] - k + 1
        patches = jnp.stack(
            [inp[:, :, i:i + ho, j:j + wo] for i in range(k) for j in range(k)],
            axis=2)                                          # (N, Cin, k*k, Ho, Wo)
        wmat = w.reshape(w.shape[0], w.shape[1], k * k)
        out = jnp.einsum('ncphw,ocp->nohw', patches, wmat, precision=hp)
        return out + b[None, :, None, None]

    def pool2(a):
        return jnp.maximum(
            jnp.maximum(a[:, :, 0::2, 0::2], a[:, :, 0::2, 1::2]),
            jnp.maximum(a[:, :, 1::2, 0::2], a[:, :, 1::2, 1::2]))

    h = jax.nn.relu(pool2(conv(x, params["conv1_w"], params["conv1_b"])))
    h = jax.nn.relu(pool2(conv(h, params["conv2_w"], params["conv2_b"])))
    h = h.reshape(x.shape[0], 320)
    h = jax.nn.relu(jnp.dot(h, params["fc1_w"].T, precision=hp) + params["fc1_b"])
    h = jnp.dot(h, params["fc2_w"].T, precision=hp) + params["fc2_b"]
    return jax.nn.softmax(h, axis=1)


if __name__ == "__main__":
    key = jax.random.PRNGKey(0)
    k_params, k_x = jax.random.split(key)
    params = init_params(k_params)
    prep = prepare_params(params)

    # Small demo batch (2 MNIST-sized images).
    x = jax.random.normal(k_x, (2, 1, 28, 28), dtype=jnp.float32)
    out = jax.block_until_ready(cnn_forward(x, prep))
    assert out.shape == (2, 10)
    assert bool(jnp.all(jnp.isfinite(out)))
    # softmax rows sum to ~1 (approx reciprocal in the epilogue)
    assert jnp.allclose(jnp.sum(out, axis=1), 1.0, atol=5e-3)
    ref = _reference_forward(x, params)
    assert jnp.allclose(out, ref, atol=1e-2), float(jnp.max(jnp.abs(out - ref)))

    # Larger batch exercising batch padding + multiple grid steps.
    xb = jax.random.normal(jax.random.PRNGKey(1), (80, 1, 28, 28),
                           dtype=jnp.float32)
    outb = jax.block_until_ready(cnn_forward(xb, prep))
    assert outb.shape == (80, 10)
    refb = _reference_forward(xb, params)
    assert jnp.allclose(outb, refb, atol=1e-2), float(jnp.max(jnp.abs(outb - refb)))

    print("KERNEL_OK")
</pallas_src>

<mosaic_0001>
module attributes {stable_mosaic.version = 11 : i64} {
  func.func @_fused_cnn_kernel(%arg0: i32, %arg1: memref<256x28xf32, #tpu.memory_space<vmem>>, %arg2: memref<5x28x256xbf16, #tpu.memory_space<vmem>>, %arg3: memref<1x128xf32, #tpu.memory_space<vmem>>, %arg4: memref<5x128x256xbf16, #tpu.memory_space<vmem>>, %arg5: memref<1x128xf32, #tpu.memory_space<vmem>>, %arg6: memref<4x128x64xbf16, #tpu.memory_space<vmem>>, %arg7: memref<1x64xf32, #tpu.memory_space<vmem>>, %arg8: memref<64x128xbf16, #tpu.memory_space<vmem>>, %arg9: memref<1x128xf32, #tpu.memory_space<vmem>>, %arg10: memref<8x128xf32, #tpu.memory_space<vmem>>, %arg11: memref<256x128xf32, #tpu.memory_space<vmem>>, %arg12: memref<128x128xf32, #tpu.memory_space<vmem>>) attributes {dimension_semantics = [#tpu.dimension_semantics<parallel>], iteration_bounds = array<i64: 1>, scalar_prefetch = 0 : i64, scratch_operands = 2 : i64, tpu.core_type = #tpu.core_type<tc>, window_params = [{transform_indices = @transform_0, window_bounds = array<i64: 256, 28>}, {pipeline_mode = #tpu.pipeline_mode<synchronous>, transform_indices = @transform_1, window_bounds = array<i64: 5, 28, 256>}, {pipeline_mode = #tpu.pipeline_mode<synchronous>, transform_indices = @transform_2, window_bounds = array<i64: 1, 128>}, {pipeline_mode = #tpu.pipeline_mode<synchronous>, transform_indices = @transform_3, window_bounds = array<i64: 5, 128, 256>}, {pipeline_mode = #tpu.pipeline_mode<synchronous>, transform_indices = @transform_4, window_bounds = array<i64: 1, 128>}, {pipeline_mode = #tpu.pipeline_mode<synchronous>, transform_indices = @transform_5, window_bounds = array<i64: 4, 128, 64>}, {pipeline_mode = #tpu.pipeline_mode<synchronous>, transform_indices = @transform_6, window_bounds = array<i64: 1, 64>}, {pipeline_mode = #tpu.pipeline_mode<synchronous>, transform_indices = @transform_7, window_bounds = array<i64: 64, 128>}, {pipeline_mode = #tpu.pipeline_mode<synchronous>, transform_indices = @transform_8, window_bounds = array<i64: 1, 128>}, {transform_indices = @transform_9, window_bounds = array<i64: 8, 128>}]} {
    %cst = arith.constant 0.000000e+00 : f32
    %0 = vector.broadcast %cst : f32 to vector<248x256xf32>
    %c0 = arith.constant 0 : index
    %c0_0 = arith.constant 0 : index
    %1 = vector.load %arg1[%c0, %c0_0] : memref<256x28xf32, #tpu.memory_space<vmem>>, vector<248x28xf32>
    %2 = arith.truncf %1 : vector<248x28xf32> to vector<248x28xbf16>
    %c0_1 = arith.constant 0 : index
    %c0_2 = arith.constant 0 : index
    %c0_3 = arith.constant 0 : index
    %3 = vector.load %arg2[%c0_1, %c0_2, %c0_3] : memref<5x28x256xbf16, #tpu.memory_space<vmem>>, vector<1x28x256xbf16>
    %4 = vector.shape_cast %3 : vector<1x28x256xbf16> to vector<28x256xbf16>
    %cst_4 = arith.constant dense<0.000000e+00> : vector<248x256xf32>
    %5 = tpu.matmul %2, %4, %cst_4 {dimension_numbers = #tpu.dot_dimension_numbers<[1], [0], [0], [1], [0, 0, 1, 1], [], []>} : vector<248x28xbf16>, vector<28x256xbf16>, vector<248x256xf32> -> vector<248x256xf32>
    %6 = arith.addf %0, %5 : vector<248x256xf32>
    %c1 = arith.constant 1 : index
    %c0_5 = arith.constant 0 : index
    %7 = vector.load %arg1[%c1, %c0_5] : memref<256x28xf32, #tpu.memory_space<vmem>>, vector<248x28xf32>
    %8 = arith.truncf %7 : vector<248x28xf32> to vector<248x28xbf16>
    %c1_6 = arith.constant 1 : index
    %c0_7 = arith.constant 0 : index
    %c0_8 = arith.constant 0 : index
    %9 = vector.load %arg2[%c1_6, %c0_7, %c0_8] : memref<5x28x256xbf16, #tpu.memory_space<vmem>>, vector<1x28x256xbf16>
    %10 = vector.shape_cast %9 : vector<1x28x256xbf16> to vector<28x256xbf16>
    %cst_9 = arith.constant dense<0.000000e+00> : vector<248x256xf32>
    %11 = tpu.matmul %8, %10, %cst_9 {dimension_numbers = #tpu.dot_dimension_numbers<[1], [0], [0], [1], [0, 0, 1, 1], [], []>} : vector<248x28xbf16>, vector<28x256xbf16>, vector<248x256xf32> -> vector<248x256xf32>
    %12 = arith.addf %6, %11 : vector<248x256xf32>
    %c2 = arith.constant 2 : index
    %c0_10 = arith.constant 0 : index
    %13 = vector.load %arg1[%c2, %c0_10] : memref<256x28xf32, #tpu.memory_space<vmem>>, vector<248x28xf32>
    %14 = arith.truncf %13 : vector<248x28xf32> to vector<248x28xbf16>
    %c2_11 = arith.constant 2 : index
    %c0_12 = arith.constant 0 : index
    %c0_13 = arith.constant 0 : index
    %15 = vector.load %arg2[%c2_11, %c0_12, %c0_13] : memref<5x28x256xbf16, #tpu.memory_space<vmem>>, vector<1x28x256xbf16>
    %16 = vector.shape_cast %15 : vector<1x28x256xbf16> to vector<28x256xbf16>
    %cst_14 = arith.constant dense<0.000000e+00> : vector<248x256xf32>
    %17 = tpu.matmul %14, %16, %cst_14 {dimension_numbers = #tpu.dot_dimension_numbers<[1], [0], [0], [1], [0, 0, 1, 1], [], []>} : vector<248x28xbf16>, vector<28x256xbf16>, vector<248x256xf32> -> vector<248x256xf32>
    %18 = arith.addf %12, %17 : vector<248x256xf32>
    %c3 = arith.constant 3 : index
    %c0_15 = arith.constant 0 : index
    %19 = vector.load %arg1[%c3, %c0_15] : memref<256x28xf32, #tpu.memory_space<vmem>>, vector<248x28xf32>
    %20 = arith.truncf %19 : vector<248x28xf32> to vector<248x28xbf16>
    %c3_16 = arith.constant 3 : index
    %c0_17 = arith.constant 0 : index
    %c0_18 = arith.constant 0 : index
    %21 = vector.load %arg2[%c3_16, %c0_17, %c0_18] : memref<5x28x256xbf16, #tpu.memory_space<vmem>>, vector<1x28x256xbf16>
    %22 = vector.shape_cast %21 : vector<1x28x256xbf16> to vector<28x256xbf16>
    %cst_19 = arith.constant dense<0.000000e+00> : vector<248x256xf32>
    %23 = tpu.matmul %20, %22, %cst_19 {dimension_numbers = #tpu.dot_dimension_numbers<[1], [0], [0], [1], [0, 0, 1, 1], [], []>} : vector<248x28xbf16>, vector<28x256xbf16>, vector<248x256xf32> -> vector<248x256xf32>
    %24 = arith.addf %18, %23 : vector<248x256xf32>
    %c4 = arith.constant 4 : index
    %c0_20 = arith.constant 0 : index
    %25 = vector.load %arg1[%c4, %c0_20] : memref<256x28xf32, #tpu.memory_space<vmem>>, vector<248x28xf32>
    %26 = arith.truncf %25 : vector<248x28xf32> to vector<248x28xbf16>
    %c4_21 = arith.constant 4 : index
    %c0_22 = arith.constant 0 : index
    %c0_23 = arith.constant 0 : index
    %27 = vector.load %arg2[%c4_21, %c0_22, %c0_23] : memref<5x28x256xbf16, #tpu.memory_space<vmem>>, vector<1x28x256xbf16>
    %28 = vector.shape_cast %27 : vector<1x28x256xbf16> to vector<28x256xbf16>
    %cst_24 = arith.constant dense<0.000000e+00> : vector<248x256xf32>
    %29 = tpu.matmul %26, %28, %cst_24 {dimension_numbers = #tpu.dot_dimension_numbers<[1], [0], [0], [1], [0, 0, 1, 1], [], []>} : vector<248x28xbf16>, vector<28x256xbf16>, vector<248x256xf32> -> vector<248x256xf32>
    %30 = arith.addf %24, %29 : vector<248x256xf32>
    %31 = vector.extract_strided_slice %30 {offsets = [0, 0], sizes = [248, 128], strides = [1, 1]} : vector<248x256xf32> to vector<248x128xf32>
    %32 = vector.extract_strided_slice %30 {offsets = [0, 128], sizes = [248, 128], strides = [1, 1]} : vector<248x256xf32> to vector<248x128xf32>
    %33 = arith.maximumf %31, %32 : vector<248x128xf32>
    %c0_25 = arith.constant 0 : index
    %c0_26 = arith.constant 0 : index
    %34 = vector.load %arg3[%c0_25, %c0_26] : memref<1x128xf32, #tpu.memory_space<vmem>>, vector<1x128xf32>
    %35 = vector.broadcast %34 : vector<1x128xf32> to vector<248x128xf32>
    %36 = arith.addf %33, %35 : vector<248x128xf32>
    %c0_27 = arith.constant 0 : index
    %c0_28 = arith.constant 0 : index
    %37 = vector.load %arg11[%c0_27, %c0_28] : memref<256x128xf32, #tpu.memory_space<vmem>>, vector<248x128xf32>
    tpu.vector_store %arg11[%c0_27, %c0_28], %36 {strides = array<i32>} : memref<256x128xf32, #tpu.memory_space<vmem>>, vector<248x128xf32>,
    %cst_29 = arith.constant 0.000000e+00 : f32
    %38 = vector.broadcast %cst_29 : f32 to vector<8x128xf32>
    %c248 = arith.constant 248 : index
    %c0_30 = arith.constant 0 : index
    %39 = vector.load %arg11[%c248, %c0_30] : memref<256x128xf32, #tpu.memory_space<vmem>>, vector<8x128xf32>
    tpu.vector_store %arg11[%c248, %c0_30], %38 {strides = array<i32>} : memref<256x128xf32, #tpu.memory_space<vmem>>, vector<8x128xf32>,
    %c0_31 = arith.constant 0 : index
    %c0_32 = arith.constant 0 : index
    %40 = tpu.strided_load %arg11[%c0_31, %c0_32] {strides = array<i32: 2, 1>} : memref<256x128xf32, #tpu.memory_space<vmem>>, vector<128x128xf32>
    %c1_33 = arith.constant 1 : index
    %c0_34 = arith.constant 0 : index
    %41 = tpu.strided_load %arg11[%c1_33, %c0_34] {strides = array<i32: 2, 1>} : memref<256x128xf32, #tpu.memory_space<vmem>>, vector<128x128xf32>
    %42 = arith.maximumf %40, %41 : vector<128x128xf32>
    %cst_35 = arith.constant 0.000000e+00 : f32
    %43 = vector.broadcast %cst_35 : f32 to vector<128x128xf32>
    %44 = arith.maximumf %42, %43 : vector<128x128xf32>
    %c0_36 = arith.constant 0 : index
    %c0_37 = arith.constant 0 : index
    %45 = vector.load %arg12[%c0_36, %c0_37] : memref<128x128xf32, #tpu.memory_space<vmem>>, vector<128x128xf32>
    tpu.vector_store %arg12[%c0_36, %c0_37], %44 {strides = array<i32>} : memref<128x128xf32, #tpu.memory_space<vmem>>, vector<128x128xf32>,
    %cst_38 = arith.constant 0.000000e+00 : f32
    %46 = vector.broadcast %cst_38 : f32 to vector<120x256xf32>
    %c0_39 = arith.constant 0 : index
    %c0_40 = arith.constant 0 : index
    %47 = vector.load %arg12[%c0_39, %c0_40] : memref<128x128xf32, #tpu.memory_space<vmem>>, vector<120x128xf32>
    %48 = arith.truncf %47 : vector<120x128xf32> to vector<120x128xbf16>
    %c0_41 = arith.constant 0 : index
    %c0_42 = arith.constant 0 : index
    %c0_43 = arith.constant 0 : index
    %49 = vector.load %arg4[%c0_41, %c0_42, %c0_43] : memref<5x128x256xbf16, #tpu.memory_space<vmem>>, vector<1x128x256xbf16>
    %50 = vector.shape_cast %49 : vector<1x128x256xbf16> to vector<128x256xbf16>
    %cst_44 = arith.constant dense<0.000000e+00> : vector<120x256xf32>
    %51 = tpu.matmul %48, %50, %cst_44 {dimension_numbers = #tpu.dot_dimension_numbers<[1], [0], [0], [1], [0, 0, 1, 1], [], []>} : vector<120x128xbf16>, vector<128x256xbf16>, vector<120x256xf32> -> vector<120x256xf32>
    %52 = arith.addf %46, %51 : vector<120x256xf32>
    %c1_45 = arith.constant 1 : index
    %c0_46 = arith.constant 0 : index
    %53 = vector.load %arg12[%c1_45, %c0_46] : memref<128x128xf32, #tpu.memory_space<vmem>>, vector<120x128xf32>
    %54 = arith.truncf %53 : vector<120x128xf32> to vector<120x128xbf16>
    %c1_47 = arith.constant 1 : index
    %c0_48 = arith.constant 0 : index
    %c0_49 = arith.constant 0 : index
    %55 = vector.load %arg4[%c1_47, %c0_48, %c0_49] : memref<5x128x256xbf16, #tpu.memory_space<vmem>>, vector<1x128x256xbf16>
    %56 = vector.shape_cast %55 : vector<1x128x256xbf16> to vector<128x256xbf16>
    %cst_50 = arith.constant dense<0.000000e+00> : vector<120x256xf32>
    %57 = tpu.matmul %54, %56, %cst_50 {dimension_numbers = #tpu.dot_dimension_numbers<[1], [0], [0], [1], [0, 0, 1, 1], [], []>} : vector<120x128xbf16>, vector<128x256xbf16>, vector<120x256xf32> -> vector<120x256xf32>
    %58 = arith.addf %52, %57 : vector<120x256xf32>
    %c2_51 = arith.constant 2 : index
    %c0_52 = arith.constant 0 : index
    %59 = vector.load %arg12[%c2_51, %c0_52] : memref<128x128xf32, #tpu.memory_space<vmem>>, vector<120x128xf32>
    %60 = arith.truncf %59 : vector<120x128xf32> to vector<120x128xbf16>
    %c2_53 = arith.constant 2 : index
    %c0_54 = arith.constant 0 : index
    %c0_55 = arith.constant 0 : index
    %61 = vector.load %arg4[%c2_53, %c0_54, %c0_55] : memref<5x128x256xbf16, #tpu.memory_space<vmem>>, vector<1x128x256xbf16>
    %62 = vector.shape_cast %61 : vector<1x128x256xbf16> to vector<128x256xbf16>
    %cst_56 = arith.constant dense<0.000000e+00> : vector<120x256xf32>
    %63 = tpu.matmul %60, %62, %cst_56 {dimension_numbers = #tpu.dot_dimension_numbers<[1], [0], [0], [1], [0, 0, 1, 1], [], []>} : vector<120x128xbf16>, vector<128x256xbf16>, vector<120x256xf32> -> vector<120x256xf32>
    %64 = arith.addf %58, %63 : vector<120x256xf32>
    %c3_57 = arith.constant 3 : index
    %c0_58 = arith.constant 0 : index
    %65 = vector.load %arg12[%c3_57, %c0_58] : memref<128x128xf32, #tpu.memory_space<vmem>>, vector<120x128xf32>
    %66 = arith.truncf %65 : vector<120x128xf32> to vector<120x128xbf16>
    %c3_59 = arith.constant 3 : index
    %c0_60 = arith.constant 0 : index
    %c0_61 = arith.constant 0 : index
    %67 = vector.load %arg4[%c3_59, %c0_60, %c0_61] : memref<5x128x256xbf16, #tpu.memory_space<vmem>>, vector<1x128x256xbf16>
    %68 = vector.shape_cast %67 : vector<1x128x256xbf16> to vector<128x256xbf16>
    %cst_62 = arith.constant dense<0.000000e+00> : vector<120x256xf32>
    %69 = tpu.matmul %66, %68, %cst_62 {dimension_numbers = #tpu.dot_dimension_numbers<[1], [0], [0], [1], [0, 0, 1, 1], [], []>} : vector<120x128xbf16>, vector<128x256xbf16>, vector<120x256xf32> -> vector<120x256xf32>
    %70 = arith.addf %64, %69 : vector<120x256xf32>
    %c4_63 = arith.constant 4 : index
    %c0_64 = arith.constant 0 : index
    %71 = vector.load %arg12[%c4_63, %c0_64] : memref<128x128xf32, #tpu.memory_space<vmem>>, vector<120x128xf32>
    %72 = arith.truncf %71 : vector<120x128xf32> to vector<120x128xbf16>
    %c4_65 = arith.constant 4 : index
    %c0_66 = arith.constant 0 : index
    %c0_67 = arith.constant 0 : index
    %73 = vector.load %arg4[%c4_65, %c0_66, %c0_67] : memref<5x128x256xbf16, #tpu.memory_space<vmem>>, vector<1x128x256xbf16>
    %74 = vector.shape_cast %73 : vector<1x128x256xbf16> to vector<128x256xbf16>
    %cst_68 = arith.constant dense<0.000000e+00> : vector<120x256xf32>
    %75 = tpu.matmul %72, %74, %cst_68 {dimension_numbers = #tpu.dot_dimension_numbers<[1], [0], [0], [1], [0, 0, 1, 1], [], []>} : vector<120x128xbf16>, vector<128x256xbf16>, vector<120x256xf32> -> vector<120x256xf32>
    %76 = arith.addf %70, %75 : vector<120x256xf32>
    %77 = vector.extract_strided_slice %76 {offsets = [0, 0], sizes = [120, 128], strides = [1, 1]} : vector<120x256xf32> to vector<120x128xf32>
    %78 = vector.extract_strided_slice %76 {offsets = [0, 128], sizes = [120, 128], strides = [1, 1]} : vector<120x256xf32> to vector<120x128xf32>
    %79 = arith.maximumf %77, %78 : vector<120x128xf32>
    %c0_69 = arith.constant 0 : index
    %c0_70 = arith.constant 0 : index
    %80 = vector.load %arg5[%c0_69, %c0_70] : memref<1x128xf32, #tpu.memory_space<vmem>>, vector<1x128xf32>
    %81 = vector.broadcast %80 : vector<1x128xf32> to vector<120x128xf32>
    %82 = arith.addf %79, %81 : vector<120x128xf32>
    %c0_71 = arith.constant 0 : index
    %c0_72 = arith.constant 0 : index
    %83 = vector.load %arg12[%c0_71, %c0_72] : memref<128x128xf32, #tpu.memory_space<vmem>>, vector<120x128xf32>
    tpu.vector_store %arg12[%c0_71, %c0_72], %82 {strides = array<i32>} : memref<128x128xf32, #tpu.memory_space<vmem>>, vector<120x128xf32>,
    %c0_73 = arith.constant 0 : index
    %c0_74 = arith.constant 0 : index
    %84 = tpu.strided_load %arg12[%c0_73, %c0_74] {strides = array<i32: 2, 1>} : memref<128x128xf32, #tpu.memory_space<vmem>>, vector<64x128xf32>
    %c1_75 = arith.constant 1 : index
    %c0_76 = arith.constant 0 : index
    %85 = tpu.strided_load %arg12[%c1_75, %c0_76] {strides = array<i32: 2, 1>} : memref<128x128xf32, #tpu.memory_space<vmem>>, vector<64x128xf32>
    %86 = arith.maximumf %84, %85 : vector<64x128xf32>
    %cst_77 = arith.constant 0.000000e+00 : f32
    %87 = vector.broadcast %cst_77 : f32 to vector<64x128xf32>
    %88 = arith.maximumf %86, %87 : vector<64x128xf32>
    %c0_78 = arith.constant 0 : index
    %c0_79 = arith.constant 0 : index
    %89 = vector.load %arg12[%c0_78, %c0_79] : memref<128x128xf32, #tpu.memory_space<vmem>>, vector<64x128xf32>
    tpu.vector_store %arg12[%c0_78, %c0_79], %88 {strides = array<i32>} : memref<128x128xf32, #tpu.memory_space<vmem>>, vector<64x128xf32>,
    %cst_80 = arith.constant 0.000000e+00 : f32
    %90 = vector.broadcast %cst_80 : f32 to vector<8x64xf32>
    %c0_81 = arith.constant 0 : index
    %c0_82 = arith.constant 0 : index
    %91 = tpu.strided_load %arg12[%c0_81, %c0_82] {strides = array<i32: 8, 1>} : memref<128x128xf32, #tpu.memory_space<vmem>>, vector<8x128xf32>
    %92 = arith.truncf %91 : vector<8x128xf32> to vector<8x128xbf16>
    %c0_83 = arith.constant 0 : index
    %c0_84 = arith.constant 0 : index
    %c0_85 = arith.constant 0 : index
    %93 = vector.load %arg6[%c0_83, %c0_84, %c0_85] : memref<4x128x64xbf16, #tpu.memory_space<vmem>>, vector<1x128x64xbf16>
    %94 = vector.shape_cast %93 : vector<1x128x64xbf16> to vector<128x64xbf16>
    %cst_86 = arith.constant dense<0.000000e+00> : vector<8x64xf32>
    %95 = tpu.matmul %92, %94, %cst_86 {dimension_numbers = #tpu.dot_dimension_numbers<[1], [0], [0], [1], [0, 0, 1, 1], [], []>} : vector<8x128xbf16>, vector<128x64xbf16>, vector<8x64xf32> -> vector<8x64xf32>
    %96 = arith.addf %90, %95 : vector<8x64xf32>
    %c1_87 = arith.constant 1 : index
    %c0_88 = arith.constant 0 : index
    %97 = tpu.strided_load %arg12[%c1_87, %c0_88] {strides = array<i32: 8, 1>} : memref<128x128xf32, #tpu.memory_space<vmem>>, vector<8x128xf32>
    %98 = arith.truncf %97 : vector<8x128xf32> to vector<8x128xbf16>
    %c1_89 = arith.constant 1 : index
    %c0_90 = arith.constant 0 : index
    %c0_91 = arith.constant 0 : index
    %99 = vector.load %arg6[%c1_89, %c0_90, %c0_91] : memref<4x128x64xbf16, #tpu.memory_space<vmem>>, vector<1x128x64xbf16>
    %100 = vector.shape_cast %99 : vector<1x128x64xbf16> to vector<128x64xbf16>
    %cst_92 = arith.constant dense<0.000000e+00> : vector<8x64xf32>
    %101 = tpu.matmul %98, %100, %cst_92 {dimension_numbers = #tpu.dot_dimension_numbers<[1], [0], [0], [1], [0, 0, 1, 1], [], []>} : vector<8x128xbf16>, vector<128x64xbf16>, vector<8x64xf32> -> vector<8x64xf32>
    %102 = arith.addf %96, %101 : vector<8x64xf32>
    %c2_93 = arith.constant 2 : index
    %c0_94 = arith.constant 0 : index
    %103 = tpu.strided_load %arg12[%c2_93, %c0_94] {strides = array<i32: 8, 1>} : memref<128x128xf32, #tpu.memory_space<vmem>>, vector<8x128xf32>
    %104 = arith.truncf %103 : vector<8x128xf32> to vector<8x128xbf16>
    %c2_95 = arith.constant 2 : index
    %c0_96 = arith.constant 0 : index
    %c0_97 = arith.constant 0 : index
    %105 = vector.load %arg6[%c2_95, %c0_96, %c0_97] : memref<4x128x64xbf16, #tpu.memory_space<vmem>>, vector<1x128x64xbf16>
    %106 = vector.shape_cast %105 : vector<1x128x64xbf16> to vector<128x64xbf16>
    %cst_98 = arith.constant dense<0.000000e+00> : vector<8x64xf32>
    %107 = tpu.matmul %104, %106, %cst_98 {dimension_numbers = #tpu.dot_dimension_numbers<[1], [0], [0], [1], [0, 0, 1, 1], [], []>} : vector<8x128xbf16>, vector<128x64xbf16>, vector<8x64xf32> -> vector<8x64xf32>
    %108 = arith.addf %102, %107 : vector<8x64xf32>
    %c3_99 = arith.constant 3 : index
    %c0_100 = arith.constant 0 : index
    %109 = tpu.strided_load %arg12[%c3_99, %c0_100] {strides = array<i32: 8, 1>} : memref<128x128xf32, #tpu.memory_space<vmem>>, vector<8x128xf32>
    %110 = arith.truncf %109 : vector<8x128xf32> to vector<8x128xbf16>
    %c3_101 = arith.constant 3 : index
    %c0_102 = arith.constant 0 : index
    %c0_103 = arith.constant 0 : index
    %111 = vector.load %arg6[%c3_101, %c0_102, %c0_103] : memref<4x128x64xbf16, #tpu.memory_space<vmem>>, vector<1x128x64xbf16>
    %112 = vector.shape_cast %111 : vector<1x128x64xbf16> to vector<128x64xbf16>
    %cst_104 = arith.constant dense<0.000000e+00> : vector<8x64xf32>
    %113 = tpu.matmul %110, %112, %cst_104 {dimension_numbers = #tpu.dot_dimension_numbers<[1], [0], [0], [1], [0, 0, 1, 1], [], []>} : vector<8x128xbf16>, vector<128x64xbf16>, vector<8x64xf32> -> vector<8x64xf32>
    %114 = arith.addf %108, %113 : vector<8x64xf32>
    %c0_105 = arith.constant 0 : index
    %c0_106 = arith.constant 0 : index
    %115 = vector.load %arg7[%c0_105, %c0_106] : memref<1x64xf32, #tpu.memory_space<vmem>>, vector<1x64xf32>
    %116 = vector.broadcast %115 : vector<1x64xf32> to vector<8x64xf32>
    %117 = arith.addf %114, %116 : vector<8x64xf32>
    %cst_107 = arith.constant 0.000000e+00 : f32
    %118 = vector.broadcast %cst_107 : f32 to vector<8x64xf32>
    %119 = arith.maximumf %117, %118 : vector<8x64xf32>
    %120 = arith.truncf %119 : vector<8x64xf32> to vector<8x64xbf16>
    %c0_108 = arith.constant 0 : index
    %c0_109 = arith.constant 0 : index
    %121 = vector.load %arg8[%c0_108, %c0_109] : memref<64x128xbf16, #tpu.memory_space<vmem>>, vector<64x128xbf16>
    %cst_110 = arith.constant dense<0.000000e+00> : vector<8x128xf32>
    %122 = tpu.matmul %120, %121, %cst_110 {dimension_numbers = #tpu.dot_dimension_numbers<[1], [0], [0], [1], [0, 0, 1, 1], [], []>} : vector<8x64xbf16>, vector<64x128xbf16>, vector<8x128xf32> -> vector<8x128xf32>
    %c0_111 = arith.constant 0 : index
    %c0_112 = arith.constant 0 : index
    %123 = vector.load %arg9[%c0_111, %c0_112] : memref<1x128xf32, #tpu.memory_space<vmem>>, vector<1x128xf32>
    %124 = vector.broadcast %123 : vector<1x128xf32> to vector<8x128xf32>
    %125 = arith.addf %122, %124 : vector<8x128xf32>
    %cst_113 = arith.constant dense<0xFF800000> : vector<8xf32>
    %126 = vector.multi_reduction <maximumf>, %125, %cst_113 [1] : vector<8x128xf32> to vector<8xf32>
    %127 = vector.shape_cast %126 : vector<8xf32> to vector<8x1xf32>
    %128 = vector.broadcast %127 : vector<8x1xf32> to vector<8x128xf32>
    %129 = arith.subf %125, %128 : vector<8x128xf32>
    %130 = math.exp %129 : vector<8x128xf32>
    %cst_114 = arith.constant dense<0.000000e+00> : vector<8xf32>
    %131 = vector.multi_reduction <add>, %130, %cst_114 [1] : vector<8x128xf32> to vector<8xf32>
    %132 = vector.shape_cast %131 : vector<8xf32> to vector<8x1xf32>
    %133 = tpu.reciprocal %132 {approx = true} : vector<8x1xf32> -> vector<8x1xf32>
    %134 = vector.broadcast %133 : vector<8x1xf32> to vector<8x128xf32>
    %135 = arith.mulf %130, %134 : vector<8x128xf32>
    %c0_115 = arith.constant 0 : index
    %c0_116 = arith.constant 0 : index
    %136 = vector.load %arg10[%c0_115, %c0_116] : memref<8x128xf32, #tpu.memory_space<vmem>>, vector<8x128xf32>
    tpu.vector_store %arg10[%c0_115, %c0_116], %135 {strides = array<i32>} : memref<8x128xf32, #tpu.memory_space<vmem>>, vector<8x128xf32>,
    return
  }
  func.func @transform_0(%arg0: i32) -> (i32, i32) {
    %c0_i32 = arith.constant 0 : i32
    %c0_i32_0 = arith.constant 0 : i32
    return %arg0, %c0_i32 : i32, i32
  }
  func.func @transform_1(%arg0: i32) -> (i32, i32, i32) {
    %c0_i32 = arith.constant 0 : i32
    %c0_i32_0 = arith.constant 0 : i32
    %c0_i32_1 = arith.constant 0 : i32
    %c0_i32_2 = arith.constant 0 : i32
    return %c0_i32, %c0_i32_0, %c0_i32_1 : i32, i32, i32
  }
  func.func @transform_2(%arg0: i32) -> (i32, i32) {
    %c0_i32 = arith.constant 0 : i32
    %c0_i32_0 = arith.constant 0 : i32
    %c0_i32_1 = arith.constant 0 : i32
    return %c0_i32, %c0_i32_0 : i32, i32
  }
  func.func @transform_3(%arg0: i32) -> (i32, i32, i32) {
    %c0_i32 = arith.constant 0 : i32
    %c0_i32_0 = arith.constant 0 : i32
    %c0_i32_1 = arith.constant 0 : i32
    %c0_i32_2 = arith.constant 0 : i32
    return %c0_i32, %c0_i32_0, %c0_i32_1 : i32, i32, i32
  }
  func.func @transform_4(%arg0: i32) -> (i32, i32) {
    %c0_i32 = arith.constant 0 : i32
    %c0_i32_0 = arith.constant 0 : i32
    %c0_i32_1 = arith.constant 0 : i32
    return %c0_i32, %c0_i32_0 : i32, i32
  }
  func.func @transform_5(%arg0: i32) -> (i32, i32, i32) {
    %c0_i32 = arith.constant 0 : i32
    %c0_i32_0 = arith.constant 0 : i32
    %c0_i32_1 = arith.constant 0 : i32
    %c0_i32_2 = arith.constant 0 : i32
    return %c0_i32, %c0_i32_0, %c0_i32_1 : i32, i32, i32
  }
  func.func @transform_6(%arg0: i32) -> (i32, i32) {
    %c0_i32 = arith.constant 0 : i32
    %c0_i32_0 = arith.constant 0 : i32
    %c0_i32_1 = arith.constant 0 : i32
    return %c0_i32, %c0_i32_0 : i32, i32
  }
  func.func @transform_7(%arg0: i32) -> (i32, i32) {
    %c0_i32 = arith.constant 0 : i32
    %c0_i32_0 = arith.constant 0 : i32
    %c0_i32_1 = arith.constant 0 : i32
    return %c0_i32, %c0_i32_0 : i32, i32
  }
  func.func @transform_8(%arg0: i32) -> (i32, i32) {
    %c0_i32 = arith.constant 0 : i32
    %c0_i32_0 = arith.constant 0 : i32
    %c0_i32_1 = arith.constant 0 : i32
    return %c0_i32, %c0_i32_0 : i32, i32
  }
  func.func @transform_9(%arg0: i32) -> (i32, i32) {
    %c0_i32 = arith.constant 0 : i32
    %c0_i32_0 = arith.constant 0 : i32
    return %arg0, %c0_i32 : i32, i32
  }
}

</mosaic_0001>

<llo_original>
// kernel: _forward_impl.1
$region0: #{_forward_impl.1}
  #allocation0 [shape = 'u32[]', space=smem, size = 0x4, offset = 0x4, fixed_abs, tag = 'smem constant byte address 0x4 - core index']
  #allocation1 [shape = 'u32[72,128]{1,0:T(1,128)}', space=vmem, size = 0x9000, scoped, tag = 'internal scratch']
  #allocation2 [shape = 'f32[256,128]{1,0:T(8,128)}', space=vmem, size = 0x20000, scoped, tag = 'scratch operand']
  #allocation3 [shape = 'f32[128,128]{1,0:T(8,128)}', space=vmem, size = 0x10000, scoped, tag = 'scratch operand']
  %s0 = inlined_call_operand.vmem [shape: f32[256,28], index: 0, kind: input, shape index: {}]
  %s1 = inlined_call_operand.vmem [shape: bf16[5,28,256], index: 1, kind: input, shape index: {}]
  %s2 = inlined_call_operand.vmem [shape: f32[1,128], index: 2, kind: input, shape index: {}]
  %s3 = inlined_call_operand.vmem [shape: bf16[5,128,256], index: 3, kind: input, shape index: {}]
  %s4 = inlined_call_operand.vmem [shape: f32[1,128], index: 4, kind: input, shape index: {}]
  %s5 = inlined_call_operand.vmem [shape: bf16[4,128,64], index: 5, kind: input, shape index: {}]
  %s6 = inlined_call_operand.vmem [shape: f32[1,64], index: 6, kind: input, shape index: {}]
  %s7 = inlined_call_operand.vmem [shape: bf16[64,128], index: 7, kind: input, shape index: {}]
  %s8 = inlined_call_operand.vmem [shape: f32[1,128], index: 8, kind: input, shape index: {}]
  %s9 = inlined_call_operand.hbm [shape: f32[8,128], index: 9, kind: output, shape index: {}]
  %s10 = sld [smem:[#allocation0]]
  $region46: #{_forward_impl.1} parent=0
    _
  %s12 = ssub.s32 1, %s10
  %s13 = scalar_select 0, %s12, %s10
  $region1: #{_forward_impl.1} parent=0
    #allocation4 [shape = 'u8[4096]{0}', space=vmem, size = 0x1000, scoped, tag = 'output window, operand 0, single buffered']
    #allocation5 [shape = 's32[1]{0}', space=sflag, size = 0x4, scoped, tag = 'scoped memory for _forward_impl.1']
    %14 = vsyncpa [#allocation5], 0
    // Predicated region
    $region2: #{_forward_impl.1} parent=1 // pred_check
      _
    $region3: #{_forward_impl.1} parent=1 // pred_check_branch
      %16 = sbr.rel (0) target = $region5
    $region4: #{_forward_impl.1} parent=1 // pred_region
      _
    $region5: #{_forward_impl.1} parent=1 // pred_fallthru
      _
    // Predicated region
    $region6: #{_forward_impl.1} parent=1 // pred_check
      _
    $region7: #{_forward_impl.1} parent=1 // pred_check_branch
      %18 = sbr.rel (0) target = $region9
    $region8: #{_forward_impl.1} parent=1 // pred_region
      _
    $region9: #{_forward_impl.1} parent=1 // pred_fallthru
      _
    // Predicated region
    $region10: #{_forward_impl.1} parent=1 // pred_check
      _
    $region11: #{_forward_impl.1} parent=1 // pred_check_branch
      %20 = sbr.rel (0) target = $region13
    $region12: #{_forward_impl.1} parent=1 // pred_region
      _
    $region13: #{_forward_impl.1} parent=1 // pred_fallthru
      _
    // Predicated region
    $region14: #{_forward_impl.1} parent=1 // pred_check
      _
    $region15: #{_forward_impl.1} parent=1 // pred_check_branch
      %22 = sbr.rel (0) target = $region17
    $region16: #{_forward_impl.1} parent=1 // pred_region
      _
    $region17: #{_forward_impl.1} parent=1 // pred_fallthru
      _
    // Predicated region
    $region18: #{_forward_impl.1} parent=1 // pred_check
      _
    $region19: #{_forward_impl.1} parent=1 // pred_check_branch
      %24 = sbr.rel (0) target = $region21
    $region20: #{_forward_impl.1} parent=1 // pred_region
      _
    $region21: #{_forward_impl.1} parent=1 // pred_fallthru
      _
    // Predicated region
    $region22: #{_forward_impl.1} parent=1 // pred_check
      _
    $region23: #{_forward_impl.1} parent=1 // pred_check_branch
      %26 = sbr.rel (0) target = $region25
    $region24: #{_forward_impl.1} parent=1 // pred_region
      _
    $region25: #{_forward_impl.1} parent=1 // pred_fallthru
      _
    // Predicated region
    $region26: #{_forward_impl.1} parent=1 // pred_check
      _
    $region27: #{_forward_impl.1} parent=1 // pred_check_branch
      %28 = sbr.rel (0) target = $region29
    $region28: #{_forward_impl.1} parent=1 // pred_region
      _
    $region29: #{_forward_impl.1} parent=1 // pred_fallthru
      _
    // Predicated region
    $region30: #{_forward_impl.1} parent=1 // pred_check
      _
    $region31: #{_forward_impl.1} parent=1 // pred_check_branch
      %30 = sbr.rel (0) target = $region33
    $region32: #{_forward_impl.1} parent=1 // pred_region
      _
    $region33: #{_forward_impl.1} parent=1 // pred_fallthru
      _
    // Predicated region
    $region34: #{_forward_impl.1} parent=1 // pred_check
      _
    $region35: #{_forward_impl.1} parent=1 // pred_check_branch
      %32 = sbr.rel (0) target = $region37
    $region36: #{_forward_impl.1} parent=1 // pred_region
      _
    $region37: #{_forward_impl.1} parent=1 // pred_fallthru
      _
    %v34 = vld [vmem:[%s0] sm:$0xff]
    %v35 = vld [vmem:[%s0 + $0x8] sm:$0xff]
    %v36 = vld [vmem:[%s0 + $0x10] sm:$0xff]
    %v37 = vld [vmem:[%s0 + $0x18] sm:$0xff]
    %v38 = vld [vmem:[%s0 + $0x20] sm:$0xff]
    %v39 = vld [vmem:[%s0 + $0x28] sm:$0xff]
    %v40 = vld [vmem:[%s0 + $0x30] sm:$0xff]
    %v41 = vld [vmem:[%s0 + $0x38] sm:$0xff]
    %v42 = vld [vmem:[%s0 + $0x40] sm:$0xff]
    %v43 = vld [vmem:[%s0 + $0x48] sm:$0xff]
    %v44 = vld [vmem:[%s0 + $0x50] sm:$0xff]
    %v45 = vld [vmem:[%s0 + $0x58] sm:$0xff]
    %v46 = vld [vmem:[%s0 + $0x60] sm:$0xff]
    %v47 = vld [vmem:[%s0 + $0x68] sm:$0xff]
    %v48 = vld [vmem:[%s0 + $0x70] sm:$0xff]
    %v49 = vld [vmem:[%s0 + $0x78] sm:$0xff]
    %v50 = vld [vmem:[%s0 + $0x80] sm:$0xff]
    %v51 = vld [vmem:[%s0 + $0x88] sm:$0xff]
    %v52 = vld [vmem:[%s0 + $0x90] sm:$0xff]
    %v53 = vld [vmem:[%s0 + $0x98] sm:$0xff]
    %v54 = vld [vmem:[%s0 + $0xa0] sm:$0xff]
    %v55 = vld [vmem:[%s0 + $0xa8] sm:$0xff]
    %v56 = vld [vmem:[%s0 + $0xb0] sm:$0xff]
    %v57 = vld [vmem:[%s0 + $0xb8] sm:$0xff]
    %v58 = vld [vmem:[%s0 + $0xc0] sm:$0xff]
    %v59 = vld [vmem:[%s0 + $0xc8] sm:$0xff]
    %v60 = vld [vmem:[%s0 + $0xd0] sm:$0xff]
    %v61 = vld [vmem:[%s0 + $0xd8] sm:$0xff]
    %v62 = vld [vmem:[%s0 + $0xe0] sm:$0xff]
    %v63 = vld [vmem:[%s0 + $0xe8] sm:$0xff]
    %v64 = vld [vmem:[%s0 + $0xf0] sm:$0xff]
    %v65 = vpack.c.bf16 %v35, %v34
    %v66 = vpack.c.bf16 %v37, %v36
    %v67 = vpack.c.bf16 %v39, %v38
    %v68 = vpack.c.bf16 %v41, %v40
    %v69 = vpack.c.bf16 %v43, %v42
    %v70 = vpack.c.bf16 %v45, %v44
    %v71 = vpack.c.bf16 %v47, %v46
    %v72 = vpack.c.bf16 %v49, %v48
    %v73 = vpack.c.bf16 %v51, %v50
    %v74 = vpack.c.bf16 %v53, %v52
    %v75 = vpack.c.bf16 %v55, %v54
    %v76 = vpack.c.bf16 %v57, %v56
    %v77 = vpack.c.bf16 %v59, %v58
    %v78 = vpack.c.bf16 %v61, %v60
    %v79 = vpack.c.bf16 %v63, %v62
    %v80 = vpack.c.bf16 %v64, %v64
    %v81 = vld [vmem:[%s1] sm:$0xff]
    %v82 = vld [vmem:[%s1 + $0x8] sm:$0xff]
    %v83 = vld [vmem:[%s1 + $0x10] sm:$0xff]
    %v84 = vld [vmem:[%s1 + $0x18] sm:$0x33]
    %v85 = vld [vmem:[%s0 + $0x1] sm:$0xff]
    %v86 = vld [vmem:[%s0 + $0x9] sm:$0xff]
    %v87 = vld [vmem:[%s0 + $0x11] sm:$0xff]
    %v88 = vld [vmem:[%s0 + $0x19] sm:$0xff]
    %v89 = vld [vmem:[%s0 + $0x21] sm:$0xff]
    %v90 = vld [vmem:[%s0 + $0x29] sm:$0xff]
    %v91 = vld [vmem:[%s0 + $0x31] sm:$0xff]
    %v92 = vld [vmem:[%s0 + $0x39] sm:$0xff]
    %v93 = vld [vmem:[%s0 + $0x41] sm:$0xff]
    %v94 = vld [vmem:[%s0 + $0x49] sm:$0xff]
    %v95 = vld [vmem:[%s0 + $0x51] sm:$0xff]
    %v96 = vld [vmem:[%s0 + $0x59] sm:$0xff]
    %v97 = vld [vmem:[%s0 + $0x61] sm:$0xff]
    %v98 = vld [vmem:[%s0 + $0x69] sm:$0xff]
    %v99 = vld [vmem:[%s0 + $0x71] sm:$0xff]
    %v100 = vld [vmem:[%s0 + $0x79] sm:$0xff]
    %v101 = vld [vmem:[%s0 + $0x81] sm:$0xff]
    %v102 = vld [vmem:[%s0 + $0x89] sm:$0xff]
    %v103 = vld [vmem:[%s0 + $0x91] sm:$0xff]
    %v104 = vld [vmem:[%s0 + $0x99] sm:$0xff]
    %v105 = vld [vmem:[%s0 + $0xa1] sm:$0xff]
    %v106 = vld [vmem:[%s0 + $0xa9] sm:$0xff]
    %v107 = vld [vmem:[%s0 + $0xb1] sm:$0xff]
    %v108 = vld [vmem:[%s0 + $0xb9] sm:$0xff]
    %v109 = vld [vmem:[%s0 + $0xc1] sm:$0xff]
    %v110 = vld [vmem:[%s0 + $0xc9] sm:$0xff]
    %v111 = vld [vmem:[%s0 + $0xd1] sm:$0xff]
    %v112 = vld [vmem:[%s0 + $0xd9] sm:$0xff]
    %v113 = vld [vmem:[%s0 + $0xe1] sm:$0xff]
    %v114 = vld [vmem:[%s0 + $0xe9] sm:$0xff]
    %v115 = vld [vmem:[%s0 + $0xf1] sm:$0xff]
    %v116 = vpack.c.bf16 %v86, %v85
    %v117 = vpack.c.bf16 %v88, %v87
    %v118 = vpack.c.bf16 %v90, %v89
    %v119 = vpack.c.bf16 %v92, %v91
    %v120 = vpack.c.bf16 %v94, %v93
    %v121 = vpack.c.bf16 %v96, %v95
    %v122 = vpack.c.bf16 %v98, %v97
    %v123 = vpack.c.bf16 %v100, %v99
    %v124 = vpack.c.bf16 %v102, %v101
    %v125 = vpack.c.bf16 %v104, %v103
    %v126 = vpack.c.bf16 %v106, %v105
    %v127 = vpack.c.bf16 %v108, %v107
    %v128 = vpack.c.bf16 %v110, %v109
    %v129 = vpack.c.bf16 %v112, %v111
    %v130 = vpack.c.bf16 %v114, %v113
    %v131 = vpack.c.bf16 %v115, %v115
    %s132 = scalar_lea.vmem %s1, 32
    %v133 = vld [vmem:[%s132] sm:$0xff]
    %v134 = vld [vmem:[%s132 + $0x8] sm:$0xff]
    %v135 = vld [vmem:[%s132 + $0x10] sm:$0xff]
    %v136 = vld [vmem:[%s132 + $0x18] sm:$0x33]
    %v141 = vunpack.c.l.b16 %v133
    %v142 = vunpack.c.h.b16 %v133
    %v143 = vunpack.c.l.b16 %v134
    %v144 = vunpack.c.h.b16 %v134
    %v145 = vunpack.c.l.b16 %v135
    %v146 = vunpack.c.h.b16 %v135
    %v147 = vunpack.c.l.b16 %v136
    %v148 = vunpack.c.h.b16 %v136
    %v149 = vpack.c.b16 %v143, %v141
    %v150 = vpack.c.b16 %v144, %v142
    %v151 = vpack.c.b16 %v147, %v145
    %v152 = vpack.c.b16 %v148, %v146
    %vm155 = vcmask 228352
    %v157 = vsel %vm155, %v116, 0
    %v160 = vsel %vm155, %v117, 0
    %v163 = vsel %vm155, %v118, 0
    %v166 = vsel %vm155, %v119, 0
    %v169 = vsel %vm155, %v120, 0
    %v172 = vsel %vm155, %v121, 0
    %v175 = vsel %vm155, %v122, 0
    %v178 = vsel %vm155, %v123, 0
    %v181 = vsel %vm155, %v124, 0
    %v184 = vsel %vm155, %v125, 0
    %v187 = vsel %vm155, %v126, 0
    %v190 = vsel %vm155, %v127, 0
    %v193 = vsel %vm155, %v128, 0
    %v196 = vsel %vm155, %v129, 0
    %v199 = vsel %vm155, %v130, 0
    %v202 = vsel %vm155, %v131, 0
    %vm204 = vcmask 1045504
    %v206 = vsel %vm204, %v151, 0
    %v209 = vsel %vm204, %v152, 0
    %211 = vmatpush.bf16.msra.mxu0 0
    %212 = vmatpush.bf16.msra.mxu0 0
    %213 = vmatpush.bf16.msra.mxu0 0
    %214 = vmatpush.bf16.msra.mxu0 0
    %215 = vmatpush.bf16.msra.mxu0 0
    %216 = vmatpush.bf16.msra.mxu0 0
    %217 = vmatpush.bf16.msra.mxu0 %v206
    %218 = vmatpush.bf16.msra.mxu0 %v149
    %219 = vmatmul.bf16.gmra.mxu0 %v157
    %v220 = vpop.f32.mrf.mxu0
    %v221 = vadd.f32 0.0, %v220
    %v222 = vpop.f32.mrf.mxu0
    %v223 = vadd.f32 0.0, %v222
    %224 = vmatmul.bf16.gmra.mxu0 %v160
    %v225 = vpop.f32.mrf.mxu0
    %v226 = vadd.f32 0.0, %v225
    %v227 = vpop.f32.mrf.mxu0
    %v228 = vadd.f32 0.0, %v227
    %229 = vmatmul.bf16.gmra.mxu0 %v163
    %v230 = vpop.f32.mrf.mxu0
    %v231 = vadd.f32 0.0, %v230
    %v232 = vpop.f32.mrf.mxu0
    %v233 = vadd.f32 0.0, %v232
    %234 = vmatmul.bf16.gmra.mxu0 %v166
    %v235 = vpop.f32.mrf.mxu0
    %v236 = vadd.f32 0.0, %v235
    %v237 = vpop.f32.mrf.mxu0
    %v238 = vadd.f32 0.0, %v237
    %239 = vmatmul.bf16.gmra.mxu0 %v169
    %v240 = vpop.f32.mrf.mxu0
    %v241 = vadd.f32 0.0, %v240
    %v242 = vpop.f32.mrf.mxu0
    %v243 = vadd.f32 0.0, %v242
    %244 = vmatmul.bf16.gmra.mxu0 %v172
    %v245 = vpop.f32.mrf.mxu0
    %v246 = vadd.f32 0.0, %v245
    %v247 = vpop.f32.mrf.mxu0
    %v248 = vadd.f32 0.0, %v247
    %249 = vmatmul.bf16.gmra.mxu0 %v175
    %v250 = vpop.f32.mrf.mxu0
    %v251 = vadd.f32 0.0, %v250
    %v252 = vpop.f32.mrf.mxu0
    %v253 = vadd.f32 0.0, %v252
    %254 = vmatmul.bf16.gmra.mxu0 %v178
    %v255 = vpop.f32.mrf.mxu0
    %v256 = vadd.f32 0.0, %v255
    %v257 = vpop.f32.mrf.mxu0
    %v258 = vadd.f32 0.0, %v257
    %259 = vmatmul.bf16.gmra.mxu0 %v181
    %v260 = vpop.f32.mrf.mxu0
    %v261 = vadd.f32 0.0, %v260
    %v262 = vpop.f32.mrf.mxu0
    %v263 = vadd.f32 0.0, %v262
    %264 = vmatmul.bf16.gmra.mxu0 %v184
    %v265 = vpop.f32.mrf.mxu0
    %v266 = vadd.f32 0.0, %v265
    %v267 = vpop.f32.mrf.mxu0
    %v268 = vadd.f32 0.0, %v267
    %269 = vmatmul.bf16.gmra.mxu0 %v187
    %v270 = vpop.f32.mrf.mxu0
    %v271 = vadd.f32 0.0, %v270
    %v272 = vpop.f32.mrf.mxu0
    %v273 = vadd.f32 0.0, %v272
    %274 = vmatmul.bf16.gmra.mxu0 %v190
    %v275 = vpop.f32.mrf.mxu0
    %v276 = vadd.f32 0.0, %v275
    %v277 = vpop.f32.mrf.mxu0
    %v278 = vadd.f32 0.0, %v277
    %279 = vmatmul.bf16.gmra.mxu0 %v193
    %v280 = vpop.f32.mrf.mxu0
    %v281 = vadd.f32 0.0, %v280
    %v282 = vpop.f32.mrf.mxu0
    %v283 = vadd.f32 0.0, %v282
    %284 = vmatmul.bf16.gmra.mxu0 %v196
    %v285 = vpop.f32.mrf.mxu0
    %v286 = vadd.f32 0.0, %v285
    %v287 = vpop.f32.mrf.mxu0
    %v288 = vadd.f32 0.0, %v287
    %289 = vmatmul.bf16.gmra.mxu0 %v199
    %v290 = vpop.f32.mrf.mxu0
    %v291 = vadd.f32 0.0, %v290
    %v292 = vpop.f32.mrf.mxu0
    %v293 = vadd.f32 0.0, %v292
    %294 = vmatmul.bf16.gmra.mxu0 %v202
    %v295 = vpop.f32.mrf.mxu0
    %v296 = vadd.f32 0.0, %v295
    %v297 = vpop.f32.mrf.mxu0
    %298 = vdwg.mxu0
    %299 = vmatpush.bf16.msra.mxu0 0
    %300 = vmatpush.bf16.msra.mxu0 0
    %301 = vmatpush.bf16.msra.mxu0 0
    %302 = vmatpush.bf16.msra.mxu0 0
    %303 = vmatpush.bf16.msra.mxu0 0
    %304 = vmatpush.bf16.msra.mxu0 0
    %305 = vmatpush.bf16.msra.mxu0 %v209
    %306 = vmatpush.bf16.msra.mxu0 %v150
    %307 = vmatmul.bf16.gmra.mxu0 %v157
    %v308 = vpop.f32.mrf.mxu0
    %v309 = vadd.f32 0.0, %v308
    %v310 = vpop.f32.mrf.mxu0
    %v311 = vadd.f32 0.0, %v310
    %312 = vmatmul.bf16.gmra.mxu0 %v160
    %v313 = vpop.f32.mrf.mxu0
    %v314 = vadd.f32 0.0, %v313
    %v315 = vpop.f32.mrf.mxu0
    %v316 = vadd.f32 0.0, %v315
    %317 = vmatmul.bf16.gmra.mxu0 %v163
    %v318 = vpop.f32.mrf.mxu0
    %v319 = vadd.f32 0.0, %v318
    %v320 = vpop.f32.mrf.mxu0
    %v321 = vadd.f32 0.0, %v320
    %322 = vmatmul.bf16.gmra.mxu0 %v166
    %v323 = vpop.f32.mrf.mxu0
    %v324 = vadd.f32 0.0, %v323
    %v325 = vpop.f32.mrf.mxu0
    %v326 = vadd.f32 0.0, %v325
    %327 = vmatmul.bf16.gmra.mxu0 %v169
    %v328 = vpop.f32.mrf.mxu0
    %v329 = vadd.f32 0.0, %v328
    %v330 = vpop.f32.mrf.mxu0
    %v331 = vadd.f32 0.0, %v330
    %332 = vmatmul.bf16.gmra.mxu0 %v172
    %v333 = vpop.f32.mrf.mxu0
    %v334 = vadd.f32 0.0, %v333
    %v335 = vpop.f32.mrf.mxu0
    %v336 = vadd.f32 0.0, %v335
    %337 = vmatmul.bf16.gmra.mxu0 %v175
    %v338 = vpop.f32.mrf.mxu0
    %v339 = vadd.f32 0.0, %v338
    %v340 = vpop.f32.mrf.mxu0
    %v341 = vadd.f32 0.0, %v340
    %342 = vmatmul.bf16.gmra.mxu0 %v178
    %v343 = vpop.f32.mrf.mxu0
    %v344 = vadd.f32 0.0, %v343
    %v345 = vpop.f32.mrf.mxu0
    %v346 = vadd.f32 0.0, %v345
    %347 = vmatmul.bf16.gmra.mxu0 %v181
    %v348 = vpop.f32.mrf.mxu0
    %v349 = vadd.f32 0.0, %v348
    %v350 = vpop.f32.mrf.mxu0
    %v351 = vadd.f32 0.0, %v350
    %352 = vmatmul.bf16.gmra.mxu0 %v184
    %v353 = vpop.f32.mrf.mxu0
    %v354 = vadd.f32 0.0, %v353
    %v355 = vpop.f32.mrf.mxu0
    %v356 = vadd.f32 0.0, %v355
    %357 = vmatmul.bf16.gmra.mxu0 %v187
    %v358 = vpop.f32.mrf.mxu0
    %v359 = vadd.f32 0.0, %v358
    %v360 = vpop.f32.mrf.mxu0
    %v361 = vadd.f32 0.0, %v360
    %362 = vmatmul.bf16.gmra.mxu0 %v190
    %v363 = vpop.f32.mrf.mxu0
    %v364 = vadd.f32 0.0, %v363
    %v365 = vpop.f32.mrf.mxu0
    %v366 = vadd.f32 0.0, %v365
    %367 = vmatmul.bf16.gmra.mxu0 %v193
    %v368 = vpop.f32.mrf.mxu0
    %v369 = vadd.f32 0.0, %v368
    %v370 = vpop.f32.mrf.mxu0
    %v371 = vadd.f32 0.0, %v370
    %372 = vmatmul.bf16.gmra.mxu0 %v196
    %v373 = vpop.f32.mrf.mxu0
    %v374 = vadd.f32 0.0, %v373
    %v375 = vpop.f32.mrf.mxu0
    %v376 = vadd.f32 0.0, %v375
    %377 = vmatmul.bf16.gmra.mxu0 %v199
    %v378 = vpop.f32.mrf.mxu0
    %v379 = vadd.f32 0.0, %v378
    %v380 = vpop.f32.mrf.mxu0
    %v381 = vadd.f32 0.0, %v380
    %382 = vmatmul.bf16.gmra.mxu0 %v202
    %v383 = vpop.f32.mrf.mxu0
    %v384 = vadd.f32 0.0, %v383
    %v385 = vpop.f32.mrf.mxu0
    %386 = vdwg.mxu0
    %v391 = vunpack.c.l.b16 %v81
    %v392 = vunpack.c.h.b16 %v81
    %v393 = vunpack.c.l.b16 %v82
    %v394 = vunpack.c.h.b16 %v82
    %v395 = vunpack.c.l.b16 %v83
    %v396 = vunpack.c.h.b16 %v83
    %v397 = vunpack.c.l.b16 %v84
    %v398 = vunpack.c.h.b16 %v84
    %v399 = vpack.c.b16 %v393, %v391
    %v400 = vpack.c.b16 %v394, %v392
    %v401 = vpack.c.b16 %v397, %v395
    %v402 = vpack.c.b16 %v398, %v396
    %v406 = vsel %vm155, %v65, 0
    %v409 = vsel %vm155, %v66, 0
    %v412 = vsel %vm155, %v67, 0
    %v415 = vsel %vm155, %v68, 0
    %v418 = vsel %vm155, %v69, 0
    %v421 = vsel %vm155, %v70, 0
    %v424 = vsel %vm155, %v71, 0
    %v427 = vsel %vm155, %v72, 0
    %v430 = vsel %vm155, %v73, 0
    %v433 = vsel %vm155, %v74, 0
    %v436 = vsel %vm155, %v75, 0
    %v439 = vsel %vm155, %v76, 0
    %v442 = vsel %vm155, %v77, 0
    %v445 = vsel %vm155, %v78, 0
    %v448 = vsel %vm155, %v79, 0
    %v451 = vsel %vm155, %v80, 0
    %v454 = vsel %vm204, %v401, 0
    %v457 = vsel %vm204, %v402, 0
    %459 = vmatpush.bf16.msra.mxu0 0
    %460 = vmatpush.bf16.msra.mxu0 0
    %461 = vmatpush.bf16.msra.mxu0 0
    %462 = vmatpush.bf16.msra.mxu0 0
    %463 = vmatpush.bf16.msra.mxu0 0
    %464 = vmatpush.bf16.msra.mxu0 0
    %465 = vmatpush.bf16.msra.mxu0 %v454
    %466 = vmatpush.bf16.msra.mxu0 %v399
    %467 = vmatmul.bf16.gmra.mxu0 %v406
    %v468 = vpop.f32.mrf.mxu0
    %v469 = vadd.f32 %v221, %v468
    %v470 = vpop.f32.mrf.mxu0
    %v471 = vadd.f32 %v223, %v470
    %472 = vmatmul.bf16.gmra.mxu0 %v409
    %v473 = vpop.f32.mrf.mxu0
    %v474 = vadd.f32 %v226, %v473
    %v475 = vpop.f32.mrf.mxu0
    %v476 = vadd.f32 %v228, %v475
    %477 = vmatmul.bf16.gmra.mxu0 %v412
    %v478 = vpop.f32.mrf.mxu0
    %v479 = vadd.f32 %v231, %v478
    %v480 = vpop.f32.mrf.mxu0
    %v481 = vadd.f32 %v233, %v480
    %482 = vmatmul.bf16.gmra.mxu0 %v415
    %v483 = vpop.f32.mrf.mxu0
    %v484 = vadd.f32 %v236, %v483
    %v485 = vpop.f32.mrf.mxu0
    %v486 = vadd.f32 %v238, %v485
    %487 = vmatmul.bf16.gmra.mxu0 %v418
    %v488 = vpop.f32.mrf.mxu0
    %v489 = vadd.f32 %v241, %v488
    %v490 = vpop.f32.mrf.mxu0
    %v491 = vadd.f32 %v243, %v490
    %492 = vmatmul.bf16.gmra.mxu0 %v421
    %v493 = vpop.f32.mrf.mxu0
    %v494 = vadd.f32 %v246, %v493
    %v495 = vpop.f32.mrf.mxu0
    %v496 = vadd.f32 %v248, %v495
    %497 = vmatmul.bf16.gmra.mxu0 %v424
    %v498 = vpop.f32.mrf.mxu0
    %v499 = vadd.f32 %v251, %v498
    %v500 = vpop.f32.mrf.mxu0
    %v501 = vadd.f32 %v253, %v500
    %502 = vmatmul.bf16.gmra.mxu0 %v427
    %v503 = vpop.f32.mrf.mxu0
    %v504 = vadd.f32 %v256, %v503
    %v505 = vpop.f32.mrf.mxu0
    %v506 = vadd.f32 %v258, %v505
    %507 = vmatmul.bf16.gmra.mxu0 %v430
    %v508 = vpop.f32.mrf.mxu0
    %v509 = vadd.f32 %v261, %v508
    %v510 = vpop.f32.mrf.mxu0
    %v511 = vadd.f32 %v263, %v510
    %512 = vmatmul.bf16.gmra.mxu0 %v433
    %v513 = vpop.f32.mrf.mxu0
    %v514 = vadd.f32 %v266, %v513
    %v515 = vpop.f32.mrf.mxu0
    %v516 = vadd.f32 %v268, %v515
    %517 = vmatmul.bf16.gmra.mxu0 %v436
    %v518 = vpop.f32.mrf.mxu0
    %v519 = vadd.f32 %v271, %v518
    %v520 = vpop.f32.mrf.mxu0
    %v521 = vadd.f32 %v273, %v520
    %522 = vmatmul.bf16.gmra.mxu0 %v439
    %v523 = vpop.f32.mrf.mxu0
    %v524 = vadd.f32 %v276, %v523
    %v525 = vpop.f32.mrf.mxu0
    %v526 = vadd.f32 %v278, %v525
    %527 = vmatmul.bf16.gmra.mxu0 %v442
    %v528 = vpop.f32.mrf.mxu0
    %v529 = vadd.f32 %v281, %v528
    %v530 = vpop.f32.mrf.mxu0
    %v531 = vadd.f32 %v283, %v530
    %532 = vmatmul.bf16.gmra.mxu0 %v445
    %v533 = vpop.f32.mrf.mxu0
    %v534 = vadd.f32 %v286, %v533
    %v535 = vpop.f32.mrf.mxu0
    %v536 = vadd.f32 %v288, %v535
    %537 = vmatmul.bf16.gmra.mxu0 %v448
    %v538 = vpop.f32.mrf.mxu0
    %v539 = vadd.f32 %v291, %v538
    %v540 = vpop.f32.mrf.mxu0
    %v541 = vadd.f32 %v293, %v540
    %542 = vmatmul.bf16.gmra.mxu0 %v451
    %v543 = vpop.f32.mrf.mxu0
    %v544 = vadd.f32 %v296, %v543
    %v545 = vpop.f32.mrf.mxu0
    %546 = vdwg.mxu0
    %547 = vmatpush.bf16.msra.mxu0 0
    %548 = vmatpush.bf16.msra.mxu0 0
    %549 = vmatpush.bf16.msra.mxu0 0
    %550 = vmatpush.bf16.msra.mxu0 0
    %551 = vmatpush.bf16.msra.mxu0 0
    %552 = vmatpush.bf16.msra.mxu0 0
    %553 = vmatpush.bf16.msra.mxu0 %v457
    %554 = vmatpush.bf16.msra.mxu0 %v400
    %555 = vmatmul.bf16.gmra.mxu0 %v406
    %v556 = vpop.f32.mrf.mxu0
    %v557 = vadd.f32 %v309, %v556
    %v558 = vpop.f32.mrf.mxu0
    %v559 = vadd.f32 %v311, %v558
    %560 = vmatmul.bf16.gmra.mxu0 %v409
    %v561 = vpop.f32.mrf.mxu0
    %v562 = vadd.f32 %v314, %v561
    %v563 = vpop.f32.mrf.mxu0
    %v564 = vadd.f32 %v316, %v563
    %565 = vmatmul.bf16.gmra.mxu0 %v412
    %v566 = vpop.f32.mrf.mxu0
    %v567 = vadd.f32 %v319, %v566
    %v568 = vpop.f32.mrf.mxu0
    %v569 = vadd.f32 %v321, %v568
    %570 = vmatmul.bf16.gmra.mxu0 %v415
    %v571 = vpop.f32.mrf.mxu0
    %v572 = vadd.f32 %v324, %v571
    %v573 = vpop.f32.mrf.mxu0
    %v574 = vadd.f32 %v326, %v573
    %575 = vmatmul.bf16.gmra.mxu0 %v418
    %v576 = vpop.f32.mrf.mxu0
    %v577 = vadd.f32 %v329, %v576
    %v578 = vpop.f32.mrf.mxu0
    %v579 = vadd.f32 %v331, %v578
    %580 = vmatmul.bf16.gmra.mxu0 %v421
    %v581 = vpop.f32.mrf.mxu0
    %v582 = vadd.f32 %v334, %v581
    %v583 = vpop.f32.mrf.mxu0
    %v584 = vadd.f32 %v336, %v583
    %585 = vmatmul.bf16.gmra.mxu0 %v424
    %v586 = vpop.f32.mrf.mxu0
    %v587 = vadd.f32 %v339, %v586
    %v588 = vpop.f32.mrf.mxu0
    %v589 = vadd.f32 %v341, %v588
    %590 = vmatmul.bf16.gmra.mxu0 %v427
    %v591 = vpop.f32.mrf.mxu0
    %v592 = vadd.f32 %v344, %v591
    %v593 = vpop.f32.mrf.mxu0
    %v594 = vadd.f32 %v346, %v593
    %595 = vmatmul.bf16.gmra.mxu0 %v430
    %v596 = vpop.f32.mrf.mxu0
    %v597 = vadd.f32 %v349, %v596
    %v598 = vpop.f32.mrf.mxu0
    %v599 = vadd.f32 %v351, %v598
    %600 = vmatmul.bf16.gmra.mxu0 %v433
    %v601 = vpop.f32.mrf.mxu0
    %v602 = vadd.f32 %v354, %v601
    %v603 = vpop.f32.mrf.mxu0
    %v604 = vadd.f32 %v356, %v603
    %605 = vmatmul.bf16.gmra.mxu0 %v436
    %v606 = vpop.f32.mrf.mxu0
    %v607 = vadd.f32 %v359, %v606
    %v608 = vpop.f32.mrf.mxu0
    %v609 = vadd.f32 %v361, %v608
    %610 = vmatmul.bf16.gmra.mxu0 %v439
    %v611 = vpop.f32.mrf.mxu0
    %v612 = vadd.f32 %v364, %v611
    %v613 = vpop.f32.mrf.mxu0
    %v614 = vadd.f32 %v366, %v613
    %615 = vmatmul.bf16.gmra.mxu0 %v442
    %v616 = vpop.f32.mrf.mxu0
    %v617 = vadd.f32 %v369, %v616
    %v618 = vpop.f32.mrf.mxu0
    %v619 = vadd.f32 %v371, %v618
    %620 = vmatmul.bf16.gmra.mxu0 %v445
    %v621 = vpop.f32.mrf.mxu0
    %v622 = vadd.f32 %v374, %v621
    %v623 = vpop.f32.mrf.mxu0
    %v624 = vadd.f32 %v376, %v623
    %625 = vmatmul.bf16.gmra.mxu0 %v448
    %v626 = vpop.f32.mrf.mxu0
    %v627 = vadd.f32 %v379, %v626
    %v628 = vpop.f32.mrf.mxu0
    %v629 = vadd.f32 %v381, %v628
    %630 = vmatmul.bf16.gmra.mxu0 %v451
    %v631 = vpop.f32.mrf.mxu0
    %v632 = vadd.f32 %v384, %v631
    %v633 = vpop.f32.mrf.mxu0
    %634 = vdwg.mxu0
    %v635 = vld [vmem:[%s0 + $0x2] sm:$0xff]
    %v636 = vld [vmem:[%s0 + $0xa] sm:$0xff]
    %v637 = vld [vmem:[%s0 + $0x12] sm:$0xff]
    %v638 = vld [vmem:[%s0 + $0x1a] sm:$0xff]
    %v639 = vld [vmem:[%s0 + $0x22] sm:$0xff]
    %v640 = vld [vmem:[%s0 + $0x2a] sm:$0xff]
    %v641 = vld [vmem:[%s0 + $0x32] sm:$0xff]
    %v642 = vld [vmem:[%s0 + $0x3a] sm:$0xff]
    %v643 = vld [vmem:[%s0 + $0x42] sm:$0xff]
    %v644 = vld [vmem:[%s0 + $0x4a] sm:$0xff]
    %v645 = vld [vmem:[%s0 + $0x52] sm:$0xff]
    %v646 = vld [vmem:[%s0 + $0x5a] sm:$0xff]
    %v647 = vld [vmem:[%s0 + $0x62] sm:$0xff]
    %v648 = vld [vmem:[%s0 + $0x6a] sm:$0xff]
    %v649 = vld [vmem:[%s0 + $0x72] sm:$0xff]
    %v650 = vld [vmem:[%s0 + $0x7a] sm:$0xff]
    %v651 = vld [vmem:[%s0 + $0x82] sm:$0xff]
    %v652 = vld [vmem:[%s0 + $0x8a] sm:$0xff]
    %v653 = vld [vmem:[%s0 + $0x92] sm:$0xff]
    %v654 = vld [vmem:[%s0 + $0x9a] sm:$0xff]
    %v655 = vld [vmem:[%s0 + $0xa2] sm:$0xff]
    %v656 = vld [vmem:[%s0 + $0xaa] sm:$0xff]
    %v657 = vld [vmem:[%s0 + $0xb2] sm:$0xff]
    %v658 = vld [vmem:[%s0 + $0xba] sm:$0xff]
    %v659 = vld [vmem:[%s0 + $0xc2] sm:$0xff]
    %v660 = vld [vmem:[%s0 + $0xca] sm:$0xff]
    %v661 = vld [vmem:[%s0 + $0xd2] sm:$0xff]
    %v662 = vld [vmem:[%s0 + $0xda] sm:$0xff]
    %v663 = vld [vmem:[%s0 + $0xe2] sm:$0xff]
    %v664 = vld [vmem:[%s0 + $0xea] sm:$0xff]
    %v665 = vld [vmem:[%s0 + $0xf2] sm:$0xff]
    %v666 = vpack.c.bf16 %v636, %v635
    %v667 = vpack.c.bf16 %v638, %v637
    %v668 = vpack.c.bf16 %v640, %v639
    %v669 = vpack.c.bf16 %v642, %v641
    %v670 = vpack.c.bf16 %v644, %v643
    %v671 = vpack.c.bf16 %v646, %v645
    %v672 = vpack.c.bf16 %v648, %v647
    %v673 = vpack.c.bf16 %v650, %v649
    %v674 = vpack.c.bf16 %v652, %v651
    %v675 = vpack.c.bf16 %v654, %v653
    %v676 = vpack.c.bf16 %v656, %v655
    %v677 = vpack.c.bf16 %v658, %v657
    %v678 = vpack.c.bf16 %v660, %v659
    %v679 = vpack.c.bf16 %v662, %v661
    %v680 = vpack.c.bf16 %v664, %v663
    %v681 = vpack.c.bf16 %v665, %v665
    %s682 = scalar_lea.vmem %s1, 64
    %v683 = vld [vmem:[%s682] sm:$0xff]
    %v684 = vld [vmem:[%s682 + $0x8] sm:$0xff]
    %v685 = vld [vmem:[%s682 + $0x10] sm:$0xff]
    %v686 = vld [vmem:[%s682 + $0x18] sm:$0x33]
    %v691 = vunpack.c.l.b16 %v683
    %v692 = vunpack.c.h.b16 %v683
    %v693 = vunpack.c.l.b16 %v684
    %v694 = vunpack.c.h.b16 %v684
    %v695 = vunpack.c.l.b16 %v685
    %v696 = vunpack.c.h.b16 %v685
    %v697 = vunpack.c.l.b16 %v686
    %v698 = vunpack.c.h.b16 %v686
    %v699 = vpack.c.b16 %v693, %v691
    %v700 = vpack.c.b16 %v694, %v692
    %v701 = vpack.c.b16 %v697, %v695
    %v702 = vpack.c.b16 %v698, %v696
    %v706 = vsel %vm155, %v666, 0
    %v709 = vsel %vm155, %v667, 0
    %v712 = vsel %vm155, %v668, 0
    %v715 = vsel %vm155, %v669, 0
    %v718 = vsel %vm155, %v670, 0
    %v721 = vsel %vm155, %v671, 0
    %v724 = vsel %vm155, %v672, 0
    %v727 = vsel %vm155, %v673, 0
    %v730 = vsel %vm155, %v674, 0
    %v733 = vsel %vm155, %v675, 0
    %v736 = vsel %vm155, %v676, 0
    %v739 = vsel %vm155, %v677, 0
    %v742 = vsel %vm155, %v678, 0
    %v745 = vsel %vm155, %v679, 0
    %v748 = vsel %vm155, %v680, 0
    %v751 = vsel %vm155, %v681, 0
    %v754 = vsel %vm204, %v701, 0
    %v757 = vsel %vm204, %v702, 0
    %759 = vmatpush.bf16.msra.mxu0 0
    %760 = vmatpush.bf16.msra.mxu0 0
    %761 = vmatpush.bf16.msra.mxu0 0
    %762 = vmatpush.bf16.msra.mxu0 0
    %763 = vmatpush.bf16.msra.mxu0 0
    %764 = vmatpush.bf16.msra.mxu0 0
    %765 = vmatpush.bf16.msra.mxu0 %v754
    %766 = vmatpush.bf16.msra.mxu0 %v699
    %767 = vmatmul.bf16.gmra.mxu0 %v706
    %v768 = vpop.f32.mrf.mxu0
    %v769 = vadd.f32 0.0, %v768
    %v770 = vpop.f32.mrf.mxu0
    %v771 = vadd.f32 0.0, %v770
    %772 = vmatmul.bf16.gmra.mxu0 %v709
    %v773 = vpop.f32.mrf.mxu0
    %v774 = vadd.f32 0.0, %v773
    %v775 = vpop.f32.mrf.mxu0
    %v776 = vadd.f32 0.0, %v775
    %777 = vmatmul.bf16.gmra.mxu0 %v712
    %v778 = vpop.f32.mrf.mxu0
    %v779 = vadd.f32 0.0, %v778
    %v780 = vpop.f32.mrf.mxu0
    %v781 = vadd.f32 0.0, %v780
    %782 = vmatmul.bf16.gmra.mxu0 %v715
    %v783 = vpop.f32.mrf.mxu0
    %v784 = vadd.f32 0.0, %v783
    %v785 = vpop.f32.mrf.mxu0
    %v786 = vadd.f32 0.0, %v785
    %787 = vmatmul.bf16.gmra.mxu0 %v718
    %v788 = vpop.f32.mrf.mxu0
    %v789 = vadd.f32 0.0, %v788
    %v790 = vpop.f32.mrf.mxu0
    %v791 = vadd.f32 0.0, %v790
    %792 = vmatmul.bf16.gmra.mxu0 %v721
    %v793 = vpop.f32.mrf.mxu0
    %v794 = vadd.f32 0.0, %v793
    %v795 = vpop.f32.mrf.mxu0
    %v796 = vadd.f32 0.0, %v795
    %797 = vmatmul.bf16.gmra.mxu0 %v724
    %v798 = vpop.f32.mrf.mxu0
    %v799 = vadd.f32 0.0, %v798
    %v800 = vpop.f32.mrf.mxu0
    %v801 = vadd.f32 0.0, %v800
    %802 = vmatmul.bf16.gmra.mxu0 %v727
    %v803 = vpop.f32.mrf.mxu0
    %v804 = vadd.f32 0.0, %v803
    %v805 = vpop.f32.mrf.mxu0
    %v806 = vadd.f32 0.0, %v805
    %807 = vmatmul.bf16.gmra.mxu0 %v730
    %v808 = vpop.f32.mrf.mxu0
    %v809 = vadd.f32 0.0, %v808
    %v810 = vpop.f32.mrf.mxu0
    %v811 = vadd.f32 0.0, %v810
    %812 = vmatmul.bf16.gmra.mxu0 %v733
    %v813 = vpop.f32.mrf.mxu0
    %v814 = vadd.f32 0.0, %v813
    %v815 = vpop.f32.mrf.mxu0
    %v816 = vadd.f32 0.0, %v815
    %817 = vmatmul.bf16.gmra.mxu0 %v736
    %v818 = vpop.f32.mrf.mxu0
    %v819 = vadd.f32 0.0, %v818
    %v820 = vpop.f32.mrf.mxu0
    %v821 = vadd.f32 0.0, %v820
    %822 = vmatmul.bf16.gmra.mxu0 %v739
    %v823 = vpop.f32.mrf.mxu0
    %v824 = vadd.f32 0.0, %v823
    %v825 = vpop.f32.mrf.mxu0
    %v826 = vadd.f32 0.0, %v825
    %827 = vmatmul.bf16.gmra.mxu0 %v742
    %v828 = vpop.f32.mrf.mxu0
    %v829 = vadd.f32 0.0, %v828
    %v830 = vpop.f32.mrf.mxu0
    %v831 = vadd.f32 0.0, %v830
    %832 = vmatmul.bf16.gmra.mxu0 %v745
    %v833 = vpop.f32.mrf.mxu0
    %v834 = vadd.f32 0.0, %v833
    %v835 = vpop.f32.mrf.mxu0
    %v836 = vadd.f32 0.0, %v835
    %837 = vmatmul.bf16.gmra.mxu0 %v748
    %v838 = vpop.f32.mrf.mxu0
    %v839 = vadd.f32 0.0, %v838
    %v840 = vpop.f32.mrf.mxu0
    %v841 = vadd.f32 0.0, %v840
    %842 = vmatmul.bf16.gmra.mxu0 %v751
    %v843 = vpop.f32.mrf.mxu0
    %v844 = vadd.f32 0.0, %v843
    %v845 = vpop.f32.mrf.mxu0
    %846 = vdwg.mxu0
    %847 = vmatpush.bf16.msra.mxu0 0
    %848 = vmatpush.bf16.msra.mxu0 0
    %849 = vmatpush.bf16.msra.mxu0 0
    %850 = vmatpush.bf16.msra.mxu0 0
    %851 = vmatpush.bf16.msra.mxu0 0
    %852 = vmatpush.bf16.msra.mxu0 0
    %853 = vmatpush.bf16.msra.mxu0 %v757
    %854 = vmatpush.bf16.msra.mxu0 %v700
    %855 = vmatmul.bf16.gmra.mxu0 %v706
    %v856 = vpop.f32.mrf.mxu0
    %v857 = vadd.f32 0.0, %v856
    %v858 = vpop.f32.mrf.mxu0
    %v859 = vadd.f32 0.0, %v858
    %860 = vmatmul.bf16.gmra.mxu0 %v709
    %v861 = vpop.f32.mrf.mxu0
    %v862 = vadd.f32 0.0, %v861
    %v863 = vpop.f32.mrf.mxu0
    %v864 = vadd.f32 0.0, %v863
    %865 = vmatmul.bf16.gmra.mxu0 %v712
    %v866 = vpop.f32.mrf.mxu0
    %v867 = vadd.f32 0.0, %v866
    %v868 = vpop.f32.mrf.mxu0
    %v869 = vadd.f32 0.0, %v868
    %870 = vmatmul.bf16.gmra.mxu0 %v715
    %v871 = vpop.f32.mrf.mxu0
    %v872 = vadd.f32 0.0, %v871
    %v873 = vpop.f32.mrf.mxu0
    %v874 = vadd.f32 0.0, %v873
    %875 = vmatmul.bf16.gmra.mxu0 %v718
    %v876 = vpop.f32.mrf.mxu0
    %v877 = vadd.f32 0.0, %v876
    %v878 = vpop.f32.mrf.mxu0
    %v879 = vadd.f32 0.0, %v878
    %880 = vmatmul.bf16.gmra.mxu0 %v721
    %v881 = vpop.f32.mrf.mxu0
    %v882 = vadd.f32 0.0, %v881
    %v883 = vpop.f32.mrf.mxu0
    %v884 = vadd.f32 0.0, %v883
    %885 = vmatmul.bf16.gmra.mxu0 %v724
    %v886 = vpop.f32.mrf.mxu0
    %v887 = vadd.f32 0.0, %v886
    %v888 = vpop.f32.mrf.mxu0
    %v889 = vadd.f32 0.0, %v888
    %890 = vmatmul.bf16.gmra.mxu0 %v727
    %v891 = vpop.f32.mrf.mxu0
    %v892 = vadd.f32 0.0, %v891
    %v893 = vpop.f32.mrf.mxu0
    %v894 = vadd.f32 0.0, %v893
    %895 = vmatmul.bf16.gmra.mxu0 %v730
    %v896 = vpop.f32.mrf.mxu0
    %v897 = vadd.f32 0.0, %v896
    %v898 = vpop.f32.mrf.mxu0
    %v899 = vadd.f32 0.0, %v898
    %900 = vmatmul.bf16.gmra.mxu0 %v733
    %v901 = vpop.f32.mrf.mxu0
    %v902 = vadd.f32 0.0, %v901
    %v903 = vpop.f32.mrf.mxu0
    %v904 = vadd.f32 0.0, %v903
    %905 = vmatmul.bf16.gmra.mxu0 %v736
    %v906 = vpop.f32.mrf.mxu0
    %v907 = vadd.f32 0.0, %v906
    %v908 = vpop.f32.mrf.mxu0
    %v909 = vadd.f32 0.0, %v908
    %910 = vmatmul.bf16.gmra.mxu0 %v739
    %v911 = vpop.f32.mrf.mxu0
    %v912 = vadd.f32 0.0, %v911
    %v913 = vpop.f32.mrf.mxu0
    %v914 = vadd.f32 0.0, %v913
    %915 = vmatmul.bf16.gmra.mxu0 %v742
    %v916 = vpop.f32.mrf.mxu0
    %v917 = vadd.f32 0.0, %v916
    %v918 = vpop.f32.mrf.mxu0
    %v919 = vadd.f32 0.0, %v918
    %920 = vmatmul.bf16.gmra.mxu0 %v745
    %v921 = vpop.f32.mrf.mxu0
    %v922 = vadd.f32 0.0, %v921
    %v923 = vpop.f32.mrf.mxu0
    %v924 = vadd.f32 0.0, %v923
    %925 = vmatmul.bf16.gmra.mxu0 %v748
    %v926 = vpop.f32.mrf.mxu0
    %v927 = vadd.f32 0.0, %v926
    %v928 = vpop.f32.mrf.mxu0
    %v929 = vadd.f32 0.0, %v928
    %930 = vmatmul.bf16.gmra.mxu0 %v751
    %v931 = vpop.f32.mrf.mxu0
    %v932 = vadd.f32 0.0, %v931
    %v933 = vpop.f32.mrf.mxu0
    %934 = vdwg.mxu0
    %v935 = vadd.f32 %v469, %v769
    %v936 = vadd.f32 %v557, %v857
    %v937 = vadd.f32 %v471, %v771
    %v938 = vadd.f32 %v559, %v859
    %v939 = vadd.f32 %v474, %v774
    %v940 = vadd.f32 %v562, %v862
    %v941 = vadd.f32 %v476, %v776
    %v942 = vadd.f32 %v564, %v864
    %v943 = vadd.f32 %v479, %v779
    %v944 = vadd.f32 %v567, %v867
    %v945 = vadd.f32 %v481, %v781
    %v946 = vadd.f32 %v569, %v869
    %v947 = vadd.f32 %v484, %v784
    %v948 = vadd.f32 %v572, %v872
    %v949 = vadd.f32 %v486, %v786
    %v950 = vadd.f32 %v574, %v874
    %v951 = vadd.f32 %v489, %v789
    %v952 = vadd.f32 %v577, %v877
    %v953 = vadd.f32 %v491, %v791
    %v954 = vadd.f32 %v579, %v879
    %v955 = vadd.f32 %v494, %v794
    %v956 = vadd.f32 %v582, %v882
    %v957 = vadd.f32 %v496, %v796
    %v958 = vadd.f32 %v584, %v884
    %v959 = vadd.f32 %v499, %v799
    %v960 = vadd.f32 %v587, %v887
    %v961 = vadd.f32 %v501, %v801
    %v962 = vadd.f32 %v589, %v889
    %v963 = vadd.f32 %v504, %v804
    %v964 = vadd.f32 %v592, %v892
    %v965 = vadd.f32 %v506, %v806
    %v966 = vadd.f32 %v594, %v894
    %v967 = vadd.f32 %v509, %v809
    %v968 = vadd.f32 %v597, %v897
    %v969 = vadd.f32 %v511, %v811
    %v970 = vadd.f32 %v599, %v899
    %v971 = vadd.f32 %v514, %v814
    %v972 = vadd.f32 %v602, %v902
    %v973 = vadd.f32 %v516, %v816
    %v974 = vadd.f32 %v604, %v904
    %v975 = vadd.f32 %v519, %v819
    %v976 = vadd.f32 %v607, %v907
    %v977 = vadd.f32 %v521, %v821
    %v978 = vadd.f32 %v609, %v909
    %v979 = vadd.f32 %v524, %v824
    %v980 = vadd.f32 %v612, %v912
    %v981 = vadd.f32 %v526, %v826
    %v982 = vadd.f32 %v614, %v914
    %v983 = vadd.f32 %v529, %v829
    %v984 = vadd.f32 %v617, %v917
    %v985 = vadd.f32 %v531, %v831
    %v986 = vadd.f32 %v619, %v919
    %v987 = vadd.f32 %v534, %v834
    %v988 = vadd.f32 %v622, %v922
    %v989 = vadd.f32 %v536, %v836
    %v990 = vadd.f32 %v624, %v924
    %v991 = vadd.f32 %v539, %v839
    %v992 = vadd.f32 %v627, %v927
    %v993 = vadd.f32 %v541, %v841
    %v994 = vadd.f32 %v629, %v929
    %v995 = vadd.f32 %v544, %v844
    %v996 = vadd.f32 %v632, %v932
    %v997 = vld [vmem:[%s0 + $0x3] sm:$0xff]
    %v998 = vld [vmem:[%s0 + $0xb] sm:$0xff]
    %v999 = vld [vmem:[%s0 + $0x13] sm:$0xff]
    %v1000 = vld [vmem:[%s0 + $0x1b] sm:$0xff]
    %v1001 = vld [vmem:[%s0 + $0x23] sm:$0xff]
    %v1002 = vld [vmem:[%s0 + $0x2b] sm:$0xff]
    %v1003 = vld [vmem:[%s0 + $0x33] sm:$0xff]
    %v1004 = vld [vmem:[%s0 + $0x3b] sm:$0xff]
    %v1005 = vld [vmem:[%s0 + $0x43] sm:$0xff]
    %v1006 = vld [vmem:[%s0 + $0x4b] sm:$0xff]
    %v1007 = vld [vmem:[%s0 + $0x53] sm:$0xff]
    %v1008 = vld [vmem:[%s0 + $0x5b] sm:$0xff]
    %v1009 = vld [vmem:[%s0 + $0x63] sm:$0xff]
    %v1010 = vld [vmem:[%s0 + $0x6b] sm:$0xff]
    %v1011 = vld [vmem:[%s0 + $0x73] sm:$0xff]
    %v1012 = vld [vmem:[%s0 + $0x7b] sm:$0xff]
    %v1013 = vld [vmem:[%s0 + $0x83] sm:$0xff]
    %v1014 = vld [vmem:[%s0 + $0x8b] sm:$0xff]
    %v1015 = vld [vmem:[%s0 + $0x93] sm:$0xff]
    %v1016 = vld [vmem:[%s0 + $0x9b] sm:$0xff]
    %v1017 = vld [vmem:[%s0 + $0xa3] sm:$0xff]
    %v1018 = vld [vmem:[%s0 + $0xab] sm:$0xff]
    %v1019 = vld [vmem:[%s0 + $0xb3] sm:$0xff]
    %v1020 = vld [vmem:[%s0 + $0xbb] sm:$0xff]
    %v1021 = vld [vmem:[%s0 + $0xc3] sm:$0xff]
    %v1022 = vld [vmem:[%s0 + $0xcb] sm:$0xff]
    %v1023 = vld [vmem:[%s0 + $0xd3] sm:$0xff]
    %v1024 = vld [vmem:[%s0 + $0xdb] sm:$0xff]
    %v1025 = vld [vmem:[%s0 + $0xe3] sm:$0xff]
    %v1026 = vld [vmem:[%s0 + $0xeb] sm:$0xff]
    %v1027 = vld [vmem:[%s0 + $0xf3] sm:$0xff]
    %v1028 = vpack.c.bf16 %v998, %v997
    %v1029 = vpack.c.bf16 %v1000, %v999
    %v1030 = vpack.c.bf16 %v1002, %v1001
    %v1031 = vpack.c.bf16 %v1004, %v1003
    %v1032 = vpack.c.bf16 %v1006, %v1005
    %v1033 = vpack.c.bf16 %v1008, %v1007
    %v1034 = vpack.c.bf16 %v1010, %v1009
    %v1035 = vpack.c.bf16 %v1012, %v1011
    %v1036 = vpack.c.bf16 %v1014, %v1013
    %v1037 = vpack.c.bf16 %v1016, %v1015
    %v1038 = vpack.c.bf16 %v1018, %v1017
    %v1039 = vpack.c.bf16 %v1020, %v1019
    %v1040 = vpack.c.bf16 %v1022, %v1021
    %v1041 = vpack.c.bf16 %v1024, %v1023
    %v1042 = vpack.c.bf16 %v1026, %v1025
    %v1043 = vpack.c.bf16 %v1027, %v1027
    %s1044 = scalar_lea.vmem %s1, 96
    %v1045 = vld [vmem:[%s1044] sm:$0xff]
    %v1046 = vld [vmem:[%s1044 + $0x8] sm:$0xff]
    %v1047 = vld [vmem:[%s1044 + $0x10] sm:$0xff]
    %v1048 = vld [vmem:[%s1044 + $0x18] sm:$0x33]
    %v1053 = vunpack.c.l.b16 %v1045
    %v1054 = vunpack.c.h.b16 %v1045
    %v1055 = vunpack.c.l.b16 %v1046
    %v1056 = vunpack.c.h.b16 %v1046
    %v1057 = vunpack.c.l.b16 %v1047
    %v1058 = vunpack.c.h.b16 %v1047
    %v1059 = vunpack.c.l.b16 %v1048
    %v1060 = vunpack.c.h.b16 %v1048
    %v1061 = vpack.c.b16 %v1055, %v1053
    %v1062 = vpack.c.b16 %v1056, %v1054
    %v1063 = vpack.c.b16 %v1059, %v1057
    %v1064 = vpack.c.b16 %v1060, %v1058
    %v1068 = vsel %vm155, %v1028, 0
    %v1071 = vsel %vm155, %v1029, 0
    %v1074 = vsel %vm155, %v1030, 0
    %v1077 = vsel %vm155, %v1031, 0
    %v1080 = vsel %vm155, %v1032, 0
    %v1083 = vsel %vm155, %v1033, 0
    %v1086 = vsel %vm155, %v1034, 0
    %v1089 = vsel %vm155, %v1035, 0
    %v1092 = vsel %vm155, %v1036, 0
    %v1095 = vsel %vm155, %v1037, 0
    %v1098 = vsel %vm155, %v1038, 0
    %v1101 = vsel %vm155, %v1039, 0
    %v1104 = vsel %vm155, %v1040, 0
    %v1107 = vsel %vm155, %v1041, 0
    %v1110 = vsel %vm155, %v1042, 0
    %v1113 = vsel %vm155, %v1043, 0
    %v1116 = vsel %vm204, %v1063, 0
    %v1119 = vsel %vm204, %v1064, 0
    %1121 = vmatpush.bf16.msra.mxu0 0
    %1122 = vmatpush.bf16.msra.mxu0 0
    %1123 = vmatpush.bf16.msra.mxu0 0
    %1124 = vmatpush.bf16.msra.mxu0 0
    %1125 = vmatpush.bf16.msra.mxu0 0
    %1126 = vmatpush.bf16.msra.mxu0 0
    %1127 = vmatpush.bf16.msra.mxu0 %v1116
    %1128 = vmatpush.bf16.msra.mxu0 %v1061
    %1129 = vmatmul.bf16.gmra.mxu0 %v1068
    %v1130 = vpop.f32.mrf.mxu0
    %v1131 = vadd.f32 0.0, %v1130
    %v1132 = vpop.f32.mrf.mxu0
    %v1133 = vadd.f32 0.0, %v1132
    %1134 = vmatmul.bf16.gmra.mxu0 %v1071
    %v1135 = vpop.f32.mrf.mxu0
    %v1136 = vadd.f32 0.0, %v1135
    %v1137 = vpop.f32.mrf.mxu0
    %v1138 = vadd.f32 0.0, %v1137
    %1139 = vmatmul.bf16.gmra.mxu0 %v1074
    %v1140 = vpop.f32.mrf.mxu0
    %v1141 = vadd.f32 0.0, %v1140
    %v1142 = vpop.f32.mrf.mxu0
    %v1143 = vadd.f32 0.0, %v1142
    %1144 = vmatmul.bf16.gmra.mxu0 %v1077
    %v1145 = vpop.f32.mrf.mxu0
    %v1146 = vadd.f32 0.0, %v1145
    %v1147 = vpop.f32.mrf.mxu0
    %v1148 = vadd.f32 0.0, %v1147
    %1149 = vmatmul.bf16.gmra.mxu0 %v1080
    %v1150 = vpop.f32.mrf.mxu0
    %v1151 = vadd.f32 0.0, %v1150
    %v1152 = vpop.f32.mrf.mxu0
    %v1153 = vadd.f32 0.0, %v1152
    %1154 = vmatmul.bf16.gmra.mxu0 %v1083
    %v1155 = vpop.f32.mrf.mxu0
    %v1156 = vadd.f32 0.0, %v1155
    %v1157 = vpop.f32.mrf.mxu0
    %v1158 = vadd.f32 0.0, %v1157
    %1159 = vmatmul.bf16.gmra.mxu0 %v1086
    %v1160 = vpop.f32.mrf.mxu0
    %v1161 = vadd.f32 0.0, %v1160
    %v1162 = vpop.f32.mrf.mxu0
    %v1163 = vadd.f32 0.0, %v1162
    %1164 = vmatmul.bf16.gmra.mxu0 %v1089
    %v1165 = vpop.f32.mrf.mxu0
    %v1166 = vadd.f32 0.0, %v1165
    %v1167 = vpop.f32.mrf.mxu0
    %v1168 = vadd.f32 0.0, %v1167
    %1169 = vmatmul.bf16.gmra.mxu0 %v1092
    %v1170 = vpop.f32.mrf.mxu0
    %v1171 = vadd.f32 0.0, %v1170
    %v1172 = vpop.f32.mrf.mxu0
    %v1173 = vadd.f32 0.0, %v1172
    %1174 = vmatmul.bf16.gmra.mxu0 %v1095
    %v1175 = vpop.f32.mrf.mxu0
    %v1176 = vadd.f32 0.0, %v1175
    %v1177 = vpop.f32.mrf.mxu0
    %v1178 = vadd.f32 0.0, %v1177
    %1179 = vmatmul.bf16.gmra.mxu0 %v1098
    %v1180 = vpop.f32.mrf.mxu0
    %v1181 = vadd.f32 0.0, %v1180
    %v1182 = vpop.f32.mrf.mxu0
    %v1183 = vadd.f32 0.0, %v1182
    %1184 = vmatmul.bf16.gmra.mxu0 %v1101
    %v1185 = vpop.f32.mrf.mxu0
    %v1186 = vadd.f32 0.0, %v1185
    %v1187 = vpop.f32.mrf.mxu0
    %v1188 = vadd.f32 0.0, %v1187
    %1189 = vmatmul.bf16.gmra.mxu0 %v1104
    %v1190 = vpop.f32.mrf.mxu0
    %v1191 = vadd.f32 0.0, %v1190
    %v1192 = vpop.f32.mrf.mxu0
    %v1193 = vadd.f32 0.0, %v1192
    %1194 = vmatmul.bf16.gmra.mxu0 %v1107
    %v1195 = vpop.f32.mrf.mxu0
    %v1196 = vadd.f32 0.0, %v1195
    %v1197 = vpop.f32.mrf.mxu0
    %v1198 = vadd.f32 0.0, %v1197
    %1199 = vmatmul.bf16.gmra.mxu0 %v1110
    %v1200 = vpop.f32.mrf.mxu0
    %v1201 = vadd.f32 0.0, %v1200
    %v1202 = vpop.f32.mrf.mxu0
    %v1203 = vadd.f32 0.0, %v1202
    %1204 = vmatmul.bf16.gmra.mxu0 %v1113
    %v1205 = vpop.f32.mrf.mxu0
    %v1206 = vadd.f32 0.0, %v1205
    %v1207 = vpop.f32.mrf.mxu0
    %1208 = vdwg.mxu0
    %1209 = vmatpush.bf16.msra.mxu0 0
    %1210 = vmatpush.bf16.msra.mxu0 0
    %1211 = vmatpush.bf16.msra.mxu0 0
    %1212 = vmatpush.bf16.msra.mxu0 0
    %1213 = vmatpush.bf16.msra.mxu0 0
    %1214 = vmatpush.bf16.msra.mxu0 0
    %1215 = vmatpush.bf16.msra.mxu0 %v1119
    %1216 = vmatpush.bf16.msra.mxu0 %v1062
    %1217 = vmatmul.bf16.gmra.mxu0 %v1068
    %v1218 = vpop.f32.mrf.mxu0
    %v1219 = vadd.f32 0.0, %v1218
    %v1220 = vpop.f32.mrf.mxu0
    %v1221 = vadd.f32 0.0, %v1220
    %1222 = vmatmul.bf16.gmra.mxu0 %v1071
    %v1223 = vpop.f32.mrf.mxu0
    %v1224 = vadd.f32 0.0, %v1223
    %v1225 = vpop.f32.mrf.mxu0
    %v1226 = vadd.f32 0.0, %v1225
    %1227 = vmatmul.bf16.gmra.mxu0 %v1074
    %v1228 = vpop.f32.mrf.mxu0
    %v1229 = vadd.f32 0.0, %v1228
    %v1230 = vpop.f32.mrf.mxu0
    %v1231 = vadd.f32 0.0, %v1230
    %1232 = vmatmul.bf16.gmra.mxu0 %v1077
    %v1233 = vpop.f32.mrf.mxu0
    %v1234 = vadd.f32 0.0, %v1233
    %v1235 = vpop.f32.mrf.mxu0
    %v1236 = vadd.f32 0.0, %v1235
    %1237 = vmatmul.bf16.gmra.mxu0 %v1080
    %v1238 = vpop.f32.mrf.mxu0
    %v1239 = vadd.f32 0.0, %v1238
    %v1240 = vpop.f32.mrf.mxu0
    %v1241 = vadd.f32 0.0, %v1240
    %1242 = vmatmul.bf16.gmra.mxu0 %v1083
    %v1243 = vpop.f32.mrf.mxu0
    %v1244 = vadd.f32 0.0, %v1243
    %v1245 = vpop.f32.mrf.mxu0
    %v1246 = vadd.f32 0.0, %v1245
    %1247 = vmatmul.bf16.gmra.mxu0 %v1086
    %v1248 = vpop.f32.mrf.mxu0
    %v1249 = vadd.f32 0.0, %v1248
    %v1250 = vpop.f32.mrf.mxu0
    %v1251 = vadd.f32 0.0, %v1250
    %1252 = vmatmul.bf16.gmra.mxu0 %v1089
    %v1253 = vpop.f32.mrf.mxu0
    %v1254 = vadd.f32 0.0, %v1253
    %v1255 = vpop.f32.mrf.mxu0
    %v1256 = vadd.f32 0.0, %v1255
    %1257 = vmatmul.bf16.gmra.mxu0 %v1092
    %v1258 = vpop.f32.mrf.mxu0
    %v1259 = vadd.f32 0.0, %v1258
    %v1260 = vpop.f32.mrf.mxu0
    %v1261 = vadd.f32 0.0, %v1260
    %1262 = vmatmul.bf16.gmra.mxu0 %v1095
    %v1263 = vpop.f32.mrf.mxu0
    %v1264 = vadd.f32 0.0, %v1263
    %v1265 = vpop.f32.mrf.mxu0
    %v1266 = vadd.f32 0.0, %v1265
    %1267 = vmatmul.bf16.gmra.mxu0 %v1098
    %v1268 = vpop.f32.mrf.mxu0
    %v1269 = vadd.f32 0.0, %v1268
    %v1270 = vpop.f32.mrf.mxu0
    %v1271 = vadd.f32 0.0, %v1270
    %1272 = vmatmul.bf16.gmra.mxu0 %v1101
    %v1273 = vpop.f32.mrf.mxu0
    %v1274 = vadd.f32 0.0, %v1273
    %v1275 = vpop.f32.mrf.mxu0
    %v1276 = vadd.f32 0.0, %v1275
    %1277 = vmatmul.bf16.gmra.mxu0 %v1104
    %v1278 = vpop.f32.mrf.mxu0
    %v1279 = vadd.f32 0.0, %v1278
    %v1280 = vpop.f32.mrf.mxu0
    %v1281 = vadd.f32 0.0, %v1280
    %1282 = vmatmul.bf16.gmra.mxu0 %v1107
    %v1283 = vpop.f32.mrf.mxu0
    %v1284 = vadd.f32 0.0, %v1283
    %v1285 = vpop.f32.mrf.mxu0
    %v1286 = vadd.f32 0.0, %v1285
    %1287 = vmatmul.bf16.gmra.mxu0 %v1110
    %v1288 = vpop.f32.mrf.mxu0
    %v1289 = vadd.f32 0.0, %v1288
    %v1290 = vpop.f32.mrf.mxu0
    %v1291 = vadd.f32 0.0, %v1290
    %1292 = vmatmul.bf16.gmra.mxu0 %v1113
    %v1293 = vpop.f32.mrf.mxu0
    %v1294 = vadd.f32 0.0, %v1293
    %v1295 = vpop.f32.mrf.mxu0
    %1296 = vdwg.mxu0
    %v1297 = vadd.f32 %v935, %v1131
    %v1298 = vadd.f32 %v936, %v1219
    %v1299 = vadd.f32 %v937, %v1133
    %v1300 = vadd.f32 %v938, %v1221
    %v1301 = vadd.f32 %v939, %v1136
    %v1302 = vadd.f32 %v940, %v1224
    %v1303 = vadd.f32 %v941, %v1138
    %v1304 = vadd.f32 %v942, %v1226
    %v1305 = vadd.f32 %v943, %v1141
    %v1306 = vadd.f32 %v944, %v1229
    %v1307 = vadd.f32 %v945, %v1143
    %v1308 = vadd.f32 %v946, %v1231
    %v1309 = vadd.f32 %v947, %v1146
    %v1310 = vadd.f32 %v948, %v1234
    %v1311 = vadd.f32 %v949, %v1148
    %v1312 = vadd.f32 %v950, %v1236
    %v1313 = vadd.f32 %v951, %v1151
    %v1314 = vadd.f32 %v952, %v1239
    %v1315 = vadd.f32 %v953, %v1153
    %v1316 = vadd.f32 %v954, %v1241
    %v1317 = vadd.f32 %v955, %v1156
    %v1318 = vadd.f32 %v956, %v1244
    %v1319 = vadd.f32 %v957, %v1158
    %v1320 = vadd.f32 %v958, %v1246
    %v1321 = vadd.f32 %v959, %v1161
    %v1322 = vadd.f32 %v960, %v1249
    %v1323 = vadd.f32 %v961, %v1163
    %v1324 = vadd.f32 %v962, %v1251
    %v1325 = vadd.f32 %v963, %v1166
    %v1326 = vadd.f32 %v964, %v1254
    %v1327 = vadd.f32 %v965, %v1168
    %v1328 = vadd.f32 %v966, %v1256
    %v1329 = vadd.f32 %v967, %v1171
    %v1330 = vadd.f32 %v968, %v1259
    %v1331 = vadd.f32 %v969, %v1173
    %v1332 = vadd.f32 %v970, %v1261
    %v1333 = vadd.f32 %v971, %v1176
    %v1334 = vadd.f32 %v972, %v1264
    %v1335 = vadd.f32 %v973, %v1178
    %v1336 = vadd.f32 %v974, %v1266
    %v1337 = vadd.f32 %v975, %v1181
    %v1338 = vadd.f32 %v976, %v1269
    %v1339 = vadd.f32 %v977, %v1183
    %v1340 = vadd.f32 %v978, %v1271
    %v1341 = vadd.f32 %v979, %v1186
    %v1342 = vadd.f32 %v980, %v1274
    %v1343 = vadd.f32 %v981, %v1188
    %v1344 = vadd.f32 %v982, %v1276
    %v1345 = vadd.f32 %v983, %v1191
    %v1346 = vadd.f32 %v984, %v1279
    %v1347 = vadd.f32 %v985, %v1193
    %v1348 = vadd.f32 %v986, %v1281
    %v1349 = vadd.f32 %v987, %v1196
    %v1350 = vadd.f32 %v988, %v1284
    %v1351 = vadd.f32 %v989, %v1198
    %v1352 = vadd.f32 %v990, %v1286
    %v1353 = vadd.f32 %v991, %v1201
    %v1354 = vadd.f32 %v992, %v1289
    %v1355 = vadd.f32 %v993, %v1203
    %v1356 = vadd.f32 %v994, %v1291
    %v1357 = vadd.f32 %v995, %v1206
    %v1358 = vadd.f32 %v996, %v1294
    %v1359 = vld [vmem:[%s0 + $0x4] sm:$0xff]
    %v1360 = vld [vmem:[%s0 + $0xc] sm:$0xff]
    %v1361 = vld [vmem:[%s0 + $0x14] sm:$0xff]
    %v1362 = vld [vmem:[%s0 + $0x1c] sm:$0xff]
    %v1363 = vld [vmem:[%s0 + $0x24] sm:$0xff]
    %v1364 = vld [vmem:[%s0 + $0x2c] sm:$0xff]
    %v1365 = vld [vmem:[%s0 + $0x34] sm:$0xff]
    %v1366 = vld [vmem:[%s0 + $0x3c] sm:$0xff]
    %v1367 = vld [vmem:[%s0 + $0x44] sm:$0xff]
    %v1368 = vld [vmem:[%s0 + $0x4c] sm:$0xff]
    %v1369 = vld [vmem:[%s0 + $0x54] sm:$0xff]
    %v1370 = vld [vmem:[%s0 + $0x5c] sm:$0xff]
    %v1371 = vld [vmem:[%s0 + $0x64] sm:$0xff]
    %v1372 = vld [vmem:[%s0 + $0x6c] sm:$0xff]
    %v1373 = vld [vmem:[%s0 + $0x74] sm:$0xff]
    %v1374 = vld [vmem:[%s0 + $0x7c] sm:$0xff]
    %v1375 = vld [vmem:[%s0 + $0x84] sm:$0xff]
    %v1376 = vld [vmem:[%s0 + $0x8c] sm:$0xff]
    %v1377 = vld [vmem:[%s0 + $0x94] sm:$0xff]
    %v1378 = vld [vmem:[%s0 + $0x9c] sm:$0xff]
    %v1379 = vld [vmem:[%s0 + $0xa4] sm:$0xff]
    %v1380 = vld [vmem:[%s0 + $0xac] sm:$0xff]
    %v1381 = vld [vmem:[%s0 + $0xb4] sm:$0xff]
    %v1382 = vld [vmem:[%s0 + $0xbc] sm:$0xff]
    %v1383 = vld [vmem:[%s0 + $0xc4] sm:$0xff]
    %v1384 = vld [vmem:[%s0 + $0xcc] sm:$0xff]
    %v1385 = vld [vmem:[%s0 + $0xd4] sm:$0xff]
    %v1386 = vld [vmem:[%s0 + $0xdc] sm:$0xff]
    %v1387 = vld [vmem:[%s0 + $0xe4] sm:$0xff]
    %v1388 = vld [vmem:[%s0 + $0xec] sm:$0xff]
    %v1389 = vld [vmem:[%s0 + $0xf4] sm:$0xff]
    %v1390 = vpack.c.bf16 %v1360, %v1359
    %v1391 = vpack.c.bf16 %v1362, %v1361
    %v1392 = vpack.c.bf16 %v1364, %v1363
    %v1393 = vpack.c.bf16 %v1366, %v1365
    %v1394 = vpack.c.bf16 %v1368, %v1367
    %v1395 = vpack.c.bf16 %v1370, %v1369
    %v1396 = vpack.c.bf16 %v1372, %v1371
    %v1397 = vpack.c.bf16 %v1374, %v1373
    %v1398 = vpack.c.bf16 %v1376, %v1375
    %v1399 = vpack.c.bf16 %v1378, %v1377
    %v1400 = vpack.c.bf16 %v1380, %v1379
    %v1401 = vpack.c.bf16 %v1382, %v1381
    %v1402 = vpack.c.bf16 %v1384, %v1383
    %v1403 = vpack.c.bf16 %v1386, %v1385
    %v1404 = vpack.c.bf16 %v1388, %v1387
    %v1405 = vpack.c.bf16 %v1389, %v1389
    %s1406 = scalar_lea.vmem %s1, 128
    %v1407 = vld [vmem:[%s1406] sm:$0xff]
    %v1408 = vld [vmem:[%s1406 + $0x8] sm:$0xff]
    %v1409 = vld [vmem:[%s1406 + $0x10] sm:$0xff]
    %v1410 = vld [vmem:[%s1406 + $0x18] sm:$0x33]
    %v1415 = vunpack.c.l.b16 %v1407
    %v1416 = vunpack.c.h.b16 %v1407
    %v1417 = vunpack.c.l.b16 %v1408
    %v1418 = vunpack.c.h.b16 %v1408
    %v1419 = vunpack.c.l.b16 %v1409
    %v1420 = vunpack.c.h.b16 %v1409
    %v1421 = vunpack.c.l.b16 %v1410
    %v1422 = vunpack.c.h.b16 %v1410
    %v1423 = vpack.c.b16 %v1417, %v1415
    %v1424 = vpack.c.b16 %v1418, %v1416
    %v1425 = vpack.c.b16 %v1421, %v1419
    %v1426 = vpack.c.b16 %v1422, %v1420
    %v1430 = vsel %vm155, %v1390, 0
    %v1433 = vsel %vm155, %v1391, 0
    %v1436 = vsel %vm155, %v1392, 0
    %v1439 = vsel %vm155, %v1393, 0
    %v1442 = vsel %vm155, %v1394, 0
    %v1445 = vsel %vm155, %v1395, 0
    %v1448 = vsel %vm155, %v1396, 0
    %v1451 = vsel %vm155, %v1397, 0
    %v1454 = vsel %vm155, %v1398, 0
    %v1457 = vsel %vm155, %v1399, 0
    %v1460 = vsel %vm155, %v1400, 0
    %v1463 = vsel %vm155, %v1401, 0
    %v1466 = vsel %vm155, %v1402, 0
    %v1469 = vsel %vm155, %v1403, 0
    %v1472 = vsel %vm155, %v1404, 0
    %v1475 = vsel %vm155, %v1405, 0
    %v1478 = vsel %vm204, %v1425, 0
    %v1481 = vsel %vm204, %v1426, 0
    %1483 = vmatpush.bf16.msra.mxu0 0
    %1484 = vmatpush.bf16.msra.mxu0 0
    %1485 = vmatpush.bf16.msra.mxu0 0
    %1486 = vmatpush.bf16.msra.mxu0 0
    %1487 = vmatpush.bf16.msra.mxu0 0
    %1488 = vmatpush.bf16.msra.mxu0 0
    %1489 = vmatpush.bf16.msra.mxu0 %v1478
    %1490 = vmatpush.bf16.msra.mxu0 %v1423
    %1491 = vmatmul.bf16.gmra.mxu0 %v1430
    %v1492 = vpop.f32.mrf.mxu0
    %v1493 = vadd.f32 0.0, %v1492
    %v1494 = vpop.f32.mrf.mxu0
    %v1495 = vadd.f32 0.0, %v1494
    %1496 = vmatmul.bf16.gmra.mxu0 %v1433
    %v1497 = vpop.f32.mrf.mxu0
    %v1498 = vadd.f32 0.0, %v1497
    %v1499 = vpop.f32.mrf.mxu0
    %v1500 = vadd.f32 0.0, %v1499
    %1501 = vmatmul.bf16.gmra.mxu0 %v1436
    %v1502 = vpop.f32.mrf.mxu0
    %v1503 = vadd.f32 0.0, %v1502
    %v1504 = vpop.f32.mrf.mxu0
    %v1505 = vadd.f32 0.0, %v1504
    %1506 = vmatmul.bf16.gmra.mxu0 %v1439
    %v1507 = vpop.f32.mrf.mxu0
    %v1508 = vadd.f32 0.0, %v1507
    %v1509 = vpop.f32.mrf.mxu0
    %v1510 = vadd.f32 0.0, %v1509
    %1511 = vmatmul.bf16.gmra.mxu0 %v1442
    %v1512 = vpop.f32.mrf.mxu0
    %v1513 = vadd.f32 0.0, %v1512
    %v1514 = vpop.f32.mrf.mxu0
    %v1515 = vadd.f32 0.0, %v1514
    %1516 = vmatmul.bf16.gmra.mxu0 %v1445
    %v1517 = vpop.f32.mrf.mxu0
    %v1518 = vadd.f32 0.0, %v1517
    %v1519 = vpop.f32.mrf.mxu0
    %v1520 = vadd.f32 0.0, %v1519
    %1521 = vmatmul.bf16.gmra.mxu0 %v1448
    %v1522 = vpop.f32.mrf.mxu0
    %v1523 = vadd.f32 0.0, %v1522
    %v1524 = vpop.f32.mrf.mxu0
    %v1525 = vadd.f32 0.0, %v1524
    %1526 = vmatmul.bf16.gmra.mxu0 %v1451
    %v1527 = vpop.f32.mrf.mxu0
    %v1528 = vadd.f32 0.0, %v1527
    %v1529 = vpop.f32.mrf.mxu0
    %v1530 = vadd.f32 0.0, %v1529
    %1531 = vmatmul.bf16.gmra.mxu0 %v1454
    %v1532 = vpop.f32.mrf.mxu0
    %v1533 = vadd.f32 0.0, %v1532
    %v1534 = vpop.f32.mrf.mxu0
    %v1535 = vadd.f32 0.0, %v1534
    %1536 = vmatmul.bf16.gmra.mxu0 %v1457
    %v1537 = vpop.f32.mrf.mxu0
    %v1538 = vadd.f32 0.0, %v1537
    %v1539 = vpop.f32.mrf.mxu0
    %v1540 = vadd.f32 0.0, %v1539
    %1541 = vmatmul.bf16.gmra.mxu0 %v1460
    %v1542 = vpop.f32.mrf.mxu0
    %v1543 = vadd.f32 0.0, %v1542
    %v1544 = vpop.f32.mrf.mxu0
    %v1545 = vadd.f32 0.0, %v1544
    %1546 = vmatmul.bf16.gmra.mxu0 %v1463
    %v1547 = vpop.f32.mrf.mxu0
    %v1548 = vadd.f32 0.0, %v1547
    %v1549 = vpop.f32.mrf.mxu0
    %v1550 = vadd.f32 0.0, %v1549
    %1551 = vmatmul.bf16.gmra.mxu0 %v1466
    %v1552 = vpop.f32.mrf.mxu0
    %v1553 = vadd.f32 0.0, %v1552
    %v1554 = vpop.f32.mrf.mxu0
    %v1555 = vadd.f32 0.0, %v1554
    %1556 = vmatmul.bf16.gmra.mxu0 %v1469
    %v1557 = vpop.f32.mrf.mxu0
    %v1558 = vadd.f32 0.0, %v1557
    %v1559 = vpop.f32.mrf.mxu0
    %v1560 = vadd.f32 0.0, %v1559
    %1561 = vmatmul.bf16.gmra.mxu0 %v1472
    %v1562 = vpop.f32.mrf.mxu0
    %v1563 = vadd.f32 0.0, %v1562
    %v1564 = vpop.f32.mrf.mxu0
    %v1565 = vadd.f32 0.0, %v1564
    %1566 = vmatmul.bf16.gmra.mxu0 %v1475
    %v1567 = vpop.f32.mrf.mxu0
    %v1568 = vadd.f32 0.0, %v1567
    %v1569 = vpop.f32.mrf.mxu0
    %1570 = vdwg.mxu0
    %1571 = vmatpush.bf16.msra.mxu0 0
    %1572 = vmatpush.bf16.msra.mxu0 0
    %1573 = vmatpush.bf16.msra.mxu0 0
    %1574 = vmatpush.bf16.msra.mxu0 0
    %1575 = vmatpush.bf16.msra.mxu0 0
    %1576 = vmatpush.bf16.msra.mxu0 0
    %1577 = vmatpush.bf16.msra.mxu0 %v1481
    %1578 = vmatpush.bf16.msra.mxu0 %v1424
    %1579 = vmatmul.bf16.gmra.mxu0 %v1430
    %v1580 = vpop.f32.mrf.mxu0
    %v1581 = vadd.f32 0.0, %v1580
    %v1582 = vpop.f32.mrf.mxu0
    %v1583 = vadd.f32 0.0, %v1582
    %1584 = vmatmul.bf16.gmra.mxu0 %v1433
    %v1585 = vpop.f32.mrf.mxu0
    %v1586 = vadd.f32 0.0, %v1585
    %v1587 = vpop.f32.mrf.mxu0
    %v1588 = vadd.f32 0.0, %v1587
    %1589 = vmatmul.bf16.gmra.mxu0 %v1436
    %v1590 = vpop.f32.mrf.mxu0
    %v1591 = vadd.f32 0.0, %v1590
    %v1592 = vpop.f32.mrf.mxu0
    %v1593 = vadd.f32 0.0, %v1592
    %1594 = vmatmul.bf16.gmra.mxu0 %v1439
    %v1595 = vpop.f32.mrf.mxu0
    %v1596 = vadd.f32 0.0, %v1595
    %v1597 = vpop.f32.mrf.mxu0
    %v1598 = vadd.f32 0.0, %v1597
    %1599 = vmatmul.bf16.gmra.mxu0 %v1442
    %v1600 = vpop.f32.mrf.mxu0
    %v1601 = vadd.f32 0.0, %v1600
    %v1602 = vpop.f32.mrf.mxu0
    %v1603 = vadd.f32 0.0, %v1602
    %1604 = vmatmul.bf16.gmra.mxu0 %v1445
    %v1605 = vpop.f32.mrf.mxu0
    %v1606 = vadd.f32 0.0, %v1605
    %v1607 = vpop.f32.mrf.mxu0
    %v1608 = vadd.f32 0.0, %v1607
    %1609 = vmatmul.bf16.gmra.mxu0 %v1448
    %v1610 = vpop.f32.mrf.mxu0
    %v1611 = vadd.f32 0.0, %v1610
    %v1612 = vpop.f32.mrf.mxu0
    %v1613 = vadd.f32 0.0, %v1612
    %1614 = vmatmul.bf16.gmra.mxu0 %v1451
    %v1615 = vpop.f32.mrf.mxu0
    %v1616 = vadd.f32 0.0, %v1615
    %v1617 = vpop.f32.mrf.mxu0
    %v1618 = vadd.f32 0.0, %v1617
    %1619 = vmatmul.bf16.gmra.mxu0 %v1454
    %v1620 = vpop.f32.mrf.mxu0
    %v1621 = vadd.f32 0.0, %v1620
    %v1622 = vpop.f32.mrf.mxu0
    %v1623 = vadd.f32 0.0, %v1622
    %1624 = vmatmul.bf16.gmra.mxu0 %v1457
    %v1625 = vpop.f32.mrf.mxu0
    %v1626 = vadd.f32 0.0, %v1625
    %v1627 = vpop.f32.mrf.mxu0
    %v1628 = vadd.f32 0.0, %v1627
    %1629 = vmatmul.bf16.gmra.mxu0 %v1460
    %v1630 = vpop.f32.mrf.mxu0
    %v1631 = vadd.f32 0.0, %v1630
    %v1632 = vpop.f32.mrf.mxu0
    %v1633 = vadd.f32 0.0, %v1632
    %1634 = vmatmul.bf16.gmra.mxu0 %v1463
    %v1635 = vpop.f32.mrf.mxu0
    %v1636 = vadd.f32 0.0, %v1635
    %v1637 = vpop.f32.mrf.mxu0
    %v1638 = vadd.f32 0.0, %v1637
    %1639 = vmatmul.bf16.gmra.mxu0 %v1466
    %v1640 = vpop.f32.mrf.mxu0
    %v1641 = vadd.f32 0.0, %v1640
    %v1642 = vpop.f32.mrf.mxu0
    %v1643 = vadd.f32 0.0, %v1642
    %1644 = vmatmul.bf16.gmra.mxu0 %v1469
    %v1645 = vpop.f32.mrf.mxu0
    %v1646 = vadd.f32 0.0, %v1645
    %v1647 = vpop.f32.mrf.mxu0
    %v1648 = vadd.f32 0.0, %v1647
    %1649 = vmatmul.bf16.gmra.mxu0 %v1472
    %v1650 = vpop.f32.mrf.mxu0
    %v1651 = vadd.f32 0.0, %v1650
    %v1652 = vpop.f32.mrf.mxu0
    %v1653 = vadd.f32 0.0, %v1652
    %1654 = vmatmul.bf16.gmra.mxu0 %v1475
    %v1655 = vpop.f32.mrf.mxu0
    %v1656 = vadd.f32 0.0, %v1655
    %v1657 = vpop.f32.mrf.mxu0
    %1658 = vdwg.mxu0
    %v1659 = vadd.f32 %v1297, %v1493
    %v1660 = vadd.f32 %v1298, %v1581
    %v1661 = vadd.f32 %v1299, %v1495
    %v1662 = vadd.f32 %v1300, %v1583
    %v1663 = vadd.f32 %v1301, %v1498
    %v1664 = vadd.f32 %v1302, %v1586
    %v1665 = vadd.f32 %v1303, %v1500
    %v1666 = vadd.f32 %v1304, %v1588
    %v1667 = vadd.f32 %v1305, %v1503
    %v1668 = vadd.f32 %v1306, %v1591
    %v1669 = vadd.f32 %v1307, %v1505
    %v1670 = vadd.f32 %v1308, %v1593
    %v1671 = vadd.f32 %v1309, %v1508
    %v1672 = vadd.f32 %v1310, %v1596
    %v1673 = vadd.f32 %v1311, %v1510
    %v1674 = vadd.f32 %v1312, %v1598
    %v1675 = vadd.f32 %v1313, %v1513
    %v1676 = vadd.f32 %v1314, %v1601
    %v1677 = vadd.f32 %v1315, %v1515
    %v1678 = vadd.f32 %v1316, %v1603
    %v1679 = vadd.f32 %v1317, %v1518
    %v1680 = vadd.f32 %v1318, %v1606
    %v1681 = vadd.f32 %v1319, %v1520
    %v1682 = vadd.f32 %v1320, %v1608
    %v1683 = vadd.f32 %v1321, %v1523
    %v1684 = vadd.f32 %v1322, %v1611
    %v1685 = vadd.f32 %v1323, %v1525
    %v1686 = vadd.f32 %v1324, %v1613
    %v1687 = vadd.f32 %v1325, %v1528
    %v1688 = vadd.f32 %v1326, %v1616
    %v1689 = vadd.f32 %v1327, %v1530
    %v1690 = vadd.f32 %v1328, %v1618
    %v1691 = vadd.f32 %v1329, %v1533
    %v1692 = vadd.f32 %v1330, %v1621
    %v1693 = vadd.f32 %v1331, %v1535
    %v1694 = vadd.f32 %v1332, %v1623
    %v1695 = vadd.f32 %v1333, %v1538
    %v1696 = vadd.f32 %v1334, %v1626
    %v1697 = vadd.f32 %v1335, %v1540
    %v1698 = vadd.f32 %v1336, %v1628
    %v1699 = vadd.f32 %v1337, %v1543
    %v1700 = vadd.f32 %v1338, %v1631
    %v1701 = vadd.f32 %v1339, %v1545
    %v1702 = vadd.f32 %v1340, %v1633
    %v1703 = vadd.f32 %v1341, %v1548
    %v1704 = vadd.f32 %v1342, %v1636
    %v1705 = vadd.f32 %v1343, %v1550
    %v1706 = vadd.f32 %v1344, %v1638
    %v1707 = vadd.f32 %v1345, %v1553
    %v1708 = vadd.f32 %v1346, %v1641
    %v1709 = vadd.f32 %v1347, %v1555
    %v1710 = vadd.f32 %v1348, %v1643
    %v1711 = vadd.f32 %v1349, %v1558
    %v1712 = vadd.f32 %v1350, %v1646
    %v1713 = vadd.f32 %v1351, %v1560
    %v1714 = vadd.f32 %v1352, %v1648
    %v1715 = vadd.f32 %v1353, %v1563
    %v1716 = vadd.f32 %v1354, %v1651
    %v1717 = vadd.f32 %v1355, %v1565
    %v1718 = vadd.f32 %v1356, %v1653
    %v1719 = vadd.f32 %v1357, %v1568
    %v1720 = vadd.f32 %v1358, %v1656
    %v1721 = vmax.f32 %v1659, %v1660
    %v1722 = vmax.f32 %v1661, %v1662
    %v1723 = vmax.f32 %v1663, %v1664
    %v1724 = vmax.f32 %v1665, %v1666
    %v1725 = vmax.f32 %v1667, %v1668
    %v1726 = vmax.f32 %v1669, %v1670
    %v1727 = vmax.f32 %v1671, %v1672
    %v1728 = vmax.f32 %v1673, %v1674
    %v1729 = vmax.f32 %v1675, %v1676
    %v1730 = vmax.f32 %v1677, %v1678
    %v1731 = vmax.f32 %v1679, %v1680
    %v1732 = vmax.f32 %v1681, %v1682
    %v1733 = vmax.f32 %v1683, %v1684
    %v1734 = vmax.f32 %v1685, %v1686
    %v1735 = vmax.f32 %v1687, %v1688
    %v1736 = vmax.f32 %v1689, %v1690
    %v1737 = vmax.f32 %v1691, %v1692
    %v1738 = vmax.f32 %v1693, %v1694
    %v1739 = vmax.f32 %v1695, %v1696
    %v1740 = vmax.f32 %v1697, %v1698
    %v1741 = vmax.f32 %v1699, %v1700
    %v1742 = vmax.f32 %v1701, %v1702
    %v1743 = vmax.f32 %v1703, %v1704
    %v1744 = vmax.f32 %v1705, %v1706
    %v1745 = vmax.f32 %v1707, %v1708
    %v1746 = vmax.f32 %v1709, %v1710
    %v1747 = vmax.f32 %v1711, %v1712
    %v1748 = vmax.f32 %v1713, %v1714
    %v1749 = vmax.f32 %v1715, %v1716
    %v1750 = vmax.f32 %v1717, %v1718
    %v1751 = vmax.f32 %v1719, %v1720
    %v1752 = vld [vmem:[%s2] sm:$0x1]
    %v1754 = vperm.slane %v1752, 0
    %v1756 = vadd.f32 %v1721, %v1754
    %v1757 = vadd.f32 %v1722, %v1754
    %v1758 = vadd.f32 %v1723, %v1754
    %v1759 = vadd.f32 %v1724, %v1754
    %v1760 = vadd.f32 %v1725, %v1754
    %v1761 = vadd.f32 %v1726, %v1754
    %v1762 = vadd.f32 %v1727, %v1754
    %v1763 = vadd.f32 %v1728, %v1754
    %v1764 = vadd.f32 %v1729, %v1754
    %v1765 = vadd.f32 %v1730, %v1754
    %v1766 = vadd.f32 %v1731, %v1754
    %v1767 = vadd.f32 %v1732, %v1754
    %v1768 = vadd.f32 %v1733, %v1754
    %v1769 = vadd.f32 %v1734, %v1754
    %v1770 = vadd.f32 %v1735, %v1754
    %v1771 = vadd.f32 %v1736, %v1754
    %v1772 = vadd.f32 %v1737, %v1754
    %v1773 = vadd.f32 %v1738, %v1754
    %v1774 = vadd.f32 %v1739, %v1754
    %v1775 = vadd.f32 %v1740, %v1754
    %v1776 = vadd.f32 %v1741, %v1754
    %v1777 = vadd.f32 %v1742, %v1754
    %v1778 = vadd.f32 %v1743, %v1754
    %v1779 = vadd.f32 %v1744, %v1754
    %v1780 = vadd.f32 %v1745, %v1754
    %v1781 = vadd.f32 %v1746, %v1754
    %v1782 = vadd.f32 %v1747, %v1754
    %v1783 = vadd.f32 %v1748, %v1754
    %v1784 = vadd.f32 %v1749, %v1754
    %v1785 = vadd.f32 %v1750, %v1754
    %v1786 = vadd.f32 %v1751, %v1754
    %1787 = vst [vmem:[#allocation2] sm:$0xff] %v1756
    %1788 = vst [vmem:[#allocation2 + $0x8] sm:$0xff] %v1757
    %1789 = vst [vmem:[#allocation2 + $0x10] sm:$0xff] %v1758
    %1790 = vst [vmem:[#allocation2 + $0x18] sm:$0xff] %v1759
    %1791 = vst [vmem:[#allocation2 + $0x20] sm:$0xff] %v1760
    %1792 = vst [vmem:[#allocation2 + $0x28] sm:$0xff] %v1761
    %1793 = vst [vmem:[#allocation2 + $0x30] sm:$0xff] %v1762
    %1794 = vst [vmem:[#allocation2 + $0x38] sm:$0xff] %v1763
    %1795 = vst [vmem:[#allocation2 + $0x40] sm:$0xff] %v1764
    %1796 = vst [vmem:[#allocation2 + $0x48] sm:$0xff] %v1765
    %1797 = vst [vmem:[#allocation2 + $0x50] sm:$0xff] %v1766
    %1798 = vst [vmem:[#allocation2 + $0x58] sm:$0xff] %v1767
    %1799 = vst [vmem:[#allocation2 + $0x60] sm:$0xff] %v1768
    %1800 = vst [vmem:[#allocation2 + $0x68] sm:$0xff] %v1769
    %1801 = vst [vmem:[#allocation2 + $0x70] sm:$0xff] %v1770
    %1802 = vst [vmem:[#allocation2 + $0x78] sm:$0xff] %v1771
    %1803 = vst [vmem:[#allocation2 + $0x80] sm:$0xff] %v1772
    %1804 = vst [vmem:[#allocation2 + $0x88] sm:$0xff] %v1773
    %1805 = vst [vmem:[#allocation2 + $0x90] sm:$0xff] %v1774
    %1806 = vst [vmem:[#allocation2 + $0x98] sm:$0xff] %v1775
    %1807 = vst [vmem:[#allocation2 + $0xa0] sm:$0xff] %v1776
    %1808 = vst [vmem:[#allocation2 + $0xa8] sm:$0xff] %v1777
    %1809 = vst [vmem:[#allocation2 + $0xb0] sm:$0xff] %v1778
    %1810 = vst [vmem:[#allocation2 + $0xb8] sm:$0xff] %v1779
    %1811 = vst [vmem:[#allocation2 + $0xc0] sm:$0xff] %v1780
    %1812 = vst [vmem:[#allocation2 + $0xc8] sm:$0xff] %v1781
    %1813 = vst [vmem:[#allocation2 + $0xd0] sm:$0xff] %v1782
    %1814 = vst [vmem:[#allocation2 + $0xd8] sm:$0xff] %v1783
    %1815 = vst [vmem:[#allocation2 + $0xe0] sm:$0xff] %v1784
    %1816 = vst [vmem:[#allocation2 + $0xe8] sm:$0xff] %v1785
    %1817 = vst [vmem:[#allocation2 + $0xf0] sm:$0xff] %v1786
    %1818 = vst [vmem:[#allocation2 + $0xf8] sm:$0xff] 0.0
    %v1819 = vld [vmem:[#allocation2] ss:$2 sm:$0xff]
    %s1820 = scalar_lea.vmem [#allocation2], 16
    %v1821 = vld [vmem:[%s1820] ss:$2 sm:$0xff]
    %s1822 = scalar_lea.vmem [#allocation2], 32
    %v1823 = vld [vmem:[%s1822] ss:$2 sm:$0xff]
    %s1824 = scalar_lea.vmem [#allocation2], 48
    %v1825 = vld [vmem:[%s1824] ss:$2 sm:$0xff]
    %s1826 = scalar_lea.vmem [#allocation2], 64
    %v1827 = vld [vmem:[%s1826] ss:$2 sm:$0xff]
    %s1828 = scalar_lea.vmem [#allocation2], 80
    %v1829 = vld [vmem:[%s1828] ss:$2 sm:$0xff]
    %s1830 = scalar_lea.vmem [#allocation2], 96
    %v1831 = vld [vmem:[%s1830] ss:$2 sm:$0xff]
    %s1832 = scalar_lea.vmem [#allocation2], 112
    %v1833 = vld [vmem:[%s1832] ss:$2 sm:$0xff]
    %s1834 = scalar_lea.vmem [#allocation2], 128
    %v1835 = vld [vmem:[%s1834] ss:$2 sm:$0xff]
    %s1836 = scalar_lea.vmem [#allocation2], 144
    %v1837 = vld [vmem:[%s1836] ss:$2 sm:$0xff]
    %s1838 = scalar_lea.vmem [#allocation2], 160
    %v1839 = vld [vmem:[%s1838] ss:$2 sm:$0xff]
    %s1840 = scalar_lea.vmem [#allocation2], 176
    %v1841 = vld [vmem:[%s1840] ss:$2 sm:$0xff]
    %s1842 = scalar_lea.vmem [#allocation2], 192
    %v1843 = vld [vmem:[%s1842] ss:$2 sm:$0xff]
    %s1844 = scalar_lea.vmem [#allocation2], 208
    %v1845 = vld [vmem:[%s1844] ss:$2 sm:$0xff]
    %s1846 = scalar_lea.vmem [#allocation2], 224
    %v1847 = vld [vmem:[%s1846] ss:$2 sm:$0xff]
    %s1848 = scalar_lea.vmem [#allocation2], 240
    %v1849 = vld [vmem:[%s1848] ss:$2 sm:$0xff]
    %s1850 = scalar_lea.vmem [#allocation2], 1
    %v1851 = vld [vmem:[%s1850] ss:$2 sm:$0xff]
    %s1852 = scalar_lea.vmem [#allocation2], 17
    %v1853 = vld [vmem:[%s1852] ss:$2 sm:$0xff]
    %s1854 = scalar_lea.vmem [#allocation2], 33
    %v1855 = vld [vmem:[%s1854] ss:$2 sm:$0xff]
    %s1856 = scalar_lea.vmem [#allocation2], 49
    %v1857 = vld [vmem:[%s1856] ss:$2 sm:$0xff]
    %s1858 = scalar_lea.vmem [#allocation2], 65
    %v1859 = vld [vmem:[%s1858] ss:$2 sm:$0xff]
    %s1860 = scalar_lea.vmem [#allocation2], 81
    %v1861 = vld [vmem:[%s1860] ss:$2 sm:$0xff]
    %s1862 = scalar_lea.vmem [#allocation2], 97
    %v1863 = vld [vmem:[%s1862] ss:$2 sm:$0xff]
    %s1864 = scalar_lea.vmem [#allocation2], 113
    %v1865 = vld [vmem:[%s1864] ss:$2 sm:$0xff]
    %s1866 = scalar_lea.vmem [#allocation2], 129
    %v1867 = vld [vmem:[%s1866] ss:$2 sm:$0xff]
    %s1868 = scalar_lea.vmem [#allocation2], 145
    %v1869 = vld [vmem:[%s1868] ss:$2 sm:$0xff]
    %s1870 = scalar_lea.vmem [#allocation2], 161
    %v1871 = vld [vmem:[%s1870] ss:$2 sm:$0xff]
    %s1872 = scalar_lea.vmem [#allocation2], 177
    %v1873 = vld [vmem:[%s1872] ss:$2 sm:$0xff]
    %s1874 = scalar_lea.vmem [#allocation2], 193
    %v1875 = vld [vmem:[%s1874] ss:$2 sm:$0xff]
    %s1876 = scalar_lea.vmem [#allocation2], 209
    %v1877 = vld [vmem:[%s1876] ss:$2 sm:$0xff]
    %s1878 = scalar_lea.vmem [#allocation2], 225
    %v1879 = vld [vmem:[%s1878] ss:$2 sm:$0xff]
    %s1880 = scalar_lea.vmem [#allocation2], 241
    %v1881 = vld [vmem:[%s1880] ss:$2 sm:$0xff]
    %v1882 = vmax.f32 %v1819, %v1851
    %v1883 = vmax.f32 %v1821, %v1853
    %v1884 = vmax.f32 %v1823, %v1855
    %v1885 = vmax.f32 %v1825, %v1857
    %v1886 = vmax.f32 %v1827, %v1859
    %v1887 = vmax.f32 %v1829, %v1861
    %v1888 = vmax.f32 %v1831, %v1863
    %v1889 = vmax.f32 %v1833, %v1865
    %v1890 = vmax.f32 %v1835, %v1867
    %v1891 = vmax.f32 %v1837, %v1869
    %v1892 = vmax.f32 %v1839, %v1871
    %v1893 = vmax.f32 %v1841, %v1873
    %v1894 = vmax.f32 %v1843, %v1875
    %v1895 = vmax.f32 %v1845, %v1877
    %v1896 = vmax.f32 %v1847, %v1879
    %v1897 = vmax.f32 %v1849, %v1881
    %v1898 = vmax.f32 %v1882, 0.0
    %v1899 = vmax.f32 %v1883, 0.0
    %v1900 = vmax.f32 %v1884, 0.0
    %v1901 = vmax.f32 %v1885, 0.0
    %v1902 = vmax.f32 %v1886, 0.0
    %v1903 = vmax.f32 %v1887, 0.0
    %v1904 = vmax.f32 %v1888, 0.0
    %v1905 = vmax.f32 %v1889, 0.0
    %v1906 = vmax.f32 %v1890, 0.0
    %v1907 = vmax.f32 %v1891, 0.0
    %v1908 = vmax.f32 %v1892, 0.0
    %v1909 = vmax.f32 %v1893, 0.0
    %v1910 = vmax.f32 %v1894, 0.0
    %v1911 = vmax.f32 %v1895, 0.0
    %v1912 = vmax.f32 %v1896, 0.0
    %v1913 = vmax.f32 %v1897, 0.0
    %1914 = vst [vmem:[#allocation3] sm:$0xff] %v1898
    %1915 = vst [vmem:[#allocation3 + $0x8] sm:$0xff] %v1899
    %1916 = vst [vmem:[#allocation3 + $0x10] sm:$0xff] %v1900
    %1917 = vst [vmem:[#allocation3 + $0x18] sm:$0xff] %v1901
    %1918 = vst [vmem:[#allocation3 + $0x20] sm:$0xff] %v1902
    %1919 = vst [vmem:[#allocation3 + $0x28] sm:$0xff] %v1903
    %1920 = vst [vmem:[#allocation3 + $0x30] sm:$0xff] %v1904
    %1921 = vst [vmem:[#allocation3 + $0x38] sm:$0xff] %v1905
    %1922 = vst [vmem:[#allocation3 + $0x40] sm:$0xff] %v1906
    %1923 = vst [vmem:[#allocation3 + $0x48] sm:$0xff] %v1907
    %1924 = vst [vmem:[#allocation3 + $0x50] sm:$0xff] %v1908
    %1925 = vst [vmem:[#allocation3 + $0x58] sm:$0xff] %v1909
    %1926 = vst [vmem:[#allocation3 + $0x60] sm:$0xff] %v1910
    %1927 = vst [vmem:[#allocation3 + $0x68] sm:$0xff] %v1911
    %1928 = vst [vmem:[#allocation3 + $0x70] sm:$0xff] %v1912
    %1929 = vst [vmem:[#allocation3 + $0x78] sm:$0xff] %v1913
    %v1930 = vld [vmem:[#allocation3] sm:$0xff]
    %v1931 = vld [vmem:[#allocation3 + $0x8] sm:$0xff]
    %v1932 = vld [vmem:[#allocation3 + $0x10] sm:$0xff]
    %v1933 = vld [vmem:[#allocation3 + $0x18] sm:$0xff]
    %v1934 = vld [vmem:[#allocation3 + $0x20] sm:$0xff]
    %v1935 = vld [vmem:[#allocation3 + $0x28] sm:$0xff]
    %v1936 = vld [vmem:[#allocation3 + $0x30] sm:$0xff]
    %v1937 = vld [vmem:[#allocation3 + $0x38] sm:$0xff]
    %v1938 = vld [vmem:[#allocation3 + $0x40] sm:$0xff]
    %v1939 = vld [vmem:[#allocation3 + $0x48] sm:$0xff]
    %v1940 = vld [vmem:[#allocation3 + $0x50] sm:$0xff]
    %v1941 = vld [vmem:[#allocation3 + $0x58] sm:$0xff]
    %v1942 = vld [vmem:[#allocation3 + $0x60] sm:$0xff]
    %v1943 = vld [vmem:[#allocation3 + $0x68] sm:$0xff]
    %v1944 = vld [vmem:[#allocation3 + $0x70] sm:$0xff]
    %v1945 = vpack.c.bf16 %v1931, %v1930
    %v1946 = vpack.c.bf16 %v1933, %v1932
    %v1947 = vpack.c.bf16 %v1935, %v1934
    %v1948 = vpack.c.bf16 %v1937, %v1936
    %v1949 = vpack.c.bf16 %v1939, %v1938
    %v1950 = vpack.c.bf16 %v1941, %v1940
    %v1951 = vpack.c.bf16 %v1943, %v1942
    %v1952 = vpack.c.bf16 %v1944, %v1944
    %v1953 = vld [vmem:[%s3] sm:$0xff]
    %v1954 = vld [vmem:[%s3 + $0x8] sm:$0xff]
    %v1955 = vld [vmem:[%s3 + $0x10] sm:$0xff]
    %v1956 = vld [vmem:[%s3 + $0x18] sm:$0xff]
    %v1957 = vld [vmem:[%s3 + $0x20] sm:$0xff]
    %v1958 = vld [vmem:[%s3 + $0x28] sm:$0xff]
    %v1959 = vld [vmem:[%s3 + $0x30] sm:$0xff]
    %v1960 = vld [vmem:[%s3 + $0x38] sm:$0xff]
    %v1961 = vld [vmem:[%s3 + $0x40] sm:$0xff]
    %v1962 = vld [vmem:[%s3 + $0x48] sm:$0xff]
    %v1963 = vld [vmem:[%s3 + $0x50] sm:$0xff]
    %v1964 = vld [vmem:[%s3 + $0x58] sm:$0xff]
    %v1965 = vld [vmem:[%s3 + $0x60] sm:$0xff]
    %v1966 = vld [vmem:[%s3 + $0x68] sm:$0xff]
    %v1967 = vld [vmem:[%s3 + $0x70] sm:$0xff]
    %v1968 = vld [vmem:[%s3 + $0x78] sm:$0xff]
    %v1969 = vld [vmem:[#allocation3 + $0x1] sm:$0xff]
    %v1970 = vld [vmem:[#allocation3 + $0x9] sm:$0xff]
    %v1971 = vld [vmem:[#allocation3 + $0x11] sm:$0xff]
    %v1972 = vld [vmem:[#allocation3 + $0x19] sm:$0xff]
    %v1973 = vld [vmem:[#allocation3 + $0x21] sm:$0xff]
    %v1974 = vld [vmem:[#allocation3 + $0x29] sm:$0xff]
    %v1975 = vld [vmem:[#allocation3 + $0x31] sm:$0xff]
    %v1976 = vld [vmem:[#allocation3 + $0x39] sm:$0xff]
    %v1977 = vld [vmem:[#allocation3 + $0x41] sm:$0xff]
    %v1978 = vld [vmem:[#allocation3 + $0x49] sm:$0xff]
    %v1979 = vld [vmem:[#allocation3 + $0x51] sm:$0xff]
    %v1980 = vld [vmem:[#allocation3 + $0x59] sm:$0xff]
    %v1981 = vld [vmem:[#allocation3 + $0x61] sm:$0xff]
    %v1982 = vld [vmem:[#allocation3 + $0x69] sm:$0xff]
    %v1983 = vld [vmem:[#allocation3 + $0x71] sm:$0xff]
    %v1984 = vpack.c.bf16 %v1970, %v1969
    %v1985 = vpack.c.bf16 %v1972, %v1971
    %v1986 = vpack.c.bf16 %v1974, %v1973
    %v1987 = vpack.c.bf16 %v1976, %v1975
    %v1988 = vpack.c.bf16 %v1978, %v1977
    %v1989 = vpack.c.bf16 %v1980, %v1979
    %v1990 = vpack.c.bf16 %v1982, %v1981
    %v1991 = vpack.c.bf16 %v1983, %v1983
    %s1992 = scalar_lea.vmem %s3, 128
    %v1993 = vld [vmem:[%s1992] sm:$0xff]
    %v1994 = vld [vmem:[%s1992 + $0x8] sm:$0xff]
    %v1995 = vld [vmem:[%s1992 + $0x10] sm:$0xff]
    %v1996 = vld [vmem:[%s1992 + $0x18] sm:$0xff]
    %v1997 = vld [vmem:[%s1992 + $0x20] sm:$0xff]
    %v1998 = vld [vmem:[%s1992 + $0x28] sm:$0xff]
    %v1999 = vld [vmem:[%s1992 + $0x30] sm:$0xff]
    %v2000 = vld [vmem:[%s1992 + $0x38] sm:$0xff]
    %v2001 = vld [vmem:[%s1992 + $0x40] sm:$0xff]
    %v2002 = vld [vmem:[%s1992 + $0x48] sm:$0xff]
    %v2003 = vld [vmem:[%s1992 + $0x50] sm:$0xff]
    %v2004 = vld [vmem:[%s1992 + $0x58] sm:$0xff]
    %v2005 = vld [vmem:[%s1992 + $0x60] sm:$0xff]
    %v2006 = vld [vmem:[%s1992 + $0x68] sm:$0xff]
    %v2007 = vld [vmem:[%s1992 + $0x70] sm:$0xff]
    %v2008 = vld [vmem:[%s1992 + $0x78] sm:$0xff]
    %v2025 = vunpack.c.l.b16 %v1993
    %v2026 = vunpack.c.h.b16 %v1993
    %v2027 = vunpack.c.l.b16 %v1994
    %v2028 = vunpack.c.h.b16 %v1994
    %v2029 = vunpack.c.l.b16 %v1995
    %v2030 = vunpack.c.h.b16 %v1995
    %v2031 = vunpack.c.l.b16 %v1996
    %v2032 = vunpack.c.h.b16 %v1996
    %v2033 = vunpack.c.l.b16 %v1997
    %v2034 = vunpack.c.h.b16 %v1997
    %v2035 = vunpack.c.l.b16 %v1998
    %v2036 = vunpack.c.h.b16 %v1998
    %v2037 = vunpack.c.l.b16 %v1999
    %v2038 = vunpack.c.h.b16 %v1999
    %v2039 = vunpack.c.l.b16 %v2000
    %v2040 = vunpack.c.h.b16 %v2000
    %v2041 = vunpack.c.l.b16 %v2001
    %v2042 = vunpack.c.h.b16 %v2001
    %v2043 = vunpack.c.l.b16 %v2002
    %v2044 = vunpack.c.h.b16 %v2002
    %v2045 = vunpack.c.l.b16 %v2003
    %v2046 = vunpack.c.h.b16 %v2003
    %v2047 = vunpack.c.l.b16 %v2004
    %v2048 = vunpack.c.h.b16 %v2004
    %v2049 = vunpack.c.l.b16 %v2005
    %v2050 = vunpack.c.h.b16 %v2005
    %v2051 = vunpack.c.l.b16 %v2006
    %v2052 = vunpack.c.h.b16 %v2006
    %v2053 = vunpack.c.l.b16 %v2007
    %v2054 = vunpack.c.h.b16 %v2007
    %v2055 = vunpack.c.l.b16 %v2008
    %v2056 = vunpack.c.h.b16 %v2008
    %v2057 = vpack.c.b16 %v2027, %v2025
    %v2058 = vpack.c.b16 %v2028, %v2026
    %v2059 = vpack.c.b16 %v2031, %v2029
    %v2060 = vpack.c.b16 %v2032, %v2030
    %v2061 = vpack.c.b16 %v2035, %v2033
    %v2062 = vpack.c.b16 %v2036, %v2034
    %v2063 = vpack.c.b16 %v2039, %v2037
    %v2064 = vpack.c.b16 %v2040, %v2038
    %v2065 = vpack.c.b16 %v2043, %v2041
    %v2066 = vpack.c.b16 %v2044, %v2042
    %v2067 = vpack.c.b16 %v2047, %v2045
    %v2068 = vpack.c.b16 %v2048, %v2046
    %v2069 = vpack.c.b16 %v2051, %v2049
    %v2070 = vpack.c.b16 %v2052, %v2050
    %v2071 = vpack.c.b16 %v2055, %v2053
    %v2072 = vpack.c.b16 %v2056, %v2054
    %2089 = vmatpush.bf16.msra.mxu0 %v2071
    %2090 = vmatpush.bf16.msra.mxu0 %v2069
    %2091 = vmatpush.bf16.msra.mxu0 %v2067
    %2092 = vmatpush.bf16.msra.mxu0 %v2065
    %2093 = vmatpush.bf16.msra.mxu0 %v2063
    %2094 = vmatpush.bf16.msra.mxu0 %v2061
    %2095 = vmatpush.bf16.msra.mxu0 %v2059
    %2096 = vmatpush.bf16.msra.mxu0 %v2057
    %2097 = vmatmul.bf16.gmra.mxu0 %v1984
    %v2098 = vpop.f32.mrf.mxu0
    %v2099 = vadd.f32 0.0, %v2098
    %v2100 = vpop.f32.mrf.mxu0
    %v2101 = vadd.f32 0.0, %v2100
    %2102 = vmatmul.bf16.gmra.mxu0 %v1985
    %v2103 = vpop.f32.mrf.mxu0
    %v2104 = vadd.f32 0.0, %v2103
    %v2105 = vpop.f32.mrf.mxu0
    %v2106 = vadd.f32 0.0, %v2105
    %2107 = vmatmul.bf16.gmra.mxu0 %v1986
    %v2108 = vpop.f32.mrf.mxu0
    %v2109 = vadd.f32 0.0, %v2108
    %v2110 = vpop.f32.mrf.mxu0
    %v2111 = vadd.f32 0.0, %v2110
    %2112 = vmatmul.bf16.gmra.mxu0 %v1987
    %v2113 = vpop.f32.mrf.mxu0
    %v2114 = vadd.f32 0.0, %v2113
    %v2115 = vpop.f32.mrf.mxu0
    %v2116 = vadd.f32 0.0, %v2115
    %2117 = vmatmul.bf16.gmra.mxu0 %v1988
    %v2118 = vpop.f32.mrf.mxu0
    %v2119 = vadd.f32 0.0, %v2118
    %v2120 = vpop.f32.mrf.mxu0
    %v2121 = vadd.f32 0.0, %v2120
    %2122 = vmatmul.bf16.gmra.mxu0 %v1989
    %v2123 = vpop.f32.mrf.mxu0
    %v2124 = vadd.f32 0.0, %v2123
    %v2125 = vpop.f32.mrf.mxu0
    %v2126 = vadd.f32 0.0, %v2125
    %2127 = vmatmul.bf16.gmra.mxu0 %v1990
    %v2128 = vpop.f32.mrf.mxu0
    %v2129 = vadd.f32 0.0, %v2128
    %v2130 = vpop.f32.mrf.mxu0
    %v2131 = vadd.f32 0.0, %v2130
    %2132 = vmatmul.bf16.gmra.mxu0 %v1991
    %v2133 = vpop.f32.mrf.mxu0
    %v2134 = vadd.f32 0.0, %v2133
    %v2135 = vpop.f32.mrf.mxu0
    %2136 = vdwg.mxu0
    %2137 = vmatpush.bf16.msra.mxu0 %v2072
    %2138 = vmatpush.bf16.msra.mxu0 %v2070
    %2139 = vmatpush.bf16.msra.mxu0 %v2068
    %2140 = vmatpush.bf16.msra.mxu0 %v2066
    %2141 = vmatpush.bf16.msra.mxu0 %v2064
    %2142 = vmatpush.bf16.msra.mxu0 %v2062
    %2143 = vmatpush.bf16.msra.mxu0 %v2060
    %2144 = vmatpush.bf16.msra.mxu0 %v2058
    %2145 = vmatmul.bf16.gmra.mxu0 %v1984
    %v2146 = vpop.f32.mrf.mxu0
    %v2147 = vadd.f32 0.0, %v2146
    %v2148 = vpop.f32.mrf.mxu0
    %v2149 = vadd.f32 0.0, %v2148
    %2150 = vmatmul.bf16.gmra.mxu0 %v1985
    %v2151 = vpop.f32.mrf.mxu0
    %v2152 = vadd.f32 0.0, %v2151
    %v2153 = vpop.f32.mrf.mxu0
    %v2154 = vadd.f32 0.0, %v2153
    %2155 = vmatmul.bf16.gmra.mxu0 %v1986
    %v2156 = vpop.f32.mrf.mxu0
    %v2157 = vadd.f32 0.0, %v2156
    %v2158 = vpop.f32.mrf.mxu0
    %v2159 = vadd.f32 0.0, %v2158
    %2160 = vmatmul.bf16.gmra.mxu0 %v1987
    %v2161 = vpop.f32.mrf.mxu0
    %v2162 = vadd.f32 0.0, %v2161
    %v2163 = vpop.f32.mrf.mxu0
    %v2164 = vadd.f32 0.0, %v2163
    %2165 = vmatmul.bf16.gmra.mxu0 %v1988
    %v2166 = vpop.f32.mrf.mxu0
    %v2167 = vadd.f32 0.0, %v2166
    %v2168 = vpop.f32.mrf.mxu0
    %v2169 = vadd.f32 0.0, %v2168
    %2170 = vmatmul.bf16.gmra.mxu0 %v1989
    %v2171 = vpop.f32.mrf.mxu0
    %v2172 = vadd.f32 0.0, %v2171
    %v2173 = vpop.f32.mrf.mxu0
    %v2174 = vadd.f32 0.0, %v2173
    %2175 = vmatmul.bf16.gmra.mxu0 %v1990
    %v2176 = vpop.f32.mrf.mxu0
    %v2177 = vadd.f32 0.0, %v2176
    %v2178 = vpop.f32.mrf.mxu0
    %v2179 = vadd.f32 0.0, %v2178
    %2180 = vmatmul.bf16.gmra.mxu0 %v1991
    %v2181 = vpop.f32.mrf.mxu0
    %v2182 = vadd.f32 0.0, %v2181
    %v2183 = vpop.f32.mrf.mxu0
    %2184 = vdwg.mxu0
    %v2201 = vunpack.c.l.b16 %v1953
    %v2202 = vunpack.c.h.b16 %v1953
    %v2203 = vunpack.c.l.b16 %v1954
    %v2204 = vunpack.c.h.b16 %v1954
    %v2205 = vunpack.c.l.b16 %v1955
    %v2206 = vunpack.c.h.b16 %v1955
    %v2207 = vunpack.c.l.b16 %v1956
    %v2208 = vunpack.c.h.b16 %v1956
    %v2209 = vunpack.c.l.b16 %v1957
    %v2210 = vunpack.c.h.b16 %v1957
    %v2211 = vunpack.c.l.b16 %v1958
    %v2212 = vunpack.c.h.b16 %v1958
    %v2213 = vunpack.c.l.b16 %v1959
    %v2214 = vunpack.c.h.b16 %v1959
    %v2215 = vunpack.c.l.b16 %v1960
    %v2216 = vunpack.c.h.b16 %v1960
    %v2217 = vunpack.c.l.b16 %v1961
    %v2218 = vunpack.c.h.b16 %v1961
    %v2219 = vunpack.c.l.b16 %v1962
    %v2220 = vunpack.c.h.b16 %v1962
    %v2221 = vunpack.c.l.b16 %v1963
    %v2222 = vunpack.c.h.b16 %v1963
    %v2223 = vunpack.c.l.b16 %v1964
    %v2224 = vunpack.c.h.b16 %v1964
    %v2225 = vunpack.c.l.b16 %v1965
    %v2226 = vunpack.c.h.b16 %v1965
    %v2227 = vunpack.c.l.b16 %v1966
    %v2228 = vunpack.c.h.b16 %v1966
    %v2229 = vunpack.c.l.b16 %v1967
    %v2230 = vunpack.c.h.b16 %v1967
    %v2231 = vunpack.c.l.b16 %v1968
    %v2232 = vunpack.c.h.b16 %v1968
    %v2233 = vpack.c.b16 %v2203, %v2201
    %v2234 = vpack.c.b16 %v2204, %v2202
    %v2235 = vpack.c.b16 %v2207, %v2205
    %v2236 = vpack.c.b16 %v2208, %v2206
    %v2237 = vpack.c.b16 %v2211, %v2209
    %v2238 = vpack.c.b16 %v2212, %v2210
    %v2239 = vpack.c.b16 %v2215, %v2213
    %v2240 = vpack.c.b16 %v2216, %v2214
    %v2241 = vpack.c.b16 %v2219, %v2217
    %v2242 = vpack.c.b16 %v2220, %v2218
    %v2243 = vpack.c.b16 %v2223, %v2221
    %v2244 = vpack.c.b16 %v2224, %v2222
    %v2245 = vpack.c.b16 %v2227, %v2225
    %v2246 = vpack.c.b16 %v2228, %v2226
    %v2247 = vpack.c.b16 %v2231, %v2229
    %v2248 = vpack.c.b16 %v2232, %v2230
    %2265 = vmatpush.bf16.msra.mxu0 %v2247
    %2266 = vmatpush.bf16.msra.mxu0 %v2245
    %2267 = vmatpush.bf16.msra.mxu0 %v2243
    %2268 = vmatpush.bf16.msra.mxu0 %v2241
    %2269 = vmatpush.bf16.msra.mxu0 %v2239
    %2270 = vmatpush.bf16.msra.mxu0 %v2237
    %2271 = vmatpush.bf16.msra.mxu0 %v2235
    %2272 = vmatpush.bf16.msra.mxu0 %v2233
    %2273 = vmatmul.bf16.gmra.mxu0 %v1945
    %v2274 = vpop.f32.mrf.mxu0
    %v2275 = vadd.f32 %v2099, %v2274
    %v2276 = vpop.f32.mrf.mxu0
    %v2277 = vadd.f32 %v2101, %v2276
    %2278 = vmatmul.bf16.gmra.mxu0 %v1946
    %v2279 = vpop.f32.mrf.mxu0
    %v2280 = vadd.f32 %v2104, %v2279
    %v2281 = vpop.f32.mrf.mxu0
    %v2282 = vadd.f32 %v2106, %v2281
    %2283 = vmatmul.bf16.gmra.mxu0 %v1947
    %v2284 = vpop.f32.mrf.mxu0
    %v2285 = vadd.f32 %v2109, %v2284
    %v2286 = vpop.f32.mrf.mxu0
    %v2287 = vadd.f32 %v2111, %v2286
    %2288 = vmatmul.bf16.gmra.mxu0 %v1948
    %v2289 = vpop.f32.mrf.mxu0
    %v2290 = vadd.f32 %v2114, %v2289
    %v2291 = vpop.f32.mrf.mxu0
    %v2292 = vadd.f32 %v2116, %v2291
    %2293 = vmatmul.bf16.gmra.mxu0 %v1949
    %v2294 = vpop.f32.mrf.mxu0
    %v2295 = vadd.f32 %v2119, %v2294
    %v2296 = vpop.f32.mrf.mxu0
    %v2297 = vadd.f32 %v2121, %v2296
    %2298 = vmatmul.bf16.gmra.mxu0 %v1950
    %v2299 = vpop.f32.mrf.mxu0
    %v2300 = vadd.f32 %v2124, %v2299
    %v2301 = vpop.f32.mrf.mxu0
    %v2302 = vadd.f32 %v2126, %v2301
    %2303 = vmatmul.bf16.gmra.mxu0 %v1951
    %v2304 = vpop.f32.mrf.mxu0
    %v2305 = vadd.f32 %v2129, %v2304
    %v2306 = vpop.f32.mrf.mxu0
    %v2307 = vadd.f32 %v2131, %v2306
    %2308 = vmatmul.bf16.gmra.mxu0 %v1952
    %v2309 = vpop.f32.mrf.mxu0
    %v2310 = vadd.f32 %v2134, %v2309
    %v2311 = vpop.f32.mrf.mxu0
    %2312 = vdwg.mxu0
    %2313 = vmatpush.bf16.msra.mxu0 %v2248
    %2314 = vmatpush.bf16.msra.mxu0 %v2246
    %2315 = vmatpush.bf16.msra.mxu0 %v2244
    %2316 = vmatpush.bf16.msra.mxu0 %v2242
    %2317 = vmatpush.bf16.msra.mxu0 %v2240
    %2318 = vmatpush.bf16.msra.mxu0 %v2238
    %2319 = vmatpush.bf16.msra.mxu0 %v2236
    %2320 = vmatpush.bf16.msra.mxu0 %v2234
    %2321 = vmatmul.bf16.gmra.mxu0 %v1945
    %v2322 = vpop.f32.mrf.mxu0
    %v2323 = vadd.f32 %v2147, %v2322
    %v2324 = vpop.f32.mrf.mxu0
    %v2325 = vadd.f32 %v2149, %v2324
    %2326 = vmatmul.bf16.gmra.mxu0 %v1946
    %v2327 = vpop.f32.mrf.mxu0
    %v2328 = vadd.f32 %v2152, %v2327
    %v2329 = vpop.f32.mrf.mxu0
    %v2330 = vadd.f32 %v2154, %v2329
    %2331 = vmatmul.bf16.gmra.mxu0 %v1947
    %v2332 = vpop.f32.mrf.mxu0
    %v2333 = vadd.f32 %v2157, %v2332
    %v2334 = vpop.f32.mrf.mxu0
    %v2335 = vadd.f32 %v2159, %v2334
    %2336 = vmatmul.bf16.gmra.mxu0 %v1948
    %v2337 = vpop.f32.mrf.mxu0
    %v2338 = vadd.f32 %v2162, %v2337
    %v2339 = vpop.f32.mrf.mxu0
    %v2340 = vadd.f32 %v2164, %v2339
    %2341 = vmatmul.bf16.gmra.mxu0 %v1949
    %v2342 = vpop.f32.mrf.mxu0
    %v2343 = vadd.f32 %v2167, %v2342
    %v2344 = vpop.f32.mrf.mxu0
    %v2345 = vadd.f32 %v2169, %v2344
    %2346 = vmatmul.bf16.gmra.mxu0 %v1950
    %v2347 = vpop.f32.mrf.mxu0
    %v2348 = vadd.f32 %v2172, %v2347
    %v2349 = vpop.f32.mrf.mxu0
    %v2350 = vadd.f32 %v2174, %v2349
    %2351 = vmatmul.bf16.gmra.mxu0 %v1951
    %v2352 = vpop.f32.mrf.mxu0
    %v2353 = vadd.f32 %v2177, %v2352
    %v2354 = vpop.f32.mrf.mxu0
    %v2355 = vadd.f32 %v2179, %v2354
    %2356 = vmatmul.bf16.gmra.mxu0 %v1952
    %v2357 = vpop.f32.mrf.mxu0
    %v2358 = vadd.f32 %v2182, %v2357
    %v2359 = vpop.f32.mrf.mxu0
    %2360 = vdwg.mxu0
    %v2361 = vld [vmem:[#allocation3 + $0x2] sm:$0xff]
    %v2362 = vld [vmem:[#allocation3 + $0xa] sm:$0xff]
    %v2363 = vld [vmem:[#allocation3 + $0x12] sm:$0xff]
    %v2364 = vld [vmem:[#allocation3 + $0x1a] sm:$0xff]
    %v2365 = vld [vmem:[#allocation3 + $0x22] sm:$0xff]
    %v2366 = vld [vmem:[#allocation3 + $0x2a] sm:$0xff]
    %v2367 = vld [vmem:[#allocation3 + $0x32] sm:$0xff]
    %v2368 = vld [vmem:[#allocation3 + $0x3a] sm:$0xff]
    %v2369 = vld [vmem:[#allocation3 + $0x42] sm:$0xff]
    %v2370 = vld [vmem:[#allocation3 + $0x4a] sm:$0xff]
    %v2371 = vld [vmem:[#allocation3 + $0x52] sm:$0xff]
    %v2372 = vld [vmem:[#allocation3 + $0x5a] sm:$0xff]
    %v2373 = vld [vmem:[#allocation3 + $0x62] sm:$0xff]
    %v2374 = vld [vmem:[#allocation3 + $0x6a] sm:$0xff]
    %v2375 = vld [vmem:[#allocation3 + $0x72] sm:$0xff]
    %v2376 = vpack.c.bf16 %v2362, %v2361
    %v2377 = vpack.c.bf16 %v2364, %v2363
    %v2378 = vpack.c.bf16 %v2366, %v2365
    %v2379 = vpack.c.bf16 %v2368, %v2367
    %v2380 = vpack.c.bf16 %v2370, %v2369
    %v2381 = vpack.c.bf16 %v2372, %v2371
    %v2382 = vpack.c.bf16 %v2374, %v2373
    %v2383 = vpack.c.bf16 %v2375, %v2375
    %s2384 = scalar_lea.vmem %s3, 256
    %v2385 = vld [vmem:[%s2384] sm:$0xff]
    %v2386 = vld [vmem:[%s2384 + $0x8] sm:$0xff]
    %v2387 = vld [vmem:[%s2384 + $0x10] sm:$0xff]
    %v2388 = vld [vmem:[%s2384 + $0x18] sm:$0xff]
    %v2389 = vld [vmem:[%s2384 + $0x20] sm:$0xff]
    %v2390 = vld [vmem:[%s2384 + $0x28] sm:$0xff]
    %v2391 = vld [vmem:[%s2384 + $0x30] sm:$0xff]
    %v2392 = vld [vmem:[%s2384 + $0x38] sm:$0xff]
    %v2393 = vld [vmem:[%s2384 + $0x40] sm:$0xff]
    %v2394 = vld [vmem:[%s2384 + $0x48] sm:$0xff]
    %v2395 = vld [vmem:[%s2384 + $0x50] sm:$0xff]
    %v2396 = vld [vmem:[%s2384 + $0x58] sm:$0xff]
    %v2397 = vld [vmem:[%s2384 + $0x60] sm:$0xff]
    %v2398 = vld [vmem:[%s2384 + $0x68] sm:$0xff]
    %v2399 = vld [vmem:[%s2384 + $0x70] sm:$0xff]
    %v2400 = vld [vmem:[%s2384 + $0x78] sm:$0xff]
    %v2417 = vunpack.c.l.b16 %v2385
    %v2418 = vunpack.c.h.b16 %v2385
    %v2419 = vunpack.c.l.b16 %v2386
    %v2420 = vunpack.c.h.b16 %v2386
    %v2421 = vunpack.c.l.b16 %v2387
    %v2422 = vunpack.c.h.b16 %v2387
    %v2423 = vunpack.c.l.b16 %v2388
    %v2424 = vunpack.c.h.b16 %v2388
    %v2425 = vunpack.c.l.b16 %v2389
    %v2426 = vunpack.c.h.b16 %v2389
    %v2427 = vunpack.c.l.b16 %v2390
    %v2428 = vunpack.c.h.b16 %v2390
    %v2429 = vunpack.c.l.b16 %v2391
    %v2430 = vunpack.c.h.b16 %v2391
    %v2431 = vunpack.c.l.b16 %v2392
    %v2432 = vunpack.c.h.b16 %v2392
    %v2433 = vunpack.c.l.b16 %v2393
    %v2434 = vunpack.c.h.b16 %v2393
    %v2435 = vunpack.c.l.b16 %v2394
    %v2436 = vunpack.c.h.b16 %v2394
    %v2437 = vunpack.c.l.b16 %v2395
    %v2438 = vunpack.c.h.b16 %v2395
    %v2439 = vunpack.c.l.b16 %v2396
    %v2440 = vunpack.c.h.b16 %v2396
    %v2441 = vunpack.c.l.b16 %v2397
    %v2442 = vunpack.c.h.b16 %v2397
    %v2443 = vunpack.c.l.b16 %v2398
    %v2444 = vunpack.c.h.b16 %v2398
    %v2445 = vunpack.c.l.b16 %v2399
    %v2446 = vunpack.c.h.b16 %v2399
    %v2447 = vunpack.c.l.b16 %v2400
    %v2448 = vunpack.c.h.b16 %v2400
    %v2449 = vpack.c.b16 %v2419, %v2417
    %v2450 = vpack.c.b16 %v2420, %v2418
    %v2451 = vpack.c.b16 %v2423, %v2421
    %v2452 = vpack.c.b16 %v2424, %v2422
    %v2453 = vpack.c.b16 %v2427, %v2425
    %v2454 = vpack.c.b16 %v2428, %v2426
    %v2455 = vpack.c.b16 %v2431, %v2429
    %v2456 = vpack.c.b16 %v2432, %v2430
    %v2457 = vpack.c.b16 %v2435, %v2433
    %v2458 = vpack.c.b16 %v2436, %v2434
    %v2459 = vpack.c.b16 %v2439, %v2437
    %v2460 = vpack.c.b16 %v2440, %v2438
    %v2461 = vpack.c.b16 %v2443, %v2441
    %v2462 = vpack.c.b16 %v2444, %v2442
    %v2463 = vpack.c.b16 %v2447, %v2445
    %v2464 = vpack.c.b16 %v2448, %v2446
    %2481 = vmatpush.bf16.msra.mxu0 %v2463
    %2482 = vmatpush.bf16.msra.mxu0 %v2461
    %2483 = vmatpush.bf16.msra.mxu0 %v2459
    %2484 = vmatpush.bf16.msra.mxu0 %v2457
    %2485 = vmatpush.bf16.msra.mxu0 %v2455
    %2486 = vmatpush.bf16.msra.mxu0 %v2453
    %2487 = vmatpush.bf16.msra.mxu0 %v2451
    %2488 = vmatpush.bf16.msra.mxu0 %v2449
    %2489 = vmatmul.bf16.gmra.mxu0 %v2376
    %v2490 = vpop.f32.mrf.mxu0
    %v2491 = vadd.f32 0.0, %v2490
    %v2492 = vpop.f32.mrf.mxu0
    %v2493 = vadd.f32 0.0, %v2492
    %2494 = vmatmul.bf16.gmra.mxu0 %v2377
    %v2495 = vpop.f32.mrf.mxu0
    %v2496 = vadd.f32 0.0, %v2495
    %v2497 = vpop.f32.mrf.mxu0
    %v2498 = vadd.f32 0.0, %v2497
    %2499 = vmatmul.bf16.gmra.mxu0 %v2378
    %v2500 = vpop.f32.mrf.mxu0
    %v2501 = vadd.f32 0.0, %v2500
    %v2502 = vpop.f32.mrf.mxu0
    %v2503 = vadd.f32 0.0, %v2502
    %2504 = vmatmul.bf16.gmra.mxu0 %v2379
    %v2505 = vpop.f32.mrf.mxu0
    %v2506 = vadd.f32 0.0, %v2505
    %v2507 = vpop.f32.mrf.mxu0
    %v2508 = vadd.f32 0.0, %v2507
    %2509 = vmatmul.bf16.gmra.mxu0 %v2380
    %v2510 = vpop.f32.mrf.mxu0
    %v2511 = vadd.f32 0.0, %v2510
    %v2512 = vpop.f32.mrf.mxu0
    %v2513 = vadd.f32 0.0, %v2512
    %2514 = vmatmul.bf16.gmra.mxu0 %v2381
    %v2515 = vpop.f32.mrf.mxu0
    %v2516 = vadd.f32 0.0, %v2515
    %v2517 = vpop.f32.mrf.mxu0
    %v2518 = vadd.f32 0.0, %v2517
    %2519 = vmatmul.bf16.gmra.mxu0 %v2382
    %v2520 = vpop.f32.mrf.mxu0
    %v2521 = vadd.f32 0.0, %v2520
    %v2522 = vpop.f32.mrf.mxu0
    %v2523 = vadd.f32 0.0, %v2522
    %2524 = vmatmul.bf16.gmra.mxu0 %v2383
    %v2525 = vpop.f32.mrf.mxu0
    %v2526 = vadd.f32 0.0, %v2525
    %v2527 = vpop.f32.mrf.mxu0
    %2528 = vdwg.mxu0
    %2529 = vmatpush.bf16.msra.mxu0 %v2464
    %2530 = vmatpush.bf16.msra.mxu0 %v2462
    %2531 = vmatpush.bf16.msra.mxu0 %v2460
    %2532 = vmatpush.bf16.msra.mxu0 %v2458
    %2533 = vmatpush.bf16.msra.mxu0 %v2456
    %2534 = vmatpush.bf16.msra.mxu0 %v2454
    %2535 = vmatpush.bf16.msra.mxu0 %v2452
    %2536 = vmatpush.bf16.msra.mxu0 %v2450
    %2537 = vmatmul.bf16.gmra.mxu0 %v2376
    %v2538 = vpop.f32.mrf.mxu0
    %v2539 = vadd.f32 0.0, %v2538
    %v2540 = vpop.f32.mrf.mxu0
    %v2541 = vadd.f32 0.0, %v2540
    %2542 = vmatmul.bf16.gmra.mxu0 %v2377
    %v2543 = vpop.f32.mrf.mxu0
    %v2544 = vadd.f32 0.0, %v2543
    %v2545 = vpop.f32.mrf.mxu0
    %v2546 = vadd.f32 0.0, %v2545
    %2547 = vmatmul.bf16.gmra.mxu0 %v2378
    %v2548 = vpop.f32.mrf.mxu0
    %v2549 = vadd.f32 0.0, %v2548
    %v2550 = vpop.f32.mrf.mxu0
    %v2551 = vadd.f32 0.0, %v2550
    %2552 = vmatmul.bf16.gmra.mxu0 %v2379
    %v2553 = vpop.f32.mrf.mxu0
    %v2554 = vadd.f32 0.0, %v2553
    %v2555 = vpop.f32.mrf.mxu0
    %v2556 = vadd.f32 0.0, %v2555
    %2557 = vmatmul.bf16.gmra.mxu0 %v2380
    %v2558 = vpop.f32.mrf.mxu0
    %v2559 = vadd.f32 0.0, %v2558
    %v2560 = vpop.f32.mrf.mxu0
    %v2561 = vadd.f32 0.0, %v2560
    %2562 = vmatmul.bf16.gmra.mxu0 %v2381
    %v2563 = vpop.f32.mrf.mxu0
    %v2564 = vadd.f32 0.0, %v2563
    %v2565 = vpop.f32.mrf.mxu0
    %v2566 = vadd.f32 0.0, %v2565
    %2567 = vmatmul.bf16.gmra.mxu0 %v2382
    %v2568 = vpop.f32.mrf.mxu0
    %v2569 = vadd.f32 0.0, %v2568
    %v2570 = vpop.f32.mrf.mxu0
    %v2571 = vadd.f32 0.0, %v2570
    %2572 = vmatmul.bf16.gmra.mxu0 %v2383
    %v2573 = vpop.f32.mrf.mxu0
    %v2574 = vadd.f32 0.0, %v2573
    %v2575 = vpop.f32.mrf.mxu0
    %2576 = vdwg.mxu0
    %v2577 = vadd.f32 %v2275, %v2491
    %v2578 = vadd.f32 %v2323, %v2539
    %v2579 = vadd.f32 %v2277, %v2493
    %v2580 = vadd.f32 %v2325, %v2541
    %v2581 = vadd.f32 %v2280, %v2496
    %v2582 = vadd.f32 %v2328, %v2544
    %v2583 = vadd.f32 %v2282, %v2498
    %v2584 = vadd.f32 %v2330, %v2546
    %v2585 = vadd.f32 %v2285, %v2501
    %v2586 = vadd.f32 %v2333, %v2549
    %v2587 = vadd.f32 %v2287, %v2503
    %v2588 = vadd.f32 %v2335, %v2551
    %v2589 = vadd.f32 %v2290, %v2506
    %v2590 = vadd.f32 %v2338, %v2554
    %v2591 = vadd.f32 %v2292, %v2508
    %v2592 = vadd.f32 %v2340, %v2556
    %v2593 = vadd.f32 %v2295, %v2511
    %v2594 = vadd.f32 %v2343, %v2559
    %v2595 = vadd.f32 %v2297, %v2513
    %v2596 = vadd.f32 %v2345, %v2561
    %v2597 = vadd.f32 %v2300, %v2516
    %v2598 = vadd.f32 %v2348, %v2564
    %v2599 = vadd.f32 %v2302, %v2518
    %v2600 = vadd.f32 %v2350, %v2566
    %v2601 = vadd.f32 %v2305, %v2521
    %v2602 = vadd.f32 %v2353, %v2569
    %v2603 = vadd.f32 %v2307, %v2523
    %v2604 = vadd.f32 %v2355, %v2571
    %v2605 = vadd.f32 %v2310, %v2526
    %v2606 = vadd.f32 %v2358, %v2574
    %v2607 = vld [vmem:[#allocation3 + $0x3] sm:$0xff]
    %v2608 = vld [vmem:[#allocation3 + $0xb] sm:$0xff]
    %v2609 = vld [vmem:[#allocation3 + $0x13] sm:$0xff]
    %v2610 = vld [vmem:[#allocation3 + $0x1b] sm:$0xff]
    %v2611 = vld [vmem:[#allocation3 + $0x23] sm:$0xff]
    %v2612 = vld [vmem:[#allocation3 + $0x2b] sm:$0xff]
    %v2613 = vld [vmem:[#allocation3 + $0x33] sm:$0xff]
    %v2614 = vld [vmem:[#allocation3 + $0x3b] sm:$0xff]
    %v2615 = vld [vmem:[#allocation3 + $0x43] sm:$0xff]
    %v2616 = vld [vmem:[#allocation3 + $0x4b] sm:$0xff]
    %v2617 = vld [vmem:[#allocation3 + $0x53] sm:$0xff]
    %v2618 = vld [vmem:[#allocation3 + $0x5b] sm:$0xff]
    %v2619 = vld [vmem:[#allocation3 + $0x63] sm:$0xff]
    %v2620 = vld [vmem:[#allocation3 + $0x6b] sm:$0xff]
    %v2621 = vld [vmem:[#allocation3 + $0x73] sm:$0xff]
    %v2622 = vpack.c.bf16 %v2608, %v2607
    %v2623 = vpack.c.bf16 %v2610, %v2609
    %v2624 = vpack.c.bf16 %v2612, %v2611
    %v2625 = vpack.c.bf16 %v2614, %v2613
    %v2626 = vpack.c.bf16 %v2616, %v2615
    %v2627 = vpack.c.bf16 %v2618, %v2617
    %v2628 = vpack.c.bf16 %v2620, %v2619
    %v2629 = vpack.c.bf16 %v2621, %v2621
    %s2630 = scalar_lea.vmem %s3, 384
    %v2631 = vld [vmem:[%s2630] sm:$0xff]
    %v2632 = vld [vmem:[%s2630 + $0x8] sm:$0xff]
    %v2633 = vld [vmem:[%s2630 + $0x10] sm:$0xff]
    %v2634 = vld [vmem:[%s2630 + $0x18] sm:$0xff]
    %v2635 = vld [vmem:[%s2630 + $0x20] sm:$0xff]
    %v2636 = vld [vmem:[%s2630 + $0x28] sm:$0xff]
    %v2637 = vld [vmem:[%s2630 + $0x30] sm:$0xff]
    %v2638 = vld [vmem:[%s2630 + $0x38] sm:$0xff]
    %v2639 = vld [vmem:[%s2630 + $0x40] sm:$0xff]
    %v2640 = vld [vmem:[%s2630 + $0x48] sm:$0xff]
    %v2641 = vld [vmem:[%s2630 + $0x50] sm:$0xff]
    %v2642 = vld [vmem:[%s2630 + $0x58] sm:$0xff]
    %v2643 = vld [vmem:[%s2630 + $0x60] sm:$0xff]
    %v2644 = vld [vmem:[%s2630 + $0x68] sm:$0xff]
    %v2645 = vld [vmem:[%s2630 + $0x70] sm:$0xff]
    %v2646 = vld [vmem:[%s2630 + $0x78] sm:$0xff]
    %v2663 = vunpack.c.l.b16 %v2631
    %v2664 = vunpack.c.h.b16 %v2631
    %v2665 = vunpack.c.l.b16 %v2632
    %v2666 = vunpack.c.h.b16 %v2632
    %v2667 = vunpack.c.l.b16 %v2633
    %v2668 = vunpack.c.h.b16 %v2633
    %v2669 = vunpack.c.l.b16 %v2634
    %v2670 = vunpack.c.h.b16 %v2634
    %v2671 = vunpack.c.l.b16 %v2635
    %v2672 = vunpack.c.h.b16 %v2635
    %v2673 = vunpack.c.l.b16 %v2636
    %v2674 = vunpack.c.h.b16 %v2636
    %v2675 = vunpack.c.l.b16 %v2637
    %v2676 = vunpack.c.h.b16 %v2637
    %v2677 = vunpack.c.l.b16 %v2638
    %v2678 = vunpack.c.h.b16 %v2638
    %v2679 = vunpack.c.l.b16 %v2639
    %v2680 = vunpack.c.h.b16 %v2639
    %v2681 = vunpack.c.l.b16 %v2640
    %v2682 = vunpack.c.h.b16 %v2640
    %v2683 = vunpack.c.l.b16 %v2641
    %v2684 = vunpack.c.h.b16 %v2641
    %v2685 = vunpack.c.l.b16 %v2642
    %v2686 = vunpack.c.h.b16 %v2642
    %v2687 = vunpack.c.l.b16 %v2643
    %v2688 = vunpack.c.h.b16 %v2643
    %v2689 = vunpack.c.l.b16 %v2644
    %v2690 = vunpack.c.h.b16 %v2644
    %v2691 = vunpack.c.l.b16 %v2645
    %v2692 = vunpack.c.h.b16 %v2645
    %v2693 = vunpack.c.l.b16 %v2646
    %v2694 = vunpack.c.h.b16 %v2646
    %v2695 = vpack.c.b16 %v2665, %v2663
    %v2696 = vpack.c.b16 %v2666, %v2664
    %v2697 = vpack.c.b16 %v2669, %v2667
    %v2698 = vpack.c.b16 %v2670, %v2668
    %v2699 = vpack.c.b16 %v2673, %v2671
    %v2700 = vpack.c.b16 %v2674, %v2672
    %v2701 = vpack.c.b16 %v2677, %v2675
    %v2702 = vpack.c.b16 %v2678, %v2676
    %v2703 = vpack.c.b16 %v2681, %v2679
    %v2704 = vpack.c.b16 %v2682, %v2680
    %v2705 = vpack.c.b16 %v2685, %v2683
    %v2706 = vpack.c.b16 %v2686, %v2684
    %v2707 = vpack.c.b16 %v2689, %v2687
    %v2708 = vpack.c.b16 %v2690, %v2688
    %v2709 = vpack.c.b16 %v2693, %v2691
    %v2710 = vpack.c.b16 %v2694, %v2692
    %2727 = vmatpush.bf16.msra.mxu0 %v2709
    %2728 = vmatpush.bf16.msra.mxu0 %v2707
    %2729 = vmatpush.bf16.msra.mxu0 %v2705
    %2730 = vmatpush.bf16.msra.mxu0 %v2703
    %2731 = vmatpush.bf16.msra.mxu0 %v2701
    %2732 = vmatpush.bf16.msra.mxu0 %v2699
    %2733 = vmatpush.bf16.msra.mxu0 %v2697
    %2734 = vmatpush.bf16.msra.mxu0 %v2695
    %2735 = vmatmul.bf16.gmra.mxu0 %v2622
    %v2736 = vpop.f32.mrf.mxu0
    %v2737 = vadd.f32 0.0, %v2736
    %v2738 = vpop.f32.mrf.mxu0
    %v2739 = vadd.f32 0.0, %v2738
    %2740 = vmatmul.bf16.gmra.mxu0 %v2623
    %v2741 = vpop.f32.mrf.mxu0
    %v2742 = vadd.f32 0.0, %v2741
    %v2743 = vpop.f32.mrf.mxu0
    %v2744 = vadd.f32 0.0, %v2743
    %2745 = vmatmul.bf16.gmra.mxu0 %v2624
    %v2746 = vpop.f32.mrf.mxu0
    %v2747 = vadd.f32 0.0, %v2746
    %v2748 = vpop.f32.mrf.mxu0
    %v2749 = vadd.f32 0.0, %v2748
    %2750 = vmatmul.bf16.gmra.mxu0 %v2625
    %v2751 = vpop.f32.mrf.mxu0
    %v2752 = vadd.f32 0.0, %v2751
    %v2753 = vpop.f32.mrf.mxu0
    %v2754 = vadd.f32 0.0, %v2753
    %2755 = vmatmul.bf16.gmra.mxu0 %v2626
    %v2756 = vpop.f32.mrf.mxu0
    %v2757 = vadd.f32 0.0, %v2756
    %v2758 = vpop.f32.mrf.mxu0
    %v2759 = vadd.f32 0.0, %v2758
    %2760 = vmatmul.bf16.gmra.mxu0 %v2627
    %v2761 = vpop.f32.mrf.mxu0
    %v2762 = vadd.f32 0.0, %v2761
    %v2763 = vpop.f32.mrf.mxu0
    %v2764 = vadd.f32 0.0, %v2763
    %2765 = vmatmul.bf16.gmra.mxu0 %v2628
    %v2766 = vpop.f32.mrf.mxu0
    %v2767 = vadd.f32 0.0, %v2766
    %v2768 = vpop.f32.mrf.mxu0
    %v2769 = vadd.f32 0.0, %v2768
    %2770 = vmatmul.bf16.gmra.mxu0 %v2629
    %v2771 = vpop.f32.mrf.mxu0
    %v2772 = vadd.f32 0.0, %v2771
    %v2773 = vpop.f32.mrf.mxu0
    %2774 = vdwg.mxu0
    %2775 = vmatpush.bf16.msra.mxu0 %v2710
    %2776 = vmatpush.bf16.msra.mxu0 %v2708
    %2777 = vmatpush.bf16.msra.mxu0 %v2706
    %2778 = vmatpush.bf16.msra.mxu0 %v2704
    %2779 = vmatpush.bf16.msra.mxu0 %v2702
    %2780 = vmatpush.bf16.msra.mxu0 %v2700
    %2781 = vmatpush.bf16.msra.mxu0 %v2698
    %2782 = vmatpush.bf16.msra.mxu0 %v2696
    %2783 = vmatmul.bf16.gmra.mxu0 %v2622
    %v2784 = vpop.f32.mrf.mxu0
    %v2785 = vadd.f32 0.0, %v2784
    %v2786 = vpop.f32.mrf.mxu0
    %v2787 = vadd.f32 0.0, %v2786
    %2788 = vmatmul.bf16.gmra.mxu0 %v2623
    %v2789 = vpop.f32.mrf.mxu0
    %v2790 = vadd.f32 0.0, %v2789
    %v2791 = vpop.f32.mrf.mxu0
    %v2792 = vadd.f32 0.0, %v2791
    %2793 = vmatmul.bf16.gmra.mxu0 %v2624
    %v2794 = vpop.f32.mrf.mxu0
    %v2795 = vadd.f32 0.0, %v2794
    %v2796 = vpop.f32.mrf.mxu0
    %v2797 = vadd.f32 0.0, %v2796
    %2798 = vmatmul.bf16.gmra.mxu0 %v2625
    %v2799 = vpop.f32.mrf.mxu0
    %v2800 = vadd.f32 0.0, %v2799
    %v2801 = vpop.f32.mrf.mxu0
    %v2802 = vadd.f32 0.0, %v2801
    %2803 = vmatmul.bf16.gmra.mxu0 %v2626
    %v2804 = vpop.f32.mrf.mxu0
    %v2805 = vadd.f32 0.0, %v2804
    %v2806 = vpop.f32.mrf.mxu0
    %v2807 = vadd.f32 0.0, %v2806
    %2808 = vmatmul.bf16.gmra.mxu0 %v2627
    %v2809 = vpop.f32.mrf.mxu0
    %v2810 = vadd.f32 0.0, %v2809
    %v2811 = vpop.f32.mrf.mxu0
    %v2812 = vadd.f32 0.0, %v2811
    %2813 = vmatmul.bf16.gmra.mxu0 %v2628
    %v2814 = vpop.f32.mrf.mxu0
    %v2815 = vadd.f32 0.0, %v2814
    %v2816 = vpop.f32.mrf.mxu0
    %v2817 = vadd.f32 0.0, %v2816
    %2818 = vmatmul.bf16.gmra.mxu0 %v2629
    %v2819 = vpop.f32.mrf.mxu0
    %v2820 = vadd.f32 0.0, %v2819
    %v2821 = vpop.f32.mrf.mxu0
    %2822 = vdwg.mxu0
    %v2823 = vadd.f32 %v2577, %v2737
    %v2824 = vadd.f32 %v2578, %v2785
    %v2825 = vadd.f32 %v2579, %v2739
    %v2826 = vadd.f32 %v2580, %v2787
    %v2827 = vadd.f32 %v2581, %v2742
    %v2828 = vadd.f32 %v2582, %v2790
    %v2829 = vadd.f32 %v2583, %v2744
    %v2830 = vadd.f32 %v2584, %v2792
    %v2831 = vadd.f32 %v2585, %v2747
    %v2832 = vadd.f32 %v2586, %v2795
    %v2833 = vadd.f32 %v2587, %v2749
    %v2834 = vadd.f32 %v2588, %v2797
    %v2835 = vadd.f32 %v2589, %v2752
    %v2836 = vadd.f32 %v2590, %v2800
    %v2837 = vadd.f32 %v2591, %v2754
    %v2838 = vadd.f32 %v2592, %v2802
    %v2839 = vadd.f32 %v2593, %v2757
    %v2840 = vadd.f32 %v2594, %v2805
    %v2841 = vadd.f32 %v2595, %v2759
    %v2842 = vadd.f32 %v2596, %v2807
    %v2843 = vadd.f32 %v2597, %v2762
    %v2844 = vadd.f32 %v2598, %v2810
    %v2845 = vadd.f32 %v2599, %v2764
    %v2846 = vadd.f32 %v2600, %v2812
    %v2847 = vadd.f32 %v2601, %v2767
    %v2848 = vadd.f32 %v2602, %v2815
    %v2849 = vadd.f32 %v2603, %v2769
    %v2850 = vadd.f32 %v2604, %v2817
    %v2851 = vadd.f32 %v2605, %v2772
    %v2852 = vadd.f32 %v2606, %v2820
    %v2853 = vld [vmem:[#allocation3 + $0x4] sm:$0xff]
    %v2854 = vld [vmem:[#allocation3 + $0xc] sm:$0xff]
    %v2855 = vld [vmem:[#allocation3 + $0x14] sm:$0xff]
    %v2856 = vld [vmem:[#allocation3 + $0x1c] sm:$0xff]
    %v2857 = vld [vmem:[#allocation3 + $0x24] sm:$0xff]
    %v2858 = vld [vmem:[#allocation3 + $0x2c] sm:$0xff]
    %v2859 = vld [vmem:[#allocation3 + $0x34] sm:$0xff]
    %v2860 = vld [vmem:[#allocation3 + $0x3c] sm:$0xff]
    %v2861 = vld [vmem:[#allocation3 + $0x44] sm:$0xff]
    %v2862 = vld [vmem:[#allocation3 + $0x4c] sm:$0xff]
    %v2863 = vld [vmem:[#allocation3 + $0x54] sm:$0xff]
    %v2864 = vld [vmem:[#allocation3 + $0x5c] sm:$0xff]
    %v2865 = vld [vmem:[#allocation3 + $0x64] sm:$0xff]
    %v2866 = vld [vmem:[#allocation3 + $0x6c] sm:$0xff]
    %v2867 = vld [vmem:[#allocation3 + $0x74] sm:$0xff]
    %v2868 = vpack.c.bf16 %v2854, %v2853
    %v2869 = vpack.c.bf16 %v2856, %v2855
    %v2870 = vpack.c.bf16 %v2858, %v2857
    %v2871 = vpack.c.bf16 %v2860, %v2859
    %v2872 = vpack.c.bf16 %v2862, %v2861
    %v2873 = vpack.c.bf16 %v2864, %v2863
    %v2874 = vpack.c.bf16 %v2866, %v2865
    %v2875 = vpack.c.bf16 %v2867, %v2867
    %s2876 = scalar_lea.vmem %s3, 512
    %v2877 = vld [vmem:[%s2876] sm:$0xff]
    %v2878 = vld [vmem:[%s2876 + $0x8] sm:$0xff]
    %v2879 = vld [vmem:[%s2876 + $0x10] sm:$0xff]
    %v2880 = vld [vmem:[%s2876 + $0x18] sm:$0xff]
    %v2881 = vld [vmem:[%s2876 + $0x20] sm:$0xff]
    %v2882 = vld [vmem:[%s2876 + $0x28] sm:$0xff]
    %v2883 = vld [vmem:[%s2876 + $0x30] sm:$0xff]
    %v2884 = vld [vmem:[%s2876 + $0x38] sm:$0xff]
    %v2885 = vld [vmem:[%s2876 + $0x40] sm:$0xff]
    %v2886 = vld [vmem:[%s2876 + $0x48] sm:$0xff]
    %v2887 = vld [vmem:[%s2876 + $0x50] sm:$0xff]
    %v2888 = vld [vmem:[%s2876 + $0x58] sm:$0xff]
    %v2889 = vld [vmem:[%s2876 + $0x60] sm:$0xff]
    %v2890 = vld [vmem:[%s2876 + $0x68] sm:$0xff]
    %v2891 = vld [vmem:[%s2876 + $0x70] sm:$0xff]
    %v2892 = vld [vmem:[%s2876 + $0x78] sm:$0xff]
    %v2909 = vunpack.c.l.b16 %v2877
    %v2910 = vunpack.c.h.b16 %v2877
    %v2911 = vunpack.c.l.b16 %v2878
    %v2912 = vunpack.c.h.b16 %v2878
    %v2913 = vunpack.c.l.b16 %v2879
    %v2914 = vunpack.c.h.b16 %v2879
    %v2915 = vunpack.c.l.b16 %v2880
    %v2916 = vunpack.c.h.b16 %v2880
    %v2917 = vunpack.c.l.b16 %v2881
    %v2918 = vunpack.c.h.b16 %v2881
    %v2919 = vunpack.c.l.b16 %v2882
    %v2920 = vunpack.c.h.b16 %v2882
    %v2921 = vunpack.c.l.b16 %v2883
    %v2922 = vunpack.c.h.b16 %v2883
    %v2923 = vunpack.c.l.b16 %v2884
    %v2924 = vunpack.c.h.b16 %v2884
    %v2925 = vunpack.c.l.b16 %v2885
    %v2926 = vunpack.c.h.b16 %v2885
    %v2927 = vunpack.c.l.b16 %v2886
    %v2928 = vunpack.c.h.b16 %v2886
    %v2929 = vunpack.c.l.b16 %v2887
    %v2930 = vunpack.c.h.b16 %v2887
    %v2931 = vunpack.c.l.b16 %v2888
    %v2932 = vunpack.c.h.b16 %v2888
    %v2933 = vunpack.c.l.b16 %v2889
    %v2934 = vunpack.c.h.b16 %v2889
    %v2935 = vunpack.c.l.b16 %v2890
    %v2936 = vunpack.c.h.b16 %v2890
    %v2937 = vunpack.c.l.b16 %v2891
    %v2938 = vunpack.c.h.b16 %v2891
    %v2939 = vunpack.c.l.b16 %v2892
    %v2940 = vunpack.c.h.b16 %v2892
    %v2941 = vpack.c.b16 %v2911, %v2909
    %v2942 = vpack.c.b16 %v2912, %v2910
    %v2943 = vpack.c.b16 %v2915, %v2913
    %v2944 = vpack.c.b16 %v2916, %v2914
    %v2945 = vpack.c.b16 %v2919, %v2917
    %v2946 = vpack.c.b16 %v2920, %v2918
    %v2947 = vpack.c.b16 %v2923, %v2921
    %v2948 = vpack.c.b16 %v2924, %v2922
    %v2949 = vpack.c.b16 %v2927, %v2925
    %v2950 = vpack.c.b16 %v2928, %v2926
    %v2951 = vpack.c.b16 %v2931, %v2929
    %v2952 = vpack.c.b16 %v2932, %v2930
    %v2953 = vpack.c.b16 %v2935, %v2933
    %v2954 = vpack.c.b16 %v2936, %v2934
    %v2955 = vpack.c.b16 %v2939, %v2937
    %v2956 = vpack.c.b16 %v2940, %v2938
    %2973 = vmatpush.bf16.msra.mxu0 %v2955
    %2974 = vmatpush.bf16.msra.mxu0 %v2953
    %2975 = vmatpush.bf16.msra.mxu0 %v2951
    %2976 = vmatpush.bf16.msra.mxu0 %v2949
    %2977 = vmatpush.bf16.msra.mxu0 %v2947
    %2978 = vmatpush.bf16.msra.mxu0 %v2945
    %2979 = vmatpush.bf16.msra.mxu0 %v2943
    %2980 = vmatpush.bf16.msra.mxu0 %v2941
    %2981 = vmatmul.bf16.gmra.mxu0 %v2868
    %v2982 = vpop.f32.mrf.mxu0
    %v2983 = vadd.f32 0.0, %v2982
    %v2984 = vpop.f32.mrf.mxu0
    %v2985 = vadd.f32 0.0, %v2984
    %2986 = vmatmul.bf16.gmra.mxu0 %v2869
    %v2987 = vpop.f32.mrf.mxu0
    %v2988 = vadd.f32 0.0, %v2987
    %v2989 = vpop.f32.mrf.mxu0
    %v2990 = vadd.f32 0.0, %v2989
    %2991 = vmatmul.bf16.gmra.mxu0 %v2870
    %v2992 = vpop.f32.mrf.mxu0
    %v2993 = vadd.f32 0.0, %v2992
    %v2994 = vpop.f32.mrf.mxu0
    %v2995 = vadd.f32 0.0, %v2994
    %2996 = vmatmul.bf16.gmra.mxu0 %v2871
    %v2997 = vpop.f32.mrf.mxu0
    %v2998 = vadd.f32 0.0, %v2997
    %v2999 = vpop.f32.mrf.mxu0
    %v3000 = vadd.f32 0.0, %v2999
    %3001 = vmatmul.bf16.gmra.mxu0 %v2872
    %v3002 = vpop.f32.mrf.mxu0
    %v3003 = vadd.f32 0.0, %v3002
    %v3004 = vpop.f32.mrf.mxu0
    %v3005 = vadd.f32 0.0, %v3004
    %3006 = vmatmul.bf16.gmra.mxu0 %v2873
    %v3007 = vpop.f32.mrf.mxu0
    %v3008 = vadd.f32 0.0, %v3007
    %v3009 = vpop.f32.mrf.mxu0
    %v3010 = vadd.f32 0.0, %v3009
    %3011 = vmatmul.bf16.gmra.mxu0 %v2874
    %v3012 = vpop.f32.mrf.mxu0
    %v3013 = vadd.f32 0.0, %v3012
    %v3014 = vpop.f32.mrf.mxu0
    %v3015 = vadd.f32 0.0, %v3014
    %3016 = vmatmul.bf16.gmra.mxu0 %v2875
    %v3017 = vpop.f32.mrf.mxu0
    %v3018 = vadd.f32 0.0, %v3017
    %v3019 = vpop.f32.mrf.mxu0
    %3020 = vdwg.mxu0
    %3021 = vmatpush.bf16.msra.mxu0 %v2956
    %3022 = vmatpush.bf16.msra.mxu0 %v2954
    %3023 = vmatpush.bf16.msra.mxu0 %v2952
    %3024 = vmatpush.bf16.msra.mxu0 %v2950
    %3025 = vmatpush.bf16.msra.mxu0 %v2948
    %3026 = vmatpush.bf16.msra.mxu0 %v2946
    %3027 = vmatpush.bf16.msra.mxu0 %v2944
    %3028 = vmatpush.bf16.msra.mxu0 %v2942
    %3029 = vmatmul.bf16.gmra.mxu0 %v2868
    %v3030 = vpop.f32.mrf.mxu0
    %v3031 = vadd.f32 0.0, %v3030
    %v3032 = vpop.f32.mrf.mxu0
    %v3033 = vadd.f32 0.0, %v3032
    %3034 = vmatmul.bf16.gmra.mxu0 %v2869
    %v3035 = vpop.f32.mrf.mxu0
    %v3036 = vadd.f32 0.0, %v3035
    %v3037 = vpop.f32.mrf.mxu0
    %v3038 = vadd.f32 0.0, %v3037
    %3039 = vmatmul.bf16.gmra.mxu0 %v2870
    %v3040 = vpop.f32.mrf.mxu0
    %v3041 = vadd.f32 0.0, %v3040
    %v3042 = vpop.f32.mrf.mxu0
    %v3043 = vadd.f32 0.0, %v3042
    %3044 = vmatmul.bf16.gmra.mxu0 %v2871
    %v3045 = vpop.f32.mrf.mxu0
    %v3046 = vadd.f32 0.0, %v3045
    %v3047 = vpop.f32.mrf.mxu0
    %v3048 = vadd.f32 0.0, %v3047
    %3049 = vmatmul.bf16.gmra.mxu0 %v2872
    %v3050 = vpop.f32.mrf.mxu0
    %v3051 = vadd.f32 0.0, %v3050
    %v3052 = vpop.f32.mrf.mxu0
    %v3053 = vadd.f32 0.0, %v3052
    %3054 = vmatmul.bf16.gmra.mxu0 %v2873
    %v3055 = vpop.f32.mrf.mxu0
    %v3056 = vadd.f32 0.0, %v3055
    %v3057 = vpop.f32.mrf.mxu0
    %v3058 = vadd.f32 0.0, %v3057
    %3059 = vmatmul.bf16.gmra.mxu0 %v2874
    %v3060 = vpop.f32.mrf.mxu0
    %v3061 = vadd.f32 0.0, %v3060
    %v3062 = vpop.f32.mrf.mxu0
    %v3063 = vadd.f32 0.0, %v3062
    %3064 = vmatmul.bf16.gmra.mxu0 %v2875
    %v3065 = vpop.f32.mrf.mxu0
    %v3066 = vadd.f32 0.0, %v3065
    %v3067 = vpop.f32.mrf.mxu0
    %3068 = vdwg.mxu0
    %v3069 = vadd.f32 %v2823, %v2983
    %v3070 = vadd.f32 %v2824, %v3031
    %v3071 = vadd.f32 %v2825, %v2985
    %v3072 = vadd.f32 %v2826, %v3033
    %v3073 = vadd.f32 %v2827, %v2988
    %v3074 = vadd.f32 %v2828, %v3036
    %v3075 = vadd.f32 %v2829, %v2990
    %v3076 = vadd.f32 %v2830, %v3038
    %v3077 = vadd.f32 %v2831, %v2993
    %v3078 = vadd.f32 %v2832, %v3041
    %v3079 = vadd.f32 %v2833, %v2995
    %v3080 = vadd.f32 %v2834, %v3043
    %v3081 = vadd.f32 %v2835, %v2998
    %v3082 = vadd.f32 %v2836, %v3046
    %v3083 = vadd.f32 %v2837, %v3000
    %v3084 = vadd.f32 %v2838, %v3048
    %v3085 = vadd.f32 %v2839, %v3003
    %v3086 = vadd.f32 %v2840, %v3051
    %v3087 = vadd.f32 %v2841, %v3005
    %v3088 = vadd.f32 %v2842, %v3053
    %v3089 = vadd.f32 %v2843, %v3008
    %v3090 = vadd.f32 %v2844, %v3056
    %v3091 = vadd.f32 %v2845, %v3010
    %v3092 = vadd.f32 %v2846, %v3058
    %v3093 = vadd.f32 %v2847, %v3013
    %v3094 = vadd.f32 %v2848, %v3061
    %v3095 = vadd.f32 %v2849, %v3015
    %v3096 = vadd.f32 %v2850, %v3063
    %v3097 = vadd.f32 %v2851, %v3018
    %v3098 = vadd.f32 %v2852, %v3066
    %v3099 = vmax.f32 %v3069, %v3070
    %v3100 = vmax.f32 %v3071, %v3072
    %v3101 = vmax.f32 %v3073, %v3074
    %v3102 = vmax.f32 %v3075, %v3076
    %v3103 = vmax.f32 %v3077, %v3078
    %v3104 = vmax.f32 %v3079, %v3080
    %v3105 = vmax.f32 %v3081, %v3082
    %v3106 = vmax.f32 %v3083, %v3084
    %v3107 = vmax.f32 %v3085, %v3086
    %v3108 = vmax.f32 %v3087, %v3088
    %v3109 = vmax.f32 %v3089, %v3090
    %v3110 = vmax.f32 %v3091, %v3092
    %v3111 = vmax.f32 %v3093, %v3094
    %v3112 = vmax.f32 %v3095, %v3096
    %v3113 = vmax.f32 %v3097, %v3098
    %v3114 = vld [vmem:[%s4] sm:$0x1]
    %v3116 = vperm.slane %v3114, 0
    %v3118 = vadd.f32 %v3099, %v3116
    %v3119 = vadd.f32 %v3100, %v3116
    %v3120 = vadd.f32 %v3101, %v3116
    %v3121 = vadd.f32 %v3102, %v3116
    %v3122 = vadd.f32 %v3103, %v3116
    %v3123 = vadd.f32 %v3104, %v3116
    %v3124 = vadd.f32 %v3105, %v3116
    %v3125 = vadd.f32 %v3106, %v3116
    %v3126 = vadd.f32 %v3107, %v3116
    %v3127 = vadd.f32 %v3108, %v3116
    %v3128 = vadd.f32 %v3109, %v3116
    %v3129 = vadd.f32 %v3110, %v3116
    %v3130 = vadd.f32 %v3111, %v3116
    %v3131 = vadd.f32 %v3112, %v3116
    %v3132 = vadd.f32 %v3113, %v3116
    %3133 = vst [vmem:[#allocation3] sm:$0xff] %v3118
    %3134 = vst [vmem:[#allocation3 + $0x8] sm:$0xff] %v3119
    %3135 = vst [vmem:[#allocation3 + $0x10] sm:$0xff] %v3120
    %3136 = vst [vmem:[#allocation3 + $0x18] sm:$0xff] %v3121
    %3137 = vst [vmem:[#allocation3 + $0x20] sm:$0xff] %v3122
    %3138 = vst [vmem:[#allocation3 + $0x28] sm:$0xff] %v3123
    %3139 = vst [vmem:[#allocation3 + $0x30] sm:$0xff] %v3124
    %3140 = vst [vmem:[#allocation3 + $0x38] sm:$0xff] %v3125
    %3141 = vst [vmem:[#allocation3 + $0x40] sm:$0xff] %v3126
    %3142 = vst [vmem:[#allocation3 + $0x48] sm:$0xff] %v3127
    %3143 = vst [vmem:[#allocation3 + $0x50] sm:$0xff] %v3128
    %3144 = vst [vmem:[#allocation3 + $0x58] sm:$0xff] %v3129
    %3145 = vst [vmem:[#allocation3 + $0x60] sm:$0xff] %v3130
    %3146 = vst [vmem:[#allocation3 + $0x68] sm:$0xff] %v3131
    %3147 = vst [vmem:[#allocation3 + $0x70] sm:$0xff] %v3132
    %v3148 = vld [vmem:[#allocation3] ss:$2 sm:$0xff]
    %s3149 = scalar_lea.vmem [#allocation3], 16
    %v3150 = vld [vmem:[%s3149] ss:$2 sm:$0xff]
    %s3151 = scalar_lea.vmem [#allocation3], 32
    %v3152 = vld [vmem:[%s3151] ss:$2 sm:$0xff]
    %s3153 = scalar_lea.vmem [#allocation3], 48
    %v3154 = vld [vmem:[%s3153] ss:$2 sm:$0xff]
    %s3155 = scalar_lea.vmem [#allocation3], 64
    %v3156 = vld [vmem:[%s3155] ss:$2 sm:$0xff]
    %s3157 = scalar_lea.vmem [#allocation3], 80
    %v3158 = vld [vmem:[%s3157] ss:$2 sm:$0xff]
    %s3159 = scalar_lea.vmem [#allocation3], 96
    %v3160 = vld [vmem:[%s3159] ss:$2 sm:$0xff]
    %s3161 = scalar_lea.vmem [#allocation3], 112
    %v3162 = vld [vmem:[%s3161] ss:$2 sm:$0xff]
    %s3163 = scalar_lea.vmem [#allocation3], 1
    %v3164 = vld [vmem:[%s3163] ss:$2 sm:$0xff]
    %s3165 = scalar_lea.vmem [#allocation3], 17
    %v3166 = vld [vmem:[%s3165] ss:$2 sm:$0xff]
    %s3167 = scalar_lea.vmem [#allocation3], 33
    %v3168 = vld [vmem:[%s3167] ss:$2 sm:$0xff]
    %s3169 = scalar_lea.vmem [#allocation3], 49
    %v3170 = vld [vmem:[%s3169] ss:$2 sm:$0xff]
    %s3171 = scalar_lea.vmem [#allocation3], 65
    %v3172 = vld [vmem:[%s3171] ss:$2 sm:$0xff]
    %s3173 = scalar_lea.vmem [#allocation3], 81
    %v3174 = vld [vmem:[%s3173] ss:$2 sm:$0xff]
    %s3175 = scalar_lea.vmem [#allocation3], 97
    %v3176 = vld [vmem:[%s3175] ss:$2 sm:$0xff]
    %s3177 = scalar_lea.vmem [#allocation3], 113
    %v3178 = vld [vmem:[%s3177] ss:$2 sm:$0xff]
    %v3179 = vmax.f32 %v3148, %v3164
    %v3180 = vmax.f32 %v3150, %v3166
    %v3181 = vmax.f32 %v3152, %v3168
    %v3182 = vmax.f32 %v3154, %v3170
    %v3183 = vmax.f32 %v3156, %v3172
    %v3184 = vmax.f32 %v3158, %v3174
    %v3185 = vmax.f32 %v3160, %v3176
    %v3186 = vmax.f32 %v3162, %v3178
    %v3187 = vmax.f32 %v3179, 0.0
    %v3188 = vmax.f32 %v3180, 0.0
    %v3189 = vmax.f32 %v3181, 0.0
    %v3190 = vmax.f32 %v3182, 0.0
    %v3191 = vmax.f32 %v3183, 0.0
    %v3192 = vmax.f32 %v3184, 0.0
    %v3193 = vmax.f32 %v3185, 0.0
    %v3194 = vmax.f32 %v3186, 0.0
    %3195 = vst [vmem:[#allocation3] sm:$0xff] %v3187
    %3196 = vst [vmem:[#allocation3 + $0x8] sm:$0xff] %v3188
    %3197 = vst [vmem:[#allocation3 + $0x10] sm:$0xff] %v3189
    %3198 = vst [vmem:[#allocation3 + $0x18] sm:$0xff] %v3190
    %3199 = vst [vmem:[#allocation3 + $0x20] sm:$0xff] %v3191
    %3200 = vst [vmem:[#allocation3 + $0x28] sm:$0xff] %v3192
    %3201 = vst [vmem:[#allocation3 + $0x30] sm:$0xff] %v3193
    %3202 = vst [vmem:[#allocation3 + $0x38] sm:$0xff] %v3194
    %v3203 = vld [vmem:[#allocation3] ss:$8 sm:$0xf]
    %v3204 = vld [vmem:[#allocation3] ss:$8 sm:$0xf0]
    %v3205 = vor.u32 %v3203, %v3204
    %v3206 = vpack.c.bf16 %v3205, %v3205
    %v3207 = vld [vmem:[%s5] sm:$0xf]
    %v3208 = vld [vmem:[%s5 + $0x4] sm:$0xf]
    %v3209 = vld [vmem:[%s5 + $0x8] sm:$0xf]
    %v3210 = vld [vmem:[%s5 + $0xc] sm:$0xf]
    %v3211 = vld [vmem:[%s5 + $0x10] sm:$0xf]
    %v3212 = vld [vmem:[%s5 + $0x14] sm:$0xf]
    %v3213 = vld [vmem:[%s5 + $0x18] sm:$0xf]
    %v3214 = vld [vmem:[%s5 + $0x1c] sm:$0xf]
    %v3215 = vld [vmem:[%s5 + $0x20] sm:$0xf]
    %v3216 = vld [vmem:[%s5 + $0x24] sm:$0xf]
    %v3217 = vld [vmem:[%s5 + $0x28] sm:$0xf]
    %v3218 = vld [vmem:[%s5 + $0x2c] sm:$0xf]
    %v3219 = vld [vmem:[%s5 + $0x30] sm:$0xf]
    %v3220 = vld [vmem:[%s5 + $0x34] sm:$0xf]
    %v3221 = vld [vmem:[%s5 + $0x38] sm:$0xf]
    %v3222 = vld [vmem:[%s5 + $0x3c] sm:$0xf]
    %v3223 = vld [vmem:[%s3163] ss:$8 sm:$0xf]
    %v3224 = vld [vmem:[%s3163] ss:$8 sm:$0xf0]
    %v3225 = vor.u32 %v3223, %v3224
    %v3226 = vpack.c.bf16 %v3225, %v3225
    %s3227 = scalar_lea.vmem %s5, 64
    %v3228 = vld [vmem:[%s3227] sm:$0xf]
    %v3229 = vld [vmem:[%s3227 + $0x4] sm:$0xf]
    %v3230 = vld [vmem:[%s3227 + $0x8] sm:$0xf]
    %v3231 = vld [vmem:[%s3227 + $0xc] sm:$0xf]
    %v3232 = vld [vmem:[%s3227 + $0x10] sm:$0xf]
    %v3233 = vld [vmem:[%s3227 + $0x14] sm:$0xf]
    %v3234 = vld [vmem:[%s3227 + $0x18] sm:$0xf]
    %v3235 = vld [vmem:[%s3227 + $0x1c] sm:$0xf]
    %v3236 = vld [vmem:[%s3227 + $0x20] sm:$0xf]
    %v3237 = vld [vmem:[%s3227 + $0x24] sm:$0xf]
    %v3238 = vld [vmem:[%s3227 + $0x28] sm:$0xf]
    %v3239 = vld [vmem:[%s3227 + $0x2c] sm:$0xf]
    %v3240 = vld [vmem:[%s3227 + $0x30] sm:$0xf]
    %v3241 = vld [vmem:[%s3227 + $0x34] sm:$0xf]
    %v3242 = vld [vmem:[%s3227 + $0x38] sm:$0xf]
    %v3243 = vld [vmem:[%s3227 + $0x3c] sm:$0xf]
    %v3260 = vunpack.c.l.b16 %v3228
    %v3261 = vunpack.c.l.b16 %v3229
    %v3262 = vunpack.c.l.b16 %v3230
    %v3263 = vunpack.c.l.b16 %v3231
    %v3264 = vunpack.c.l.b16 %v3232
    %v3265 = vunpack.c.l.b16 %v3233
    %v3266 = vunpack.c.l.b16 %v3234
    %v3267 = vunpack.c.l.b16 %v3235
    %v3268 = vunpack.c.l.b16 %v3236
    %v3269 = vunpack.c.l.b16 %v3237
    %v3270 = vunpack.c.l.b16 %v3238
    %v3271 = vunpack.c.l.b16 %v3239
    %v3272 = vunpack.c.l.b16 %v3240
    %v3273 = vunpack.c.l.b16 %v3241
    %v3274 = vunpack.c.l.b16 %v3242
    %v3275 = vunpack.c.l.b16 %v3243
    %v3276 = vpack.c.b16 %v3261, %v3260
    %v3277 = vpack.c.b16 %v3263, %v3262
    %v3278 = vpack.c.b16 %v3265, %v3264
    %v3279 = vpack.c.b16 %v3267, %v3266
    %v3280 = vpack.c.b16 %v3269, %v3268
    %v3281 = vpack.c.b16 %v3271, %v3270
    %v3282 = vpack.c.b16 %v3273, %v3272
    %v3283 = vpack.c.b16 %v3275, %v3274
    %3292 = vmatpush.bf16.msra.mxu0 %v3283
    %3293 = vmatpush.bf16.msra.mxu0 %v3282
    %3294 = vmatpush.bf16.msra.mxu0 %v3281
    %3295 = vmatpush.bf16.msra.mxu0 %v3280
    %3296 = vmatpush.bf16.msra.mxu0 %v3279
    %3297 = vmatpush.bf16.msra.mxu0 %v3278
    %3298 = vmatpush.bf16.msra.mxu0 %v3277
    %3299 = vmatpush.bf16.msra.mxu0 %v3276
    %3300 = vmatmul.bf16.gmra.mxu0 %v3226
    %v3301 = vpop.f32.mrf.mxu0
    %v3302 = vadd.f32 0.0, %v3301
    %v3303 = vpop.f32.mrf.mxu0
    %3304 = vdwg.mxu0
    %v3321 = vunpack.c.l.b16 %v3207
    %v3322 = vunpack.c.l.b16 %v3208
    %v3323 = vunpack.c.l.b16 %v3209
    %v3324 = vunpack.c.l.b16 %v3210
    %v3325 = vunpack.c.l.b16 %v3211
    %v3326 = vunpack.c.l.b16 %v3212
    %v3327 = vunpack.c.l.b16 %v3213
    %v3328 = vunpack.c.l.b16 %v3214
    %v3329 = vunpack.c.l.b16 %v3215
    %v3330 = vunpack.c.l.b16 %v3216
    %v3331 = vunpack.c.l.b16 %v3217
    %v3332 = vunpack.c.l.b16 %v3218
    %v3333 = vunpack.c.l.b16 %v3219
    %v3334 = vunpack.c.l.b16 %v3220
    %v3335 = vunpack.c.l.b16 %v3221
    %v3336 = vunpack.c.l.b16 %v3222
    %v3337 = vpack.c.b16 %v3322, %v3321
    %v3338 = vpack.c.b16 %v3324, %v3323
    %v3339 = vpack.c.b16 %v3326, %v3325
    %v3340 = vpack.c.b16 %v3328, %v3327
    %v3341 = vpack.c.b16 %v3330, %v3329
    %v3342 = vpack.c.b16 %v3332, %v3331
    %v3343 = vpack.c.b16 %v3334, %v3333
    %v3344 = vpack.c.b16 %v3336, %v3335
    %3353 = vmatpush.bf16.msra.mxu0 %v3344
    %3354 = vmatpush.bf16.msra.mxu0 %v3343
    %3355 = vmatpush.bf16.msra.mxu0 %v3342
    %3356 = vmatpush.bf16.msra.mxu0 %v3341
    %3357 = vmatpush.bf16.msra.mxu0 %v3340
    %3358 = vmatpush.bf16.msra.mxu0 %v3339
    %3359 = vmatpush.bf16.msra.mxu0 %v3338
    %3360 = vmatpush.bf16.msra.mxu0 %v3337
    %3361 = vmatmul.bf16.gmra.mxu0 %v3206
    %v3362 = vpop.f32.mrf.mxu0
    %v3363 = vadd.f32 %v3302, %v3362
    %v3364 = vpop.f32.mrf.mxu0
    %3365 = vdwg.mxu0
    %s3366 = scalar_lea.vmem [#allocation3], 2
    %v3367 = vld [vmem:[%s3366] ss:$8 sm:$0xf]
    %v3368 = vld [vmem:[%s3366] ss:$8 sm:$0xf0]
    %v3369 = vor.u32 %v3367, %v3368
    %v3370 = vpack.c.bf16 %v3369, %v3369
    %s3371 = scalar_lea.vmem %s5, 128
    %v3372 = vld [vmem:[%s3371] sm:$0xf]
    %v3373 = vld [vmem:[%s3371 + $0x4] sm:$0xf]
    %v3374 = vld [vmem:[%s3371 + $0x8] sm:$0xf]
    %v3375 = vld [vmem:[%s3371 + $0xc] sm:$0xf]
    %v3376 = vld [vmem:[%s3371 + $0x10] sm:$0xf]
    %v3377 = vld [vmem:[%s3371 + $0x14] sm:$0xf]
    %v3378 = vld [vmem:[%s3371 + $0x18] sm:$0xf]
    %v3379 = vld [vmem:[%s3371 + $0x1c] sm:$0xf]
    %v3380 = vld [vmem:[%s3371 + $0x20] sm:$0xf]
    %v3381 = vld [vmem:[%s3371 + $0x24] sm:$0xf]
    %v3382 = vld [vmem:[%s3371 + $0x28] sm:$0xf]
    %v3383 = vld [vmem:[%s3371 + $0x2c] sm:$0xf]
    %v3384 = vld [vmem:[%s3371 + $0x30] sm:$0xf]
    %v3385 = vld [vmem:[%s3371 + $0x34] sm:$0xf]
    %v3386 = vld [vmem:[%s3371 + $0x38] sm:$0xf]
    %v3387 = vld [vmem:[%s3371 + $0x3c] sm:$0xf]
    %v3404 = vunpack.c.l.b16 %v3372
    %v3405 = vunpack.c.l.b16 %v3373
    %v3406 = vunpack.c.l.b16 %v3374
    %v3407 = vunpack.c.l.b16 %v3375
    %v3408 = vunpack.c.l.b16 %v3376
    %v3409 = vunpack.c.l.b16 %v3377
    %v3410 = vunpack.c.l.b16 %v3378
    %v3411 = vunpack.c.l.b16 %v3379
    %v3412 = vunpack.c.l.b16 %v3380
    %v3413 = vunpack.c.l.b16 %v3381
    %v3414 = vunpack.c.l.b16 %v3382
    %v3415 = vunpack.c.l.b16 %v3383
    %v3416 = vunpack.c.l.b16 %v3384
    %v3417 = vunpack.c.l.b16 %v3385
    %v3418 = vunpack.c.l.b16 %v3386
    %v3419 = vunpack.c.l.b16 %v3387
    %v3420 = vpack.c.b16 %v3405, %v3404
    %v3421 = vpack.c.b16 %v3407, %v3406
    %v3422 = vpack.c.b16 %v3409, %v3408
    %v3423 = vpack.c.b16 %v3411, %v3410
    %v3424 = vpack.c.b16 %v3413, %v3412
    %v3425 = vpack.c.b16 %v3415, %v3414
    %v3426 = vpack.c.b16 %v3417, %v3416
    %v3427 = vpack.c.b16 %v3419, %v3418
    %3436 = vmatpush.bf16.msra.mxu0 %v3427
    %3437 = vmatpush.bf16.msra.mxu0 %v3426
    %3438 = vmatpush.bf16.msra.mxu0 %v3425
    %3439 = vmatpush.bf16.msra.mxu0 %v3424
    %3440 = vmatpush.bf16.msra.mxu0 %v3423
    %3441 = vmatpush.bf16.msra.mxu0 %v3422
    %3442 = vmatpush.bf16.msra.mxu0 %v3421
    %3443 = vmatpush.bf16.msra.mxu0 %v3420
    %3444 = vmatmul.bf16.gmra.mxu0 %v3370
    %v3445 = vpop.f32.mrf.mxu0
    %v3446 = vadd.f32 0.0, %v3445
    %v3447 = vpop.f32.mrf.mxu0
    %3448 = vdwg.mxu0
    %v3449 = vadd.f32 %v3363, %v3446
    %s3450 = scalar_lea.vmem [#allocation3], 3
    %v3451 = vld [vmem:[%s3450] ss:$8 sm:$0xf]
    %v3452 = vld [vmem:[%s3450] ss:$8 sm:$0xf0]
    %v3453 = vor.u32 %v3451, %v3452
    %v3454 = vpack.c.bf16 %v3453, %v3453
    %s3455 = scalar_lea.vmem %s5, 192
    %v3456 = vld [vmem:[%s3455] sm:$0xf]
    %v3457 = vld [vmem:[%s3455 + $0x4] sm:$0xf]
    %v3458 = vld [vmem:[%s3455 + $0x8] sm:$0xf]
    %v3459 = vld [vmem:[%s3455 + $0xc] sm:$0xf]
    %v3460 = vld [vmem:[%s3455 + $0x10] sm:$0xf]
    %v3461 = vld [vmem:[%s3455 + $0x14] sm:$0xf]
    %v3462 = vld [vmem:[%s3455 + $0x18] sm:$0xf]
    %v3463 = vld [vmem:[%s3455 + $0x1c] sm:$0xf]
    %v3464 = vld [vmem:[%s3455 + $0x20] sm:$0xf]
    %v3465 = vld [vmem:[%s3455 + $0x24] sm:$0xf]
    %v3466 = vld [vmem:[%s3455 + $0x28] sm:$0xf]
    %v3467 = vld [vmem:[%s3455 + $0x2c] sm:$0xf]
    %v3468 = vld [vmem:[%s3455 + $0x30] sm:$0xf]
    %v3469 = vld [vmem:[%s3455 + $0x34] sm:$0xf]
    %v3470 = vld [vmem:[%s3455 + $0x38] sm:$0xf]
    %v3471 = vld [vmem:[%s3455 + $0x3c] sm:$0xf]
    %v3488 = vunpack.c.l.b16 %v3456
    %v3489 = vunpack.c.l.b16 %v3457
    %v3490 = vunpack.c.l.b16 %v3458
    %v3491 = vunpack.c.l.b16 %v3459
    %v3492 = vunpack.c.l.b16 %v3460
    %v3493 = vunpack.c.l.b16 %v3461
    %v3494 = vunpack.c.l.b16 %v3462
    %v3495 = vunpack.c.l.b16 %v3463
    %v3496 = vunpack.c.l.b16 %v3464
    %v3497 = vunpack.c.l.b16 %v3465
    %v3498 = vunpack.c.l.b16 %v3466
    %v3499 = vunpack.c.l.b16 %v3467
    %v3500 = vunpack.c.l.b16 %v3468
    %v3501 = vunpack.c.l.b16 %v3469
    %v3502 = vunpack.c.l.b16 %v3470
    %v3503 = vunpack.c.l.b16 %v3471
    %v3504 = vpack.c.b16 %v3489, %v3488
    %v3505 = vpack.c.b16 %v3491, %v3490
    %v3506 = vpack.c.b16 %v3493, %v3492
    %v3507 = vpack.c.b16 %v3495, %v3494
    %v3508 = vpack.c.b16 %v3497, %v3496
    %v3509 = vpack.c.b16 %v3499, %v3498
    %v3510 = vpack.c.b16 %v3501, %v3500
    %v3511 = vpack.c.b16 %v3503, %v3502
    %3520 = vmatpush.bf16.msra.mxu0 %v3511
    %3521 = vmatpush.bf16.msra.mxu0 %v3510
    %3522 = vmatpush.bf16.msra.mxu0 %v3509
    %3523 = vmatpush.bf16.msra.mxu0 %v3508
    %3524 = vmatpush.bf16.msra.mxu0 %v3507
    %3525 = vmatpush.bf16.msra.mxu0 %v3506
    %3526 = vmatpush.bf16.msra.mxu0 %v3505
    %3527 = vmatpush.bf16.msra.mxu0 %v3504
    %3528 = vmatmul.bf16.gmra.mxu0 %v3454
    %v3529 = vpop.f32.mrf.mxu0
    %v3530 = vadd.f32 0.0, %v3529
    %v3531 = vpop.f32.mrf.mxu0
    %3532 = vdwg.mxu0
    %v3533 = vadd.f32 %v3449, %v3530
    %v3534 = vld [vmem:[%s6] sm:$0x1]
    %v3536 = vperm.slane %v3534, 0
    %v3538 = vadd.f32 %v3533, %v3536
    %v3539 = vmax.f32 %v3538, 0.0
    %v3540 = vpack.c.bf16 %v3539, %v3539
    %v3541 = vld [vmem:[%s7] sm:$0xf]
    %v3542 = vld [vmem:[%s7 + $0x4] sm:$0xf]
    %v3543 = vld [vmem:[%s7 + $0x8] sm:$0xf]
    %v3544 = vld [vmem:[%s7 + $0xc] sm:$0xf]
    %v3545 = vld [vmem:[%s7 + $0x10] sm:$0xf]
    %v3546 = vld [vmem:[%s7 + $0x14] sm:$0xf]
    %v3547 = vld [vmem:[%s7 + $0x18] sm:$0xf]
    %v3548 = vld [vmem:[%s7 + $0x1c] sm:$0xf]
    %v3549 = vld [vmem:[%s8] sm:$0x1]
    %v3551 = vperm.slane %v3549, 0
    %v3561 = vunpack.c.l.b16 %v3541
    %v3562 = vunpack.c.l.b16 %v3542
    %v3563 = vunpack.c.l.b16 %v3543
    %v3564 = vunpack.c.l.b16 %v3544
    %v3565 = vunpack.c.l.b16 %v3545
    %v3566 = vunpack.c.l.b16 %v3546
    %v3567 = vunpack.c.l.b16 %v3547
    %v3568 = vunpack.c.l.b16 %v3548
    %v3569 = vpack.c.b16 %v3562, %v3561
    %v3570 = vpack.c.b16 %v3564, %v3563
    %v3571 = vpack.c.b16 %v3566, %v3565
    %v3572 = vpack.c.b16 %v3568, %v3567
    %vm3577 = vcmask 523264
    %v3579 = vsel %vm3577, %v3540, 0
    %3581 = vmatpush.bf16.msra.mxu0 0
    %3582 = vmatpush.bf16.msra.mxu0 0
    %3583 = vmatpush.bf16.msra.mxu0 0
    %3584 = vmatpush.bf16.msra.mxu0 0
    %3585 = vmatpush.bf16.msra.mxu0 %v3572
    %3586 = vmatpush.bf16.msra.mxu0 %v3571
    %3587 = vmatpush.bf16.msra.mxu0 %v3570
    %3588 = vmatpush.bf16.msra.mxu0 %v3569
    %3589 = vmatmul.bf16.gmra.mxu0 %v3579
    %v3590 = vpop.f32.mrf.mxu0
    %v3591 = vadd.f32 %v3551, %v3590
    %v3592 = vpop.f32.mrf.mxu0
    %3593 = vdwg.mxu0
    %3594 = vmax.xlane.f32.xlu0 %v3591
    %v3595 = vpop.xlane.xlu0 %3594
    %v3596 = vsub.f32 %v3591, %v3595
    %v3597 = vmul.f32 %v3596, 1.442695
    %v3598 = vpow.pop %v3597
    %3599 = vadd.xlane.f32.xlu0 %v3598
    %v3600 = vpop.xlane.xlu0 %3599
    %v3601 = vrcp.pop %v3600
    %v3602 = vmul.f32 %v3598, %v3601
    %3603 = vst [vmem:[#allocation4] sm:$0xff] %v3602
    // Predicated region
    $region38: #{_forward_impl.1} parent=1 // pred_check
      _
    $region39: #{_forward_impl.1} parent=1 // pred_check_branch
      %3605 = sbr.rel (0) target = $region41
    $region40: #{_forward_impl.1} parent=1 // pred_region
      %3607 = vsyncadd [#allocation5], 0
      %s3609 = sshll.u32 [#allocation4], 4
      %s3610 = int_to_ptr.vmem [resolvable:$true] %s3609
      %s3611 = sshll.u32 %s9, 4
      %s3612 = int_to_ptr.hbm [resolvable:$true] %s3611
      %3614 = dma.vmem_to_hbm [thread:$0]  %s3610, 128, %s3612, [#allocation5]
    $region41: #{_forward_impl.1} parent=1 // pred_fallthru
      _
    // Predicated region
    $region42: #{_forward_impl.1} parent=1 // pred_check
      _
    $region43: #{_forward_impl.1} parent=1 // pred_check_branch
      %3616 = sbr.rel (0) target = $region45
    $region44: #{_forward_impl.1} parent=1 // pred_region
      %3618 = dma.done [#allocation5], 128
    $region45: #{_forward_impl.1} parent=1 // pred_fallthru
      _
    %3619 = vsyncpa [#allocation5], 1

</llo_original>
